<compile_context>
chip_gen: v6e
topology: v6e:2x2x1
jax: 0.10.0
libtpu: 0.0.40
codegen_flags: <defaults>
</compile_context>

<pallas_src>
import jax
import jax.numpy as jnp
import numpy as np
from jax.experimental import pallas as pl
from jax.experimental.pallas import tpu as pltpu


def _elu(v):
    # NOTE: exp(v) - 1 (not expm1) to stay on ops with guaranteed Mosaic
    # lowering; matches the reference implementation below.
    return jnp.where(v > 0, v, jnp.exp(v) - 1.0)


# ----------------------------------------------------------------------------
# Fused kernel: all GRU layers (interleaved over time) + MLP head.
# PyTorch gate order / equations:
#   r = sigmoid(W_ir x + b_ir + W_hr h + b_hr)
#   z = sigmoid(W_iz x + b_iz + W_hz h + b_hz)
#   n = tanh   (W_in x + b_in + r * (W_hn h + b_hn))
#   h' = (1 - z) * n + z * h
# ----------------------------------------------------------------------------
def _make_fused_kernel(n_layers, T, B, H):
    def kernel(*refs):
        # refs: x2d, t, [wi, wh, bi, bhn] * n_layers, 10 head weights,
        #       out_ref, xp_scr (VMEM scratch)
        x_ref, t_ref = refs[0], refs[1]
        pos = 2
        layer_refs = []
        for _ in range(n_layers):
            layer_refs.append(refs[pos:pos + 4])
            pos += 4
        (w3, b3, w1a, w1b, b1, w4a, w4b, b4, w5, b5) = refs[pos:pos + 10]
        pos += 10
        out_ref = refs[pos]
        xp_scr = refs[pos + 1]

        f32 = jnp.float32

        # Hoisted layer-0 input projection for ALL timesteps at once:
        # one (T*B, I) x (I, 3H) matmul, input bias pre-folded in.
        wi0, _, bi0, _ = layer_refs[0]
        xp_scr[...] = (jnp.dot(x_ref[...], wi0[...],
                               preferred_element_type=f32) + bi0[...])

        h = [jnp.zeros((B, H), f32) for _ in range(n_layers)]

        # Fully unrolled time x layer recurrence (straight-line code; hidden
        # states stay in vregs; layers are interleaved so no sequence output
        # is ever stored).
        for step in range(T):
            gi = xp_scr[pl.ds(step * B, B), :]              # (B, 3H) layer 0
            for l in range(n_layers):
                wi, wh, bi, bhn = layer_refs[l]
                if l > 0:
                    gi = (jnp.dot(h[l - 1], wi[...],
                                  preferred_element_type=f32) + bi[...])
                gh = jnp.dot(h[l], wh[...], preferred_element_type=f32)
                r = jax.nn.sigmoid(gi[:, :H] + gh[:, :H])
                z = jax.nn.sigmoid(gi[:, H:2 * H] + gh[:, H:2 * H])
                n = jnp.tanh(gi[:, 2 * H:] + r * (gh[:, 2 * H:] + bhn[...]))
                h[l] = (1.0 - z) * n + z * h[l]

        # MLP head: fc3/elu on t, fc1/elu on cat(h[-2], h[-1]) (split matmuls,
        # no in-kernel concat), fc4/elu on cat(., t5), fc5.
        t5 = _elu(jnp.dot(t_ref[...], w3[...],
                          preferred_element_type=f32) + b3[...])
        hh = _elu(jnp.dot(h[-2], w1a[...], preferred_element_type=f32)
                  + jnp.dot(h[-1], w1b[...], preferred_element_type=f32)
                  + b1[...])
        y = _elu(jnp.dot(hh, w4a[...], preferred_element_type=f32)
                 + jnp.dot(t5, w4b[...], preferred_element_type=f32)
                 + b4[...])
        out_ref[...] = jnp.dot(y, w5[...], preferred_element_type=f32) + b5[...]

    return kernel


def gru_model_forward(x, t, params):
    """x: (B, T, input_size) batch_first, t: (B, 15). Returns (B, 1)."""
    layers = params["gru_layers"]
    head = params["head"]
    n_layers = len(layers)
    assert n_layers >= 2, "head consumes hn[-2] and hn[-1]"
    B, T, I = x.shape
    H = layers[0]["wh"].shape[0]

    # Time-major flat layout (row = step*B + batch) so the hoisted layer-0
    # input projection is one (T*B, I) x (I, 3H) matmul and each timestep is
    # a contiguous sublane slice inside the kernel.
    x_tm = jnp.transpose(x, (1, 0, 2)).reshape(T * B, I)

    layer_args = []
    for lp in layers:
        layer_args += [lp["wi"], lp["wh"], lp["bi"], lp["bhn"]]
    head_args = [head[k] for k in ("w3", "b3", "w1a", "w1b", "b1",
                                   "w4a", "w4b", "b4", "w5", "b5")]

    kernel = _make_fused_kernel(n_layers, T, B, H)
    out = pl.pallas_call(
        kernel,
        out_shape=jax.ShapeDtypeStruct((B, 1), jnp.float32),
        scratch_shapes=[pltpu.VMEM((T * B, 3 * H), jnp.float32)],
    )(x_tm, t, *layer_args, *head_args)
    return out


# ----------------------------------------------------------------------------
# Deterministic parameter init (PyTorch-style uniform(-1/sqrt(fan), 1/sqrt(fan)))
# with weights stored fused ([r|z|n]) and pre-transposed to (in, out).
# ----------------------------------------------------------------------------
def init_params(key, dim_val, input_size, n_layers):
    H = dim_val
    layers = []
    in_sz = input_size
    for _ in range(n_layers):
        k = 1.0 / np.sqrt(H)
        key, k0, k1, k2, k3 = jax.random.split(key, 5)
        w_ih = jax.random.uniform(k0, (3 * H, in_sz), minval=-k, maxval=k,
                                  dtype=jnp.float32)
        w_hh = jax.random.uniform(k1, (3 * H, H), minval=-k, maxval=k,
                                  dtype=jnp.float32)
        b_ih = jax.random.uniform(k2, (3 * H,), minval=-k, maxval=k,
                                  dtype=jnp.float32)
        b_hh = jax.random.uniform(k3, (3 * H,), minval=-k, maxval=k,
                                  dtype=jnp.float32)
        bi = jnp.concatenate([b_ih[0:H] + b_hh[0:H],
                              b_ih[H:2 * H] + b_hh[H:2 * H],
                              b_ih[2 * H:3 * H]]).reshape(1, 3 * H)
        layers.append(dict(
            wi=w_ih.T,                                   # (in, 3H)  [r|z|n]
            wh=w_hh.T,                                   # (H, 3H)   [r|z|n]
            bi=bi,                                       # folded input bias
            bhn=b_hh[2 * H:3 * H].reshape(1, H)))        # hidden n-gate bias
        in_sz = H

    def linear(key, out_f, in_f):
        k = 1.0 / np.sqrt(in_f)
        kw, kb = jax.random.split(key)
        w = jax.random.uniform(kw, (out_f, in_f), minval=-k, maxval=k,
                               dtype=jnp.float32)
        b = jax.random.uniform(kb, (out_f,), minval=-k, maxval=k,
                               dtype=jnp.float32)
        return w, b

    key, k1, k3, k4, k5 = jax.random.split(key, 5)
    fc1_w, fc1_b = linear(k1, 2 * H, 2 * H)
    fc3_w, fc3_b = linear(k3, 5, 15)
    fc4_w, fc4_b = linear(k4, 10, 2 * H + 5)
    fc5_w, fc5_b = linear(k5, 1, 10)

    head = dict(
        w3=fc3_w.T, b3=fc3_b.reshape(1, 5),
        w1a=fc1_w[:, :H].T, w1b=fc1_w[:, H:].T, b1=fc1_b.reshape(1, 2 * H),
        w4a=fc4_w[:, :2 * H].T, w4b=fc4_w[:, 2 * H:].T, b4=fc4_b.reshape(1, 10),
        w5=fc5_w.T, b5=fc5_b.reshape(1, 1))
    return dict(gru_layers=layers, head=head)


# ----------------------------------------------------------------------------
# Pure-JAX reference (same math, no Pallas) for correctness check.
# ----------------------------------------------------------------------------
def forward_ref(x, t, params):
    B, T, _ = x.shape
    inp = x
    hns = []
    for lp in params["gru_layers"]:
        H = lp["wh"].shape[0]
        h = jnp.zeros((B, H), jnp.float32)
        outs = []
        for s in range(T):
            xt = inp[:, s, :]
            gi = xt @ lp["wi"] + lp["bi"]
            gh = h @ lp["wh"]
            r = jax.nn.sigmoid(gi[:, :H] + gh[:, :H])
            z = jax.nn.sigmoid(gi[:, H:2 * H] + gh[:, H:2 * H])
            n = jnp.tanh(gi[:, 2 * H:] + r * (gh[:, 2 * H:] + lp["bhn"]))
            h = (1.0 - z) * n + z * h
            outs.append(h)
        inp = jnp.stack(outs, axis=1)
        hns.append(h)
    hp = params["head"]
    t5 = _elu(t @ hp["w3"] + hp["b3"])
    hh = _elu(hns[-2] @ hp["w1a"] + hns[-1] @ hp["w1b"] + hp["b1"])
    y = _elu(hh @ hp["w4a"] + t5 @ hp["w4b"] + hp["b4"])
    return y @ hp["w5"] + hp["b5"]


if __name__ == "__main__":
    dim_val, input_size, n_layers = 32, 8, 2
    B, T = 2, 8

    key = jax.random.PRNGKey(0)
    kp, kx, kt = jax.random.split(key, 3)
    params = init_params(kp, dim_val, input_size, n_layers)
    x = jax.random.normal(kx, (B, T, input_size), dtype=jnp.float32)
    t = jax.random.normal(kt, (B, 15), dtype=jnp.float32)

    fwd = jax.jit(gru_model_forward)
    out = jax.block_until_ready(fwd(x, t, params))
    ref = forward_ref(x, t, params)
    np.testing.assert_allclose(np.asarray(out), np.asarray(ref),
                               rtol=1e-4, atol=1e-5)
    print("KERNEL_OK")
</pallas_src>

<mosaic_0001>
module attributes {stable_mosaic.version = 11 : i64} {
  func.func @kernel(%arg0: memref<16x8xf32, #tpu.memory_space<vmem>>, %arg1: memref<2x15xf32, #tpu.memory_space<vmem>>, %arg2: memref<8x96xf32, #tpu.memory_space<vmem>>, %arg3: memref<32x96xf32, #tpu.memory_space<vmem>>, %arg4: memref<1x96xf32, #tpu.memory_space<vmem>>, %arg5: memref<1x32xf32, #tpu.memory_space<vmem>>, %arg6: memref<32x96xf32, #tpu.memory_space<vmem>>, %arg7: memref<32x96xf32, #tpu.memory_space<vmem>>, %arg8: memref<1x96xf32, #tpu.memory_space<vmem>>, %arg9: memref<1x32xf32, #tpu.memory_space<vmem>>, %arg10: memref<15x5xf32, #tpu.memory_space<vmem>>, %arg11: memref<1x5xf32, #tpu.memory_space<vmem>>, %arg12: memref<32x64xf32, #tpu.memory_space<vmem>>, %arg13: memref<32x64xf32, #tpu.memory_space<vmem>>, %arg14: memref<1x64xf32, #tpu.memory_space<vmem>>, %arg15: memref<64x10xf32, #tpu.memory_space<vmem>>, %arg16: memref<5x10xf32, #tpu.memory_space<vmem>>, %arg17: memref<1x10xf32, #tpu.memory_space<vmem>>, %arg18: memref<10x1xf32, #tpu.memory_space<vmem>>, %arg19: memref<1x1xf32, #tpu.memory_space<vmem>>, %arg20: memref<2x1xf32, #tpu.memory_space<vmem>>, %arg21: memref<16x96xf32, #tpu.memory_space<vmem>>) attributes {dimension_semantics = [], scalar_prefetch = 0 : i64, scratch_operands = 1 : i64, tpu.core_type = #tpu.core_type<tc>} {
    %c0 = arith.constant 0 : index
    %c0_0 = arith.constant 0 : index
    %0 = vector.load %arg0[%c0, %c0_0] : memref<16x8xf32, #tpu.memory_space<vmem>>, vector<16x8xf32>
    %c0_1 = arith.constant 0 : index
    %c0_2 = arith.constant 0 : index
    %1 = vector.load %arg2[%c0_1, %c0_2] : memref<8x96xf32, #tpu.memory_space<vmem>>, vector<8x96xf32>
    %cst = arith.constant dense<0.000000e+00> : vector<16x96xf32>
    %2 = tpu.matmul %0, %1, %cst {dimension_numbers = #tpu.dot_dimension_numbers<[1], [0], [0], [1], [0, 0, 1, 1], [], []>} : vector<16x8xf32>, vector<8x96xf32>, vector<16x96xf32> -> vector<16x96xf32>
    %c0_3 = arith.constant 0 : index
    %c0_4 = arith.constant 0 : index
    %3 = vector.load %arg4[%c0_3, %c0_4] : memref<1x96xf32, #tpu.memory_space<vmem>>, vector<1x96xf32>
    %4 = vector.broadcast %3 : vector<1x96xf32> to vector<16x96xf32>
    %5 = arith.addf %2, %4 : vector<16x96xf32>
    %c0_5 = arith.constant 0 : index
    %c0_6 = arith.constant 0 : index
    %6 = vector.load %arg21[%c0_5, %c0_6] : memref<16x96xf32, #tpu.memory_space<vmem>>, vector<16x96xf32>
    tpu.vector_store %arg21[%c0_5, %c0_6], %5 {strides = array<i32>} : memref<16x96xf32, #tpu.memory_space<vmem>>, vector<16x96xf32>,
    %cst_7 = arith.constant 0.000000e+00 : f32
    %7 = vector.broadcast %cst_7 : f32 to vector<2x32xf32>
    %cst_8 = arith.constant 0.000000e+00 : f32
    %8 = vector.broadcast %cst_8 : f32 to vector<2x32xf32>
    %c0_9 = arith.constant 0 : index
    %c0_10 = arith.constant 0 : index
    %9 = vector.load %arg21[%c0_9, %c0_10] : memref<16x96xf32, #tpu.memory_space<vmem>>, vector<2x96xf32>
    %c0_11 = arith.constant 0 : index
    %c0_12 = arith.constant 0 : index
    %10 = vector.load %arg3[%c0_11, %c0_12] : memref<32x96xf32, #tpu.memory_space<vmem>>, vector<32x96xf32>
    %cst_13 = arith.constant dense<0.000000e+00> : vector<2x96xf32>
    %11 = tpu.matmul %7, %10, %cst_13 {dimension_numbers = #tpu.dot_dimension_numbers<[1], [0], [0], [1], [0, 0, 1, 1], [], []>} : vector<2x32xf32>, vector<32x96xf32>, vector<2x96xf32> -> vector<2x96xf32>
    %12 = vector.extract_strided_slice %9 {offsets = [0, 0], sizes = [2, 32], strides = [1, 1]} : vector<2x96xf32> to vector<2x32xf32>
    %13 = vector.extract_strided_slice %11 {offsets = [0, 0], sizes = [2, 32], strides = [1, 1]} : vector<2x96xf32> to vector<2x32xf32>
    %14 = arith.addf %12, %13 : vector<2x32xf32>
    %15 = arith.negf %14 : vector<2x32xf32>
    %16 = math.exp %15 : vector<2x32xf32>
    %cst_14 = arith.constant 1.000000e+00 : f32
    %17 = vector.broadcast %cst_14 : f32 to vector<2x32xf32>
    %18 = arith.addf %17, %16 : vector<2x32xf32>
    %19 = arith.divf %17, %18 : vector<2x32xf32>
    %20 = vector.extract_strided_slice %9 {offsets = [0, 32], sizes = [2, 32], strides = [1, 1]} : vector<2x96xf32> to vector<2x32xf32>
    %21 = vector.extract_strided_slice %11 {offsets = [0, 32], sizes = [2, 32], strides = [1, 1]} : vector<2x96xf32> to vector<2x32xf32>
    %22 = arith.addf %20, %21 : vector<2x32xf32>
    %23 = arith.negf %22 : vector<2x32xf32>
    %24 = math.exp %23 : vector<2x32xf32>
    %cst_15 = arith.constant 1.000000e+00 : f32
    %25 = vector.broadcast %cst_15 : f32 to vector<2x32xf32>
    %26 = arith.addf %25, %24 : vector<2x32xf32>
    %27 = arith.divf %25, %26 : vector<2x32xf32>
    %28 = vector.extract_strided_slice %9 {offsets = [0, 64], sizes = [2, 32], strides = [1, 1]} : vector<2x96xf32> to vector<2x32xf32>
    %29 = vector.extract_strided_slice %11 {offsets = [0, 64], sizes = [2, 32], strides = [1, 1]} : vector<2x96xf32> to vector<2x32xf32>
    %c0_16 = arith.constant 0 : index
    %c0_17 = arith.constant 0 : index
    %30 = vector.load %arg5[%c0_16, %c0_17] : memref<1x32xf32, #tpu.memory_space<vmem>>, vector<1x32xf32>
    %31 = vector.broadcast %30 : vector<1x32xf32> to vector<2x32xf32>
    %32 = arith.addf %29, %31 : vector<2x32xf32>
    %33 = arith.mulf %19, %32 : vector<2x32xf32>
    %34 = arith.addf %28, %33 : vector<2x32xf32>
    %35 = math.tanh %34 : vector<2x32xf32>
    %cst_18 = arith.constant 1.000000e+00 : f32
    %36 = vector.broadcast %cst_18 : f32 to vector<2x32xf32>
    %37 = arith.subf %36, %27 : vector<2x32xf32>
    %38 = arith.mulf %37, %35 : vector<2x32xf32>
    %39 = arith.mulf %27, %7 : vector<2x32xf32>
    %40 = arith.addf %38, %39 : vector<2x32xf32>
    %c0_19 = arith.constant 0 : index
    %c0_20 = arith.constant 0 : index
    %41 = vector.load %arg6[%c0_19, %c0_20] : memref<32x96xf32, #tpu.memory_space<vmem>>, vector<32x96xf32>
    %cst_21 = arith.constant dense<0.000000e+00> : vector<2x96xf32>
    %42 = tpu.matmul %40, %41, %cst_21 {dimension_numbers = #tpu.dot_dimension_numbers<[1], [0], [0], [1], [0, 0, 1, 1], [], []>} : vector<2x32xf32>, vector<32x96xf32>, vector<2x96xf32> -> vector<2x96xf32>
    %c0_22 = arith.constant 0 : index
    %c0_23 = arith.constant 0 : index
    %43 = vector.load %arg8[%c0_22, %c0_23] : memref<1x96xf32, #tpu.memory_space<vmem>>, vector<1x96xf32>
    %44 = vector.broadcast %43 : vector<1x96xf32> to vector<2x96xf32>
    %45 = arith.addf %42, %44 : vector<2x96xf32>
    %c0_24 = arith.constant 0 : index
    %c0_25 = arith.constant 0 : index
    %46 = vector.load %arg7[%c0_24, %c0_25] : memref<32x96xf32, #tpu.memory_space<vmem>>, vector<32x96xf32>
    %cst_26 = arith.constant dense<0.000000e+00> : vector<2x96xf32>
    %47 = tpu.matmul %8, %46, %cst_26 {dimension_numbers = #tpu.dot_dimension_numbers<[1], [0], [0], [1], [0, 0, 1, 1], [], []>} : vector<2x32xf32>, vector<32x96xf32>, vector<2x96xf32> -> vector<2x96xf32>
    %48 = vector.extract_strided_slice %45 {offsets = [0, 0], sizes = [2, 32], strides = [1, 1]} : vector<2x96xf32> to vector<2x32xf32>
    %49 = vector.extract_strided_slice %47 {offsets = [0, 0], sizes = [2, 32], strides = [1, 1]} : vector<2x96xf32> to vector<2x32xf32>
    %50 = arith.addf %48, %49 : vector<2x32xf32>
    %51 = arith.negf %50 : vector<2x32xf32>
    %52 = math.exp %51 : vector<2x32xf32>
    %cst_27 = arith.constant 1.000000e+00 : f32
    %53 = vector.broadcast %cst_27 : f32 to vector<2x32xf32>
    %54 = arith.addf %53, %52 : vector<2x32xf32>
    %55 = arith.divf %53, %54 : vector<2x32xf32>
    %56 = vector.extract_strided_slice %45 {offsets = [0, 32], sizes = [2, 32], strides = [1, 1]} : vector<2x96xf32> to vector<2x32xf32>
    %57 = vector.extract_strided_slice %47 {offsets = [0, 32], sizes = [2, 32], strides = [1, 1]} : vector<2x96xf32> to vector<2x32xf32>
    %58 = arith.addf %56, %57 : vector<2x32xf32>
    %59 = arith.negf %58 : vector<2x32xf32>
    %60 = math.exp %59 : vector<2x32xf32>
    %cst_28 = arith.constant 1.000000e+00 : f32
    %61 = vector.broadcast %cst_28 : f32 to vector<2x32xf32>
    %62 = arith.addf %61, %60 : vector<2x32xf32>
    %63 = arith.divf %61, %62 : vector<2x32xf32>
    %64 = vector.extract_strided_slice %45 {offsets = [0, 64], sizes = [2, 32], strides = [1, 1]} : vector<2x96xf32> to vector<2x32xf32>
    %65 = vector.extract_strided_slice %47 {offsets = [0, 64], sizes = [2, 32], strides = [1, 1]} : vector<2x96xf32> to vector<2x32xf32>
    %c0_29 = arith.constant 0 : index
    %c0_30 = arith.constant 0 : index
    %66 = vector.load %arg9[%c0_29, %c0_30] : memref<1x32xf32, #tpu.memory_space<vmem>>, vector<1x32xf32>
    %67 = vector.broadcast %66 : vector<1x32xf32> to vector<2x32xf32>
    %68 = arith.addf %65, %67 : vector<2x32xf32>
    %69 = arith.mulf %55, %68 : vector<2x32xf32>
    %70 = arith.addf %64, %69 : vector<2x32xf32>
    %71 = math.tanh %70 : vector<2x32xf32>
    %cst_31 = arith.constant 1.000000e+00 : f32
    %72 = vector.broadcast %cst_31 : f32 to vector<2x32xf32>
    %73 = arith.subf %72, %63 : vector<2x32xf32>
    %74 = arith.mulf %73, %71 : vector<2x32xf32>
    %75 = arith.mulf %63, %8 : vector<2x32xf32>
    %76 = arith.addf %74, %75 : vector<2x32xf32>
    %c2 = arith.constant 2 : index
    %c0_32 = arith.constant 0 : index
    %77 = vector.load %arg21[%c2, %c0_32] : memref<16x96xf32, #tpu.memory_space<vmem>>, vector<2x96xf32>
    %c0_33 = arith.constant 0 : index
    %c0_34 = arith.constant 0 : index
    %78 = vector.load %arg3[%c0_33, %c0_34] : memref<32x96xf32, #tpu.memory_space<vmem>>, vector<32x96xf32>
    %cst_35 = arith.constant dense<0.000000e+00> : vector<2x96xf32>
    %79 = tpu.matmul %40, %78, %cst_35 {dimension_numbers = #tpu.dot_dimension_numbers<[1], [0], [0], [1], [0, 0, 1, 1], [], []>} : vector<2x32xf32>, vector<32x96xf32>, vector<2x96xf32> -> vector<2x96xf32>
    %80 = vector.extract_strided_slice %77 {offsets = [0, 0], sizes = [2, 32], strides = [1, 1]} : vector<2x96xf32> to vector<2x32xf32>
    %81 = vector.extract_strided_slice %79 {offsets = [0, 0], sizes = [2, 32], strides = [1, 1]} : vector<2x96xf32> to vector<2x32xf32>
    %82 = arith.addf %80, %81 : vector<2x32xf32>
    %83 = arith.negf %82 : vector<2x32xf32>
    %84 = math.exp %83 : vector<2x32xf32>
    %cst_36 = arith.constant 1.000000e+00 : f32
    %85 = vector.broadcast %cst_36 : f32 to vector<2x32xf32>
    %86 = arith.addf %85, %84 : vector<2x32xf32>
    %87 = arith.divf %85, %86 : vector<2x32xf32>
    %88 = vector.extract_strided_slice %77 {offsets = [0, 32], sizes = [2, 32], strides = [1, 1]} : vector<2x96xf32> to vector<2x32xf32>
    %89 = vector.extract_strided_slice %79 {offsets = [0, 32], sizes = [2, 32], strides = [1, 1]} : vector<2x96xf32> to vector<2x32xf32>
    %90 = arith.addf %88, %89 : vector<2x32xf32>
    %91 = arith.negf %90 : vector<2x32xf32>
    %92 = math.exp %91 : vector<2x32xf32>
    %cst_37 = arith.constant 1.000000e+00 : f32
    %93 = vector.broadcast %cst_37 : f32 to vector<2x32xf32>
    %94 = arith.addf %93, %92 : vector<2x32xf32>
    %95 = arith.divf %93, %94 : vector<2x32xf32>
    %96 = vector.extract_strided_slice %77 {offsets = [0, 64], sizes = [2, 32], strides = [1, 1]} : vector<2x96xf32> to vector<2x32xf32>
    %97 = vector.extract_strided_slice %79 {offsets = [0, 64], sizes = [2, 32], strides = [1, 1]} : vector<2x96xf32> to vector<2x32xf32>
    %c0_38 = arith.constant 0 : index
    %c0_39 = arith.constant 0 : index
    %98 = vector.load %arg5[%c0_38, %c0_39] : memref<1x32xf32, #tpu.memory_space<vmem>>, vector<1x32xf32>
    %99 = vector.broadcast %98 : vector<1x32xf32> to vector<2x32xf32>
    %100 = arith.addf %97, %99 : vector<2x32xf32>
    %101 = arith.mulf %87, %100 : vector<2x32xf32>
    %102 = arith.addf %96, %101 : vector<2x32xf32>
    %103 = math.tanh %102 : vector<2x32xf32>
    %cst_40 = arith.constant 1.000000e+00 : f32
    %104 = vector.broadcast %cst_40 : f32 to vector<2x32xf32>
    %105 = arith.subf %104, %95 : vector<2x32xf32>
    %106 = arith.mulf %105, %103 : vector<2x32xf32>
    %107 = arith.mulf %95, %40 : vector<2x32xf32>
    %108 = arith.addf %106, %107 : vector<2x32xf32>
    %c0_41 = arith.constant 0 : index
    %c0_42 = arith.constant 0 : index
    %109 = vector.load %arg6[%c0_41, %c0_42] : memref<32x96xf32, #tpu.memory_space<vmem>>, vector<32x96xf32>
    %cst_43 = arith.constant dense<0.000000e+00> : vector<2x96xf32>
    %110 = tpu.matmul %108, %109, %cst_43 {dimension_numbers = #tpu.dot_dimension_numbers<[1], [0], [0], [1], [0, 0, 1, 1], [], []>} : vector<2x32xf32>, vector<32x96xf32>, vector<2x96xf32> -> vector<2x96xf32>
    %c0_44 = arith.constant 0 : index
    %c0_45 = arith.constant 0 : index
    %111 = vector.load %arg8[%c0_44, %c0_45] : memref<1x96xf32, #tpu.memory_space<vmem>>, vector<1x96xf32>
    %112 = vector.broadcast %111 : vector<1x96xf32> to vector<2x96xf32>
    %113 = arith.addf %110, %112 : vector<2x96xf32>
    %c0_46 = arith.constant 0 : index
    %c0_47 = arith.constant 0 : index
    %114 = vector.load %arg7[%c0_46, %c0_47] : memref<32x96xf32, #tpu.memory_space<vmem>>, vector<32x96xf32>
    %cst_48 = arith.constant dense<0.000000e+00> : vector<2x96xf32>
    %115 = tpu.matmul %76, %114, %cst_48 {dimension_numbers = #tpu.dot_dimension_numbers<[1], [0], [0], [1], [0, 0, 1, 1], [], []>} : vector<2x32xf32>, vector<32x96xf32>, vector<2x96xf32> -> vector<2x96xf32>
    %116 = vector.extract_strided_slice %113 {offsets = [0, 0], sizes = [2, 32], strides = [1, 1]} : vector<2x96xf32> to vector<2x32xf32>
    %117 = vector.extract_strided_slice %115 {offsets = [0, 0], sizes = [2, 32], strides = [1, 1]} : vector<2x96xf32> to vector<2x32xf32>
    %118 = arith.addf %116, %117 : vector<2x32xf32>
    %119 = arith.negf %118 : vector<2x32xf32>
    %120 = math.exp %119 : vector<2x32xf32>
    %cst_49 = arith.constant 1.000000e+00 : f32
    %121 = vector.broadcast %cst_49 : f32 to vector<2x32xf32>
    %122 = arith.addf %121, %120 : vector<2x32xf32>
    %123 = arith.divf %121, %122 : vector<2x32xf32>
    %124 = vector.extract_strided_slice %113 {offsets = [0, 32], sizes = [2, 32], strides = [1, 1]} : vector<2x96xf32> to vector<2x32xf32>
    %125 = vector.extract_strided_slice %115 {offsets = [0, 32], sizes = [2, 32], strides = [1, 1]} : vector<2x96xf32> to vector<2x32xf32>
    %126 = arith.addf %124, %125 : vector<2x32xf32>
    %127 = arith.negf %126 : vector<2x32xf32>
    %128 = math.exp %127 : vector<2x32xf32>
    %cst_50 = arith.constant 1.000000e+00 : f32
    %129 = vector.broadcast %cst_50 : f32 to vector<2x32xf32>
    %130 = arith.addf %129, %128 : vector<2x32xf32>
    %131 = arith.divf %129, %130 : vector<2x32xf32>
    %132 = vector.extract_strided_slice %113 {offsets = [0, 64], sizes = [2, 32], strides = [1, 1]} : vector<2x96xf32> to vector<2x32xf32>
    %133 = vector.extract_strided_slice %115 {offsets = [0, 64], sizes = [2, 32], strides = [1, 1]} : vector<2x96xf32> to vector<2x32xf32>
    %c0_51 = arith.constant 0 : index
    %c0_52 = arith.constant 0 : index
    %134 = vector.load %arg9[%c0_51, %c0_52] : memref<1x32xf32, #tpu.memory_space<vmem>>, vector<1x32xf32>
    %135 = vector.broadcast %134 : vector<1x32xf32> to vector<2x32xf32>
    %136 = arith.addf %133, %135 : vector<2x32xf32>
    %137 = arith.mulf %123, %136 : vector<2x32xf32>
    %138 = arith.addf %132, %137 : vector<2x32xf32>
    %139 = math.tanh %138 : vector<2x32xf32>
    %cst_53 = arith.constant 1.000000e+00 : f32
    %140 = vector.broadcast %cst_53 : f32 to vector<2x32xf32>
    %141 = arith.subf %140, %131 : vector<2x32xf32>
    %142 = arith.mulf %141, %139 : vector<2x32xf32>
    %143 = arith.mulf %131, %76 : vector<2x32xf32>
    %144 = arith.addf %142, %143 : vector<2x32xf32>
    %c4 = arith.constant 4 : index
    %c0_54 = arith.constant 0 : index
    %145 = vector.load %arg21[%c4, %c0_54] : memref<16x96xf32, #tpu.memory_space<vmem>>, vector<2x96xf32>
    %c0_55 = arith.constant 0 : index
    %c0_56 = arith.constant 0 : index
    %146 = vector.load %arg3[%c0_55, %c0_56] : memref<32x96xf32, #tpu.memory_space<vmem>>, vector<32x96xf32>
    %cst_57 = arith.constant dense<0.000000e+00> : vector<2x96xf32>
    %147 = tpu.matmul %108, %146, %cst_57 {dimension_numbers = #tpu.dot_dimension_numbers<[1], [0], [0], [1], [0, 0, 1, 1], [], []>} : vector<2x32xf32>, vector<32x96xf32>, vector<2x96xf32> -> vector<2x96xf32>
    %148 = vector.extract_strided_slice %145 {offsets = [0, 0], sizes = [2, 32], strides = [1, 1]} : vector<2x96xf32> to vector<2x32xf32>
    %149 = vector.extract_strided_slice %147 {offsets = [0, 0], sizes = [2, 32], strides = [1, 1]} : vector<2x96xf32> to vector<2x32xf32>
    %150 = arith.addf %148, %149 : vector<2x32xf32>
    %151 = arith.negf %150 : vector<2x32xf32>
    %152 = math.exp %151 : vector<2x32xf32>
    %cst_58 = arith.constant 1.000000e+00 : f32
    %153 = vector.broadcast %cst_58 : f32 to vector<2x32xf32>
    %154 = arith.addf %153, %152 : vector<2x32xf32>
    %155 = arith.divf %153, %154 : vector<2x32xf32>
    %156 = vector.extract_strided_slice %145 {offsets = [0, 32], sizes = [2, 32], strides = [1, 1]} : vector<2x96xf32> to vector<2x32xf32>
    %157 = vector.extract_strided_slice %147 {offsets = [0, 32], sizes = [2, 32], strides = [1, 1]} : vector<2x96xf32> to vector<2x32xf32>
    %158 = arith.addf %156, %157 : vector<2x32xf32>
    %159 = arith.negf %158 : vector<2x32xf32>
    %160 = math.exp %159 : vector<2x32xf32>
    %cst_59 = arith.constant 1.000000e+00 : f32
    %161 = vector.broadcast %cst_59 : f32 to vector<2x32xf32>
    %162 = arith.addf %161, %160 : vector<2x32xf32>
    %163 = arith.divf %161, %162 : vector<2x32xf32>
    %164 = vector.extract_strided_slice %145 {offsets = [0, 64], sizes = [2, 32], strides = [1, 1]} : vector<2x96xf32> to vector<2x32xf32>
    %165 = vector.extract_strided_slice %147 {offsets = [0, 64], sizes = [2, 32], strides = [1, 1]} : vector<2x96xf32> to vector<2x32xf32>
    %c0_60 = arith.constant 0 : index
    %c0_61 = arith.constant 0 : index
    %166 = vector.load %arg5[%c0_60, %c0_61] : memref<1x32xf32, #tpu.memory_space<vmem>>, vector<1x32xf32>
    %167 = vector.broadcast %166 : vector<1x32xf32> to vector<2x32xf32>
    %168 = arith.addf %165, %167 : vector<2x32xf32>
    %169 = arith.mulf %155, %168 : vector<2x32xf32>
    %170 = arith.addf %164, %169 : vector<2x32xf32>
    %171 = math.tanh %170 : vector<2x32xf32>
    %cst_62 = arith.constant 1.000000e+00 : f32
    %172 = vector.broadcast %cst_62 : f32 to vector<2x32xf32>
    %173 = arith.subf %172, %163 : vector<2x32xf32>
    %174 = arith.mulf %173, %171 : vector<2x32xf32>
    %175 = arith.mulf %163, %108 : vector<2x32xf32>
    %176 = arith.addf %174, %175 : vector<2x32xf32>
    %c0_63 = arith.constant 0 : index
    %c0_64 = arith.constant 0 : index
    %177 = vector.load %arg6[%c0_63, %c0_64] : memref<32x96xf32, #tpu.memory_space<vmem>>, vector<32x96xf32>
    %cst_65 = arith.constant dense<0.000000e+00> : vector<2x96xf32>
    %178 = tpu.matmul %176, %177, %cst_65 {dimension_numbers = #tpu.dot_dimension_numbers<[1], [0], [0], [1], [0, 0, 1, 1], [], []>} : vector<2x32xf32>, vector<32x96xf32>, vector<2x96xf32> -> vector<2x96xf32>
    %c0_66 = arith.constant 0 : index
    %c0_67 = arith.constant 0 : index
    %179 = vector.load %arg8[%c0_66, %c0_67] : memref<1x96xf32, #tpu.memory_space<vmem>>, vector<1x96xf32>
    %180 = vector.broadcast %179 : vector<1x96xf32> to vector<2x96xf32>
    %181 = arith.addf %178, %180 : vector<2x96xf32>
    %c0_68 = arith.constant 0 : index
    %c0_69 = arith.constant 0 : index
    %182 = vector.load %arg7[%c0_68, %c0_69] : memref<32x96xf32, #tpu.memory_space<vmem>>, vector<32x96xf32>
    %cst_70 = arith.constant dense<0.000000e+00> : vector<2x96xf32>
    %183 = tpu.matmul %144, %182, %cst_70 {dimension_numbers = #tpu.dot_dimension_numbers<[1], [0], [0], [1], [0, 0, 1, 1], [], []>} : vector<2x32xf32>, vector<32x96xf32>, vector<2x96xf32> -> vector<2x96xf32>
    %184 = vector.extract_strided_slice %181 {offsets = [0, 0], sizes = [2, 32], strides = [1, 1]} : vector<2x96xf32> to vector<2x32xf32>
    %185 = vector.extract_strided_slice %183 {offsets = [0, 0], sizes = [2, 32], strides = [1, 1]} : vector<2x96xf32> to vector<2x32xf32>
    %186 = arith.addf %184, %185 : vector<2x32xf32>
    %187 = arith.negf %186 : vector<2x32xf32>
    %188 = math.exp %187 : vector<2x32xf32>
    %cst_71 = arith.constant 1.000000e+00 : f32
    %189 = vector.broadcast %cst_71 : f32 to vector<2x32xf32>
    %190 = arith.addf %189, %188 : vector<2x32xf32>
    %191 = arith.divf %189, %190 : vector<2x32xf32>
    %192 = vector.extract_strided_slice %181 {offsets = [0, 32], sizes = [2, 32], strides = [1, 1]} : vector<2x96xf32> to vector<2x32xf32>
    %193 = vector.extract_strided_slice %183 {offsets = [0, 32], sizes = [2, 32], strides = [1, 1]} : vector<2x96xf32> to vector<2x32xf32>
    %194 = arith.addf %192, %193 : vector<2x32xf32>
    %195 = arith.negf %194 : vector<2x32xf32>
    %196 = math.exp %195 : vector<2x32xf32>
    %cst_72 = arith.constant 1.000000e+00 : f32
    %197 = vector.broadcast %cst_72 : f32 to vector<2x32xf32>
    %198 = arith.addf %197, %196 : vector<2x32xf32>
    %199 = arith.divf %197, %198 : vector<2x32xf32>
    %200 = vector.extract_strided_slice %181 {offsets = [0, 64], sizes = [2, 32], strides = [1, 1]} : vector<2x96xf32> to vector<2x32xf32>
    %201 = vector.extract_strided_slice %183 {offsets = [0, 64], sizes = [2, 32], strides = [1, 1]} : vector<2x96xf32> to vector<2x32xf32>
    %c0_73 = arith.constant 0 : index
    %c0_74 = arith.constant 0 : index
    %202 = vector.load %arg9[%c0_73, %c0_74] : memref<1x32xf32, #tpu.memory_space<vmem>>, vector<1x32xf32>
    %203 = vector.broadcast %202 : vector<1x32xf32> to vector<2x32xf32>
    %204 = arith.addf %201, %203 : vector<2x32xf32>
    %205 = arith.mulf %191, %204 : vector<2x32xf32>
    %206 = arith.addf %200, %205 : vector<2x32xf32>
    %207 = math.tanh %206 : vector<2x32xf32>
    %cst_75 = arith.constant 1.000000e+00 : f32
    %208 = vector.broadcast %cst_75 : f32 to vector<2x32xf32>
    %209 = arith.subf %208, %199 : vector<2x32xf32>
    %210 = arith.mulf %209, %207 : vector<2x32xf32>
    %211 = arith.mulf %199, %144 : vector<2x32xf32>
    %212 = arith.addf %210, %211 : vector<2x32xf32>
    %c6 = arith.constant 6 : index
    %c0_76 = arith.constant 0 : index
    %213 = vector.load %arg21[%c6, %c0_76] : memref<16x96xf32, #tpu.memory_space<vmem>>, vector<2x96xf32>
    %c0_77 = arith.constant 0 : index
    %c0_78 = arith.constant 0 : index
    %214 = vector.load %arg3[%c0_77, %c0_78] : memref<32x96xf32, #tpu.memory_space<vmem>>, vector<32x96xf32>
    %cst_79 = arith.constant dense<0.000000e+00> : vector<2x96xf32>
    %215 = tpu.matmul %176, %214, %cst_79 {dimension_numbers = #tpu.dot_dimension_numbers<[1], [0], [0], [1], [0, 0, 1, 1], [], []>} : vector<2x32xf32>, vector<32x96xf32>, vector<2x96xf32> -> vector<2x96xf32>
    %216 = vector.extract_strided_slice %213 {offsets = [0, 0], sizes = [2, 32], strides = [1, 1]} : vector<2x96xf32> to vector<2x32xf32>
    %217 = vector.extract_strided_slice %215 {offsets = [0, 0], sizes = [2, 32], strides = [1, 1]} : vector<2x96xf32> to vector<2x32xf32>
    %218 = arith.addf %216, %217 : vector<2x32xf32>
    %219 = arith.negf %218 : vector<2x32xf32>
    %220 = math.exp %219 : vector<2x32xf32>
    %cst_80 = arith.constant 1.000000e+00 : f32
    %221 = vector.broadcast %cst_80 : f32 to vector<2x32xf32>
    %222 = arith.addf %221, %220 : vector<2x32xf32>
    %223 = arith.divf %221, %222 : vector<2x32xf32>
    %224 = vector.extract_strided_slice %213 {offsets = [0, 32], sizes = [2, 32], strides = [1, 1]} : vector<2x96xf32> to vector<2x32xf32>
    %225 = vector.extract_strided_slice %215 {offsets = [0, 32], sizes = [2, 32], strides = [1, 1]} : vector<2x96xf32> to vector<2x32xf32>
    %226 = arith.addf %224, %225 : vector<2x32xf32>
    %227 = arith.negf %226 : vector<2x32xf32>
    %228 = math.exp %227 : vector<2x32xf32>
    %cst_81 = arith.constant 1.000000e+00 : f32
    %229 = vector.broadcast %cst_81 : f32 to vector<2x32xf32>
    %230 = arith.addf %229, %228 : vector<2x32xf32>
    %231 = arith.divf %229, %230 : vector<2x32xf32>
    %232 = vector.extract_strided_slice %213 {offsets = [0, 64], sizes = [2, 32], strides = [1, 1]} : vector<2x96xf32> to vector<2x32xf32>
    %233 = vector.extract_strided_slice %215 {offsets = [0, 64], sizes = [2, 32], strides = [1, 1]} : vector<2x96xf32> to vector<2x32xf32>
    %c0_82 = arith.constant 0 : index
    %c0_83 = arith.constant 0 : index
    %234 = vector.load %arg5[%c0_82, %c0_83] : memref<1x32xf32, #tpu.memory_space<vmem>>, vector<1x32xf32>
    %235 = vector.broadcast %234 : vector<1x32xf32> to vector<2x32xf32>
    %236 = arith.addf %233, %235 : vector<2x32xf32>
    %237 = arith.mulf %223, %236 : vector<2x32xf32>
    %238 = arith.addf %232, %237 : vector<2x32xf32>
    %239 = math.tanh %238 : vector<2x32xf32>
    %cst_84 = arith.constant 1.000000e+00 : f32
    %240 = vector.broadcast %cst_84 : f32 to vector<2x32xf32>
    %241 = arith.subf %240, %231 : vector<2x32xf32>
    %242 = arith.mulf %241, %239 : vector<2x32xf32>
    %243 = arith.mulf %231, %176 : vector<2x32xf32>
    %244 = arith.addf %242, %243 : vector<2x32xf32>
    %c0_85 = arith.constant 0 : index
    %c0_86 = arith.constant 0 : index
    %245 = vector.load %arg6[%c0_85, %c0_86] : memref<32x96xf32, #tpu.memory_space<vmem>>, vector<32x96xf32>
    %cst_87 = arith.constant dense<0.000000e+00> : vector<2x96xf32>
    %246 = tpu.matmul %244, %245, %cst_87 {dimension_numbers = #tpu.dot_dimension_numbers<[1], [0], [0], [1], [0, 0, 1, 1], [], []>} : vector<2x32xf32>, vector<32x96xf32>, vector<2x96xf32> -> vector<2x96xf32>
    %c0_88 = arith.constant 0 : index
    %c0_89 = arith.constant 0 : index
    %247 = vector.load %arg8[%c0_88, %c0_89] : memref<1x96xf32, #tpu.memory_space<vmem>>, vector<1x96xf32>
    %248 = vector.broadcast %247 : vector<1x96xf32> to vector<2x96xf32>
    %249 = arith.addf %246, %248 : vector<2x96xf32>
    %c0_90 = arith.constant 0 : index
    %c0_91 = arith.constant 0 : index
    %250 = vector.load %arg7[%c0_90, %c0_91] : memref<32x96xf32, #tpu.memory_space<vmem>>, vector<32x96xf32>
    %cst_92 = arith.constant dense<0.000000e+00> : vector<2x96xf32>
    %251 = tpu.matmul %212, %250, %cst_92 {dimension_numbers = #tpu.dot_dimension_numbers<[1], [0], [0], [1], [0, 0, 1, 1], [], []>} : vector<2x32xf32>, vector<32x96xf32>, vector<2x96xf32> -> vector<2x96xf32>
    %252 = vector.extract_strided_slice %249 {offsets = [0, 0], sizes = [2, 32], strides = [1, 1]} : vector<2x96xf32> to vector<2x32xf32>
    %253 = vector.extract_strided_slice %251 {offsets = [0, 0], sizes = [2, 32], strides = [1, 1]} : vector<2x96xf32> to vector<2x32xf32>
    %254 = arith.addf %252, %253 : vector<2x32xf32>
    %255 = arith.negf %254 : vector<2x32xf32>
    %256 = math.exp %255 : vector<2x32xf32>
    %cst_93 = arith.constant 1.000000e+00 : f32
    %257 = vector.broadcast %cst_93 : f32 to vector<2x32xf32>
    %258 = arith.addf %257, %256 : vector<2x32xf32>
    %259 = arith.divf %257, %258 : vector<2x32xf32>
    %260 = vector.extract_strided_slice %249 {offsets = [0, 32], sizes = [2, 32], strides = [1, 1]} : vector<2x96xf32> to vector<2x32xf32>
    %261 = vector.extract_strided_slice %251 {offsets = [0, 32], sizes = [2, 32], strides = [1, 1]} : vector<2x96xf32> to vector<2x32xf32>
    %262 = arith.addf %260, %261 : vector<2x32xf32>
    %263 = arith.negf %262 : vector<2x32xf32>
    %264 = math.exp %263 : vector<2x32xf32>
    %cst_94 = arith.constant 1.000000e+00 : f32
    %265 = vector.broadcast %cst_94 : f32 to vector<2x32xf32>
    %266 = arith.addf %265, %264 : vector<2x32xf32>
    %267 = arith.divf %265, %266 : vector<2x32xf32>
    %268 = vector.extract_strided_slice %249 {offsets = [0, 64], sizes = [2, 32], strides = [1, 1]} : vector<2x96xf32> to vector<2x32xf32>
    %269 = vector.extract_strided_slice %251 {offsets = [0, 64], sizes = [2, 32], strides = [1, 1]} : vector<2x96xf32> to vector<2x32xf32>
    %c0_95 = arith.constant 0 : index
    %c0_96 = arith.constant 0 : index
    %270 = vector.load %arg9[%c0_95, %c0_96] : memref<1x32xf32, #tpu.memory_space<vmem>>, vector<1x32xf32>
    %271 = vector.broadcast %270 : vector<1x32xf32> to vector<2x32xf32>
    %272 = arith.addf %269, %271 : vector<2x32xf32>
    %273 = arith.mulf %259, %272 : vector<2x32xf32>
    %274 = arith.addf %268, %273 : vector<2x32xf32>
    %275 = math.tanh %274 : vector<2x32xf32>
    %cst_97 = arith.constant 1.000000e+00 : f32
    %276 = vector.broadcast %cst_97 : f32 to vector<2x32xf32>
    %277 = arith.subf %276, %267 : vector<2x32xf32>
    %278 = arith.mulf %277, %275 : vector<2x32xf32>
    %279 = arith.mulf %267, %212 : vector<2x32xf32>
    %280 = arith.addf %278, %279 : vector<2x32xf32>
    %c8 = arith.constant 8 : index
    %c0_98 = arith.constant 0 : index
    %281 = vector.load %arg21[%c8, %c0_98] : memref<16x96xf32, #tpu.memory_space<vmem>>, vector<2x96xf32>
    %c0_99 = arith.constant 0 : index
    %c0_100 = arith.constant 0 : index
    %282 = vector.load %arg3[%c0_99, %c0_100] : memref<32x96xf32, #tpu.memory_space<vmem>>, vector<32x96xf32>
    %cst_101 = arith.constant dense<0.000000e+00> : vector<2x96xf32>
    %283 = tpu.matmul %244, %282, %cst_101 {dimension_numbers = #tpu.dot_dimension_numbers<[1], [0], [0], [1], [0, 0, 1, 1], [], []>} : vector<2x32xf32>, vector<32x96xf32>, vector<2x96xf32> -> vector<2x96xf32>
    %284 = vector.extract_strided_slice %281 {offsets = [0, 0], sizes = [2, 32], strides = [1, 1]} : vector<2x96xf32> to vector<2x32xf32>
    %285 = vector.extract_strided_slice %283 {offsets = [0, 0], sizes = [2, 32], strides = [1, 1]} : vector<2x96xf32> to vector<2x32xf32>
    %286 = arith.addf %284, %285 : vector<2x32xf32>
    %287 = arith.negf %286 : vector<2x32xf32>
    %288 = math.exp %287 : vector<2x32xf32>
    %cst_102 = arith.constant 1.000000e+00 : f32
    %289 = vector.broadcast %cst_102 : f32 to vector<2x32xf32>
    %290 = arith.addf %289, %288 : vector<2x32xf32>
    %291 = arith.divf %289, %290 : vector<2x32xf32>
    %292 = vector.extract_strided_slice %281 {offsets = [0, 32], sizes = [2, 32], strides = [1, 1]} : vector<2x96xf32> to vector<2x32xf32>
    %293 = vector.extract_strided_slice %283 {offsets = [0, 32], sizes = [2, 32], strides = [1, 1]} : vector<2x96xf32> to vector<2x32xf32>
    %294 = arith.addf %292, %293 : vector<2x32xf32>
    %295 = arith.negf %294 : vector<2x32xf32>
    %296 = math.exp %295 : vector<2x32xf32>
    %cst_103 = arith.constant 1.000000e+00 : f32
    %297 = vector.broadcast %cst_103 : f32 to vector<2x32xf32>
    %298 = arith.addf %297, %296 : vector<2x32xf32>
    %299 = arith.divf %297, %298 : vector<2x32xf32>
    %300 = vector.extract_strided_slice %281 {offsets = [0, 64], sizes = [2, 32], strides = [1, 1]} : vector<2x96xf32> to vector<2x32xf32>
    %301 = vector.extract_strided_slice %283 {offsets = [0, 64], sizes = [2, 32], strides = [1, 1]} : vector<2x96xf32> to vector<2x32xf32>
    %c0_104 = arith.constant 0 : index
    %c0_105 = arith.constant 0 : index
    %302 = vector.load %arg5[%c0_104, %c0_105] : memref<1x32xf32, #tpu.memory_space<vmem>>, vector<1x32xf32>
    %303 = vector.broadcast %302 : vector<1x32xf32> to vector<2x32xf32>
    %304 = arith.addf %301, %303 : vector<2x32xf32>
    %305 = arith.mulf %291, %304 : vector<2x32xf32>
    %306 = arith.addf %300, %305 : vector<2x32xf32>
    %307 = math.tanh %306 : vector<2x32xf32>
    %cst_106 = arith.constant 1.000000e+00 : f32
    %308 = vector.broadcast %cst_106 : f32 to vector<2x32xf32>
    %309 = arith.subf %308, %299 : vector<2x32xf32>
    %310 = arith.mulf %309, %307 : vector<2x32xf32>
    %311 = arith.mulf %299, %244 : vector<2x32xf32>
    %312 = arith.addf %310, %311 : vector<2x32xf32>
    %c0_107 = arith.constant 0 : index
    %c0_108 = arith.constant 0 : index
    %313 = vector.load %arg6[%c0_107, %c0_108] : memref<32x96xf32, #tpu.memory_space<vmem>>, vector<32x96xf32>
    %cst_109 = arith.constant dense<0.000000e+00> : vector<2x96xf32>
    %314 = tpu.matmul %312, %313, %cst_109 {dimension_numbers = #tpu.dot_dimension_numbers<[1], [0], [0], [1], [0, 0, 1, 1], [], []>} : vector<2x32xf32>, vector<32x96xf32>, vector<2x96xf32> -> vector<2x96xf32>
    %c0_110 = arith.constant 0 : index
    %c0_111 = arith.constant 0 : index
    %315 = vector.load %arg8[%c0_110, %c0_111] : memref<1x96xf32, #tpu.memory_space<vmem>>, vector<1x96xf32>
    %316 = vector.broadcast %315 : vector<1x96xf32> to vector<2x96xf32>
    %317 = arith.addf %314, %316 : vector<2x96xf32>
    %c0_112 = arith.constant 0 : index
    %c0_113 = arith.constant 0 : index
    %318 = vector.load %arg7[%c0_112, %c0_113] : memref<32x96xf32, #tpu.memory_space<vmem>>, vector<32x96xf32>
    %cst_114 = arith.constant dense<0.000000e+00> : vector<2x96xf32>
    %319 = tpu.matmul %280, %318, %cst_114 {dimension_numbers = #tpu.dot_dimension_numbers<[1], [0], [0], [1], [0, 0, 1, 1], [], []>} : vector<2x32xf32>, vector<32x96xf32>, vector<2x96xf32> -> vector<2x96xf32>
    %320 = vector.extract_strided_slice %317 {offsets = [0, 0], sizes = [2, 32], strides = [1, 1]} : vector<2x96xf32> to vector<2x32xf32>
    %321 = vector.extract_strided_slice %319 {offsets = [0, 0], sizes = [2, 32], strides = [1, 1]} : vector<2x96xf32> to vector<2x32xf32>
    %322 = arith.addf %320, %321 : vector<2x32xf32>
    %323 = arith.negf %322 : vector<2x32xf32>
    %324 = math.exp %323 : vector<2x32xf32>
    %cst_115 = arith.constant 1.000000e+00 : f32
    %325 = vector.broadcast %cst_115 : f32 to vector<2x32xf32>
    %326 = arith.addf %325, %324 : vector<2x32xf32>
    %327 = arith.divf %325, %326 : vector<2x32xf32>
    %328 = vector.extract_strided_slice %317 {offsets = [0, 32], sizes = [2, 32], strides = [1, 1]} : vector<2x96xf32> to vector<2x32xf32>
    %329 = vector.extract_strided_slice %319 {offsets = [0, 32], sizes = [2, 32], strides = [1, 1]} : vector<2x96xf32> to vector<2x32xf32>
    %330 = arith.addf %328, %329 : vector<2x32xf32>
    %331 = arith.negf %330 : vector<2x32xf32>
    %332 = math.exp %331 : vector<2x32xf32>
    %cst_116 = arith.constant 1.000000e+00 : f32
    %333 = vector.broadcast %cst_116 : f32 to vector<2x32xf32>
    %334 = arith.addf %333, %332 : vector<2x32xf32>
    %335 = arith.divf %333, %334 : vector<2x32xf32>
    %336 = vector.extract_strided_slice %317 {offsets = [0, 64], sizes = [2, 32], strides = [1, 1]} : vector<2x96xf32> to vector<2x32xf32>
    %337 = vector.extract_strided_slice %319 {offsets = [0, 64], sizes = [2, 32], strides = [1, 1]} : vector<2x96xf32> to vector<2x32xf32>
    %c0_117 = arith.constant 0 : index
    %c0_118 = arith.constant 0 : index
    %338 = vector.load %arg9[%c0_117, %c0_118] : memref<1x32xf32, #tpu.memory_space<vmem>>, vector<1x32xf32>
    %339 = vector.broadcast %338 : vector<1x32xf32> to vector<2x32xf32>
    %340 = arith.addf %337, %339 : vector<2x32xf32>
    %341 = arith.mulf %327, %340 : vector<2x32xf32>
    %342 = arith.addf %336, %341 : vector<2x32xf32>
    %343 = math.tanh %342 : vector<2x32xf32>
    %cst_119 = arith.constant 1.000000e+00 : f32
    %344 = vector.broadcast %cst_119 : f32 to vector<2x32xf32>
    %345 = arith.subf %344, %335 : vector<2x32xf32>
    %346 = arith.mulf %345, %343 : vector<2x32xf32>
    %347 = arith.mulf %335, %280 : vector<2x32xf32>
    %348 = arith.addf %346, %347 : vector<2x32xf32>
    %c10 = arith.constant 10 : index
    %c0_120 = arith.constant 0 : index
    %349 = vector.load %arg21[%c10, %c0_120] : memref<16x96xf32, #tpu.memory_space<vmem>>, vector<2x96xf32>
    %c0_121 = arith.constant 0 : index
    %c0_122 = arith.constant 0 : index
    %350 = vector.load %arg3[%c0_121, %c0_122] : memref<32x96xf32, #tpu.memory_space<vmem>>, vector<32x96xf32>
    %cst_123 = arith.constant dense<0.000000e+00> : vector<2x96xf32>
    %351 = tpu.matmul %312, %350, %cst_123 {dimension_numbers = #tpu.dot_dimension_numbers<[1], [0], [0], [1], [0, 0, 1, 1], [], []>} : vector<2x32xf32>, vector<32x96xf32>, vector<2x96xf32> -> vector<2x96xf32>
    %352 = vector.extract_strided_slice %349 {offsets = [0, 0], sizes = [2, 32], strides = [1, 1]} : vector<2x96xf32> to vector<2x32xf32>
    %353 = vector.extract_strided_slice %351 {offsets = [0, 0], sizes = [2, 32], strides = [1, 1]} : vector<2x96xf32> to vector<2x32xf32>
    %354 = arith.addf %352, %353 : vector<2x32xf32>
    %355 = arith.negf %354 : vector<2x32xf32>
    %356 = math.exp %355 : vector<2x32xf32>
    %cst_124 = arith.constant 1.000000e+00 : f32
    %357 = vector.broadcast %cst_124 : f32 to vector<2x32xf32>
    %358 = arith.addf %357, %356 : vector<2x32xf32>
    %359 = arith.divf %357, %358 : vector<2x32xf32>
    %360 = vector.extract_strided_slice %349 {offsets = [0, 32], sizes = [2, 32], strides = [1, 1]} : vector<2x96xf32> to vector<2x32xf32>
    %361 = vector.extract_strided_slice %351 {offsets = [0, 32], sizes = [2, 32], strides = [1, 1]} : vector<2x96xf32> to vector<2x32xf32>
    %362 = arith.addf %360, %361 : vector<2x32xf32>
    %363 = arith.negf %362 : vector<2x32xf32>
    %364 = math.exp %363 : vector<2x32xf32>
    %cst_125 = arith.constant 1.000000e+00 : f32
    %365 = vector.broadcast %cst_125 : f32 to vector<2x32xf32>
    %366 = arith.addf %365, %364 : vector<2x32xf32>
    %367 = arith.divf %365, %366 : vector<2x32xf32>
    %368 = vector.extract_strided_slice %349 {offsets = [0, 64], sizes = [2, 32], strides = [1, 1]} : vector<2x96xf32> to vector<2x32xf32>
    %369 = vector.extract_strided_slice %351 {offsets = [0, 64], sizes = [2, 32], strides = [1, 1]} : vector<2x96xf32> to vector<2x32xf32>
    %c0_126 = arith.constant 0 : index
    %c0_127 = arith.constant 0 : index
    %370 = vector.load %arg5[%c0_126, %c0_127] : memref<1x32xf32, #tpu.memory_space<vmem>>, vector<1x32xf32>
    %371 = vector.broadcast %370 : vector<1x32xf32> to vector<2x32xf32>
    %372 = arith.addf %369, %371 : vector<2x32xf32>
    %373 = arith.mulf %359, %372 : vector<2x32xf32>
    %374 = arith.addf %368, %373 : vector<2x32xf32>
    %375 = math.tanh %374 : vector<2x32xf32>
    %cst_128 = arith.constant 1.000000e+00 : f32
    %376 = vector.broadcast %cst_128 : f32 to vector<2x32xf32>
    %377 = arith.subf %376, %367 : vector<2x32xf32>
    %378 = arith.mulf %377, %375 : vector<2x32xf32>
    %379 = arith.mulf %367, %312 : vector<2x32xf32>
    %380 = arith.addf %378, %379 : vector<2x32xf32>
    %c0_129 = arith.constant 0 : index
    %c0_130 = arith.constant 0 : index
    %381 = vector.load %arg6[%c0_129, %c0_130] : memref<32x96xf32, #tpu.memory_space<vmem>>, vector<32x96xf32>
    %cst_131 = arith.constant dense<0.000000e+00> : vector<2x96xf32>
    %382 = tpu.matmul %380, %381, %cst_131 {dimension_numbers = #tpu.dot_dimension_numbers<[1], [0], [0], [1], [0, 0, 1, 1], [], []>} : vector<2x32xf32>, vector<32x96xf32>, vector<2x96xf32> -> vector<2x96xf32>
    %c0_132 = arith.constant 0 : index
    %c0_133 = arith.constant 0 : index
    %383 = vector.load %arg8[%c0_132, %c0_133] : memref<1x96xf32, #tpu.memory_space<vmem>>, vector<1x96xf32>
    %384 = vector.broadcast %383 : vector<1x96xf32> to vector<2x96xf32>
    %385 = arith.addf %382, %384 : vector<2x96xf32>
    %c0_134 = arith.constant 0 : index
    %c0_135 = arith.constant 0 : index
    %386 = vector.load %arg7[%c0_134, %c0_135] : memref<32x96xf32, #tpu.memory_space<vmem>>, vector<32x96xf32>
    %cst_136 = arith.constant dense<0.000000e+00> : vector<2x96xf32>
    %387 = tpu.matmul %348, %386, %cst_136 {dimension_numbers = #tpu.dot_dimension_numbers<[1], [0], [0], [1], [0, 0, 1, 1], [], []>} : vector<2x32xf32>, vector<32x96xf32>, vector<2x96xf32> -> vector<2x96xf32>
    %388 = vector.extract_strided_slice %385 {offsets = [0, 0], sizes = [2, 32], strides = [1, 1]} : vector<2x96xf32> to vector<2x32xf32>
    %389 = vector.extract_strided_slice %387 {offsets = [0, 0], sizes = [2, 32], strides = [1, 1]} : vector<2x96xf32> to vector<2x32xf32>
    %390 = arith.addf %388, %389 : vector<2x32xf32>
    %391 = arith.negf %390 : vector<2x32xf32>
    %392 = math.exp %391 : vector<2x32xf32>
    %cst_137 = arith.constant 1.000000e+00 : f32
    %393 = vector.broadcast %cst_137 : f32 to vector<2x32xf32>
    %394 = arith.addf %393, %392 : vector<2x32xf32>
    %395 = arith.divf %393, %394 : vector<2x32xf32>
    %396 = vector.extract_strided_slice %385 {offsets = [0, 32], sizes = [2, 32], strides = [1, 1]} : vector<2x96xf32> to vector<2x32xf32>
    %397 = vector.extract_strided_slice %387 {offsets = [0, 32], sizes = [2, 32], strides = [1, 1]} : vector<2x96xf32> to vector<2x32xf32>
    %398 = arith.addf %396, %397 : vector<2x32xf32>
    %399 = arith.negf %398 : vector<2x32xf32>
    %400 = math.exp %399 : vector<2x32xf32>
    %cst_138 = arith.constant 1.000000e+00 : f32
    %401 = vector.broadcast %cst_138 : f32 to vector<2x32xf32>
    %402 = arith.addf %401, %400 : vector<2x32xf32>
    %403 = arith.divf %401, %402 : vector<2x32xf32>
    %404 = vector.extract_strided_slice %385 {offsets = [0, 64], sizes = [2, 32], strides = [1, 1]} : vector<2x96xf32> to vector<2x32xf32>
    %405 = vector.extract_strided_slice %387 {offsets = [0, 64], sizes = [2, 32], strides = [1, 1]} : vector<2x96xf32> to vector<2x32xf32>
    %c0_139 = arith.constant 0 : index
    %c0_140 = arith.constant 0 : index
    %406 = vector.load %arg9[%c0_139, %c0_140] : memref<1x32xf32, #tpu.memory_space<vmem>>, vector<1x32xf32>
    %407 = vector.broadcast %406 : vector<1x32xf32> to vector<2x32xf32>
    %408 = arith.addf %405, %407 : vector<2x32xf32>
    %409 = arith.mulf %395, %408 : vector<2x32xf32>
    %410 = arith.addf %404, %409 : vector<2x32xf32>
    %411 = math.tanh %410 : vector<2x32xf32>
    %cst_141 = arith.constant 1.000000e+00 : f32
    %412 = vector.broadcast %cst_141 : f32 to vector<2x32xf32>
    %413 = arith.subf %412, %403 : vector<2x32xf32>
    %414 = arith.mulf %413, %411 : vector<2x32xf32>
    %415 = arith.mulf %403, %348 : vector<2x32xf32>
    %416 = arith.addf %414, %415 : vector<2x32xf32>
    %c12 = arith.constant 12 : index
    %c0_142 = arith.constant 0 : index
    %417 = vector.load %arg21[%c12, %c0_142] : memref<16x96xf32, #tpu.memory_space<vmem>>, vector<2x96xf32>
    %c0_143 = arith.constant 0 : index
    %c0_144 = arith.constant 0 : index
    %418 = vector.load %arg3[%c0_143, %c0_144] : memref<32x96xf32, #tpu.memory_space<vmem>>, vector<32x96xf32>
    %cst_145 = arith.constant dense<0.000000e+00> : vector<2x96xf32>
    %419 = tpu.matmul %380, %418, %cst_145 {dimension_numbers = #tpu.dot_dimension_numbers<[1], [0], [0], [1], [0, 0, 1, 1], [], []>} : vector<2x32xf32>, vector<32x96xf32>, vector<2x96xf32> -> vector<2x96xf32>
    %420 = vector.extract_strided_slice %417 {offsets = [0, 0], sizes = [2, 32], strides = [1, 1]} : vector<2x96xf32> to vector<2x32xf32>
    %421 = vector.extract_strided_slice %419 {offsets = [0, 0], sizes = [2, 32], strides = [1, 1]} : vector<2x96xf32> to vector<2x32xf32>
    %422 = arith.addf %420, %421 : vector<2x32xf32>
    %423 = arith.negf %422 : vector<2x32xf32>
    %424 = math.exp %423 : vector<2x32xf32>
    %cst_146 = arith.constant 1.000000e+00 : f32
    %425 = vector.broadcast %cst_146 : f32 to vector<2x32xf32>
    %426 = arith.addf %425, %424 : vector<2x32xf32>
    %427 = arith.divf %425, %426 : vector<2x32xf32>
    %428 = vector.extract_strided_slice %417 {offsets = [0, 32], sizes = [2, 32], strides = [1, 1]} : vector<2x96xf32> to vector<2x32xf32>
    %429 = vector.extract_strided_slice %419 {offsets = [0, 32], sizes = [2, 32], strides = [1, 1]} : vector<2x96xf32> to vector<2x32xf32>
    %430 = arith.addf %428, %429 : vector<2x32xf32>
    %431 = arith.negf %430 : vector<2x32xf32>
    %432 = math.exp %431 : vector<2x32xf32>
    %cst_147 = arith.constant 1.000000e+00 : f32
    %433 = vector.broadcast %cst_147 : f32 to vector<2x32xf32>
    %434 = arith.addf %433, %432 : vector<2x32xf32>
    %435 = arith.divf %433, %434 : vector<2x32xf32>
    %436 = vector.extract_strided_slice %417 {offsets = [0, 64], sizes = [2, 32], strides = [1, 1]} : vector<2x96xf32> to vector<2x32xf32>
    %437 = vector.extract_strided_slice %419 {offsets = [0, 64], sizes = [2, 32], strides = [1, 1]} : vector<2x96xf32> to vector<2x32xf32>
    %c0_148 = arith.constant 0 : index
    %c0_149 = arith.constant 0 : index
    %438 = vector.load %arg5[%c0_148, %c0_149] : memref<1x32xf32, #tpu.memory_space<vmem>>, vector<1x32xf32>
    %439 = vector.broadcast %438 : vector<1x32xf32> to vector<2x32xf32>
    %440 = arith.addf %437, %439 : vector<2x32xf32>
    %441 = arith.mulf %427, %440 : vector<2x32xf32>
    %442 = arith.addf %436, %441 : vector<2x32xf32>
    %443 = math.tanh %442 : vector<2x32xf32>
    %cst_150 = arith.constant 1.000000e+00 : f32
    %444 = vector.broadcast %cst_150 : f32 to vector<2x32xf32>
    %445 = arith.subf %444, %435 : vector<2x32xf32>
    %446 = arith.mulf %445, %443 : vector<2x32xf32>
    %447 = arith.mulf %435, %380 : vector<2x32xf32>
    %448 = arith.addf %446, %447 : vector<2x32xf32>
    %c0_151 = arith.constant 0 : index
    %c0_152 = arith.constant 0 : index
    %449 = vector.load %arg6[%c0_151, %c0_152] : memref<32x96xf32, #tpu.memory_space<vmem>>, vector<32x96xf32>
    %cst_153 = arith.constant dense<0.000000e+00> : vector<2x96xf32>
    %450 = tpu.matmul %448, %449, %cst_153 {dimension_numbers = #tpu.dot_dimension_numbers<[1], [0], [0], [1], [0, 0, 1, 1], [], []>} : vector<2x32xf32>, vector<32x96xf32>, vector<2x96xf32> -> vector<2x96xf32>
    %c0_154 = arith.constant 0 : index
    %c0_155 = arith.constant 0 : index
    %451 = vector.load %arg8[%c0_154, %c0_155] : memref<1x96xf32, #tpu.memory_space<vmem>>, vector<1x96xf32>
    %452 = vector.broadcast %451 : vector<1x96xf32> to vector<2x96xf32>
    %453 = arith.addf %450, %452 : vector<2x96xf32>
    %c0_156 = arith.constant 0 : index
    %c0_157 = arith.constant 0 : index
    %454 = vector.load %arg7[%c0_156, %c0_157] : memref<32x96xf32, #tpu.memory_space<vmem>>, vector<32x96xf32>
    %cst_158 = arith.constant dense<0.000000e+00> : vector<2x96xf32>
    %455 = tpu.matmul %416, %454, %cst_158 {dimension_numbers = #tpu.dot_dimension_numbers<[1], [0], [0], [1], [0, 0, 1, 1], [], []>} : vector<2x32xf32>, vector<32x96xf32>, vector<2x96xf32> -> vector<2x96xf32>
    %456 = vector.extract_strided_slice %453 {offsets = [0, 0], sizes = [2, 32], strides = [1, 1]} : vector<2x96xf32> to vector<2x32xf32>
    %457 = vector.extract_strided_slice %455 {offsets = [0, 0], sizes = [2, 32], strides = [1, 1]} : vector<2x96xf32> to vector<2x32xf32>
    %458 = arith.addf %456, %457 : vector<2x32xf32>
    %459 = arith.negf %458 : vector<2x32xf32>
    %460 = math.exp %459 : vector<2x32xf32>
    %cst_159 = arith.constant 1.000000e+00 : f32
    %461 = vector.broadcast %cst_159 : f32 to vector<2x32xf32>
    %462 = arith.addf %461, %460 : vector<2x32xf32>
    %463 = arith.divf %461, %462 : vector<2x32xf32>
    %464 = vector.extract_strided_slice %453 {offsets = [0, 32], sizes = [2, 32], strides = [1, 1]} : vector<2x96xf32> to vector<2x32xf32>
    %465 = vector.extract_strided_slice %455 {offsets = [0, 32], sizes = [2, 32], strides = [1, 1]} : vector<2x96xf32> to vector<2x32xf32>
    %466 = arith.addf %464, %465 : vector<2x32xf32>
    %467 = arith.negf %466 : vector<2x32xf32>
    %468 = math.exp %467 : vector<2x32xf32>
    %cst_160 = arith.constant 1.000000e+00 : f32
    %469 = vector.broadcast %cst_160 : f32 to vector<2x32xf32>
    %470 = arith.addf %469, %468 : vector<2x32xf32>
    %471 = arith.divf %469, %470 : vector<2x32xf32>
    %472 = vector.extract_strided_slice %453 {offsets = [0, 64], sizes = [2, 32], strides = [1, 1]} : vector<2x96xf32> to vector<2x32xf32>
    %473 = vector.extract_strided_slice %455 {offsets = [0, 64], sizes = [2, 32], strides = [1, 1]} : vector<2x96xf32> to vector<2x32xf32>
    %c0_161 = arith.constant 0 : index
    %c0_162 = arith.constant 0 : index
    %474 = vector.load %arg9[%c0_161, %c0_162] : memref<1x32xf32, #tpu.memory_space<vmem>>, vector<1x32xf32>
    %475 = vector.broadcast %474 : vector<1x32xf32> to vector<2x32xf32>
    %476 = arith.addf %473, %475 : vector<2x32xf32>
    %477 = arith.mulf %463, %476 : vector<2x32xf32>
    %478 = arith.addf %472, %477 : vector<2x32xf32>
    %479 = math.tanh %478 : vector<2x32xf32>
    %cst_163 = arith.constant 1.000000e+00 : f32
    %480 = vector.broadcast %cst_163 : f32 to vector<2x32xf32>
    %481 = arith.subf %480, %471 : vector<2x32xf32>
    %482 = arith.mulf %481, %479 : vector<2x32xf32>
    %483 = arith.mulf %471, %416 : vector<2x32xf32>
    %484 = arith.addf %482, %483 : vector<2x32xf32>
    %c14 = arith.constant 14 : index
    %c0_164 = arith.constant 0 : index
    %485 = vector.load %arg21[%c14, %c0_164] : memref<16x96xf32, #tpu.memory_space<vmem>>, vector<2x96xf32>
    %c0_165 = arith.constant 0 : index
    %c0_166 = arith.constant 0 : index
    %486 = vector.load %arg3[%c0_165, %c0_166] : memref<32x96xf32, #tpu.memory_space<vmem>>, vector<32x96xf32>
    %cst_167 = arith.constant dense<0.000000e+00> : vector<2x96xf32>
    %487 = tpu.matmul %448, %486, %cst_167 {dimension_numbers = #tpu.dot_dimension_numbers<[1], [0], [0], [1], [0, 0, 1, 1], [], []>} : vector<2x32xf32>, vector<32x96xf32>, vector<2x96xf32> -> vector<2x96xf32>
    %488 = vector.extract_strided_slice %485 {offsets = [0, 0], sizes = [2, 32], strides = [1, 1]} : vector<2x96xf32> to vector<2x32xf32>
    %489 = vector.extract_strided_slice %487 {offsets = [0, 0], sizes = [2, 32], strides = [1, 1]} : vector<2x96xf32> to vector<2x32xf32>
    %490 = arith.addf %488, %489 : vector<2x32xf32>
    %491 = arith.negf %490 : vector<2x32xf32>
    %492 = math.exp %491 : vector<2x32xf32>
    %cst_168 = arith.constant 1.000000e+00 : f32
    %493 = vector.broadcast %cst_168 : f32 to vector<2x32xf32>
    %494 = arith.addf %493, %492 : vector<2x32xf32>
    %495 = arith.divf %493, %494 : vector<2x32xf32>
    %496 = vector.extract_strided_slice %485 {offsets = [0, 32], sizes = [2, 32], strides = [1, 1]} : vector<2x96xf32> to vector<2x32xf32>
    %497 = vector.extract_strided_slice %487 {offsets = [0, 32], sizes = [2, 32], strides = [1, 1]} : vector<2x96xf32> to vector<2x32xf32>
    %498 = arith.addf %496, %497 : vector<2x32xf32>
    %499 = arith.negf %498 : vector<2x32xf32>
    %500 = math.exp %499 : vector<2x32xf32>
    %cst_169 = arith.constant 1.000000e+00 : f32
    %501 = vector.broadcast %cst_169 : f32 to vector<2x32xf32>
    %502 = arith.addf %501, %500 : vector<2x32xf32>
    %503 = arith.divf %501, %502 : vector<2x32xf32>
    %504 = vector.extract_strided_slice %485 {offsets = [0, 64], sizes = [2, 32], strides = [1, 1]} : vector<2x96xf32> to vector<2x32xf32>
    %505 = vector.extract_strided_slice %487 {offsets = [0, 64], sizes = [2, 32], strides = [1, 1]} : vector<2x96xf32> to vector<2x32xf32>
    %c0_170 = arith.constant 0 : index
    %c0_171 = arith.constant 0 : index
    %506 = vector.load %arg5[%c0_170, %c0_171] : memref<1x32xf32, #tpu.memory_space<vmem>>, vector<1x32xf32>
    %507 = vector.broadcast %506 : vector<1x32xf32> to vector<2x32xf32>
    %508 = arith.addf %505, %507 : vector<2x32xf32>
    %509 = arith.mulf %495, %508 : vector<2x32xf32>
    %510 = arith.addf %504, %509 : vector<2x32xf32>
    %511 = math.tanh %510 : vector<2x32xf32>
    %cst_172 = arith.constant 1.000000e+00 : f32
    %512 = vector.broadcast %cst_172 : f32 to vector<2x32xf32>
    %513 = arith.subf %512, %503 : vector<2x32xf32>
    %514 = arith.mulf %513, %511 : vector<2x32xf32>
    %515 = arith.mulf %503, %448 : vector<2x32xf32>
    %516 = arith.addf %514, %515 : vector<2x32xf32>
    %c0_173 = arith.constant 0 : index
    %c0_174 = arith.constant 0 : index
    %517 = vector.load %arg6[%c0_173, %c0_174] : memref<32x96xf32, #tpu.memory_space<vmem>>, vector<32x96xf32>
    %cst_175 = arith.constant dense<0.000000e+00> : vector<2x96xf32>
    %518 = tpu.matmul %516, %517, %cst_175 {dimension_numbers = #tpu.dot_dimension_numbers<[1], [0], [0], [1], [0, 0, 1, 1], [], []>} : vector<2x32xf32>, vector<32x96xf32>, vector<2x96xf32> -> vector<2x96xf32>
    %c0_176 = arith.constant 0 : index
    %c0_177 = arith.constant 0 : index
    %519 = vector.load %arg8[%c0_176, %c0_177] : memref<1x96xf32, #tpu.memory_space<vmem>>, vector<1x96xf32>
    %520 = vector.broadcast %519 : vector<1x96xf32> to vector<2x96xf32>
    %521 = arith.addf %518, %520 : vector<2x96xf32>
    %c0_178 = arith.constant 0 : index
    %c0_179 = arith.constant 0 : index
    %522 = vector.load %arg7[%c0_178, %c0_179] : memref<32x96xf32, #tpu.memory_space<vmem>>, vector<32x96xf32>
    %cst_180 = arith.constant dense<0.000000e+00> : vector<2x96xf32>
    %523 = tpu.matmul %484, %522, %cst_180 {dimension_numbers = #tpu.dot_dimension_numbers<[1], [0], [0], [1], [0, 0, 1, 1], [], []>} : vector<2x32xf32>, vector<32x96xf32>, vector<2x96xf32> -> vector<2x96xf32>
    %524 = vector.extract_strided_slice %521 {offsets = [0, 0], sizes = [2, 32], strides = [1, 1]} : vector<2x96xf32> to vector<2x32xf32>
    %525 = vector.extract_strided_slice %523 {offsets = [0, 0], sizes = [2, 32], strides = [1, 1]} : vector<2x96xf32> to vector<2x32xf32>
    %526 = arith.addf %524, %525 : vector<2x32xf32>
    %527 = arith.negf %526 : vector<2x32xf32>
    %528 = math.exp %527 : vector<2x32xf32>
    %cst_181 = arith.constant 1.000000e+00 : f32
    %529 = vector.broadcast %cst_181 : f32 to vector<2x32xf32>
    %530 = arith.addf %529, %528 : vector<2x32xf32>
    %531 = arith.divf %529, %530 : vector<2x32xf32>
    %532 = vector.extract_strided_slice %521 {offsets = [0, 32], sizes = [2, 32], strides = [1, 1]} : vector<2x96xf32> to vector<2x32xf32>
    %533 = vector.extract_strided_slice %523 {offsets = [0, 32], sizes = [2, 32], strides = [1, 1]} : vector<2x96xf32> to vector<2x32xf32>
    %534 = arith.addf %532, %533 : vector<2x32xf32>
    %535 = arith.negf %534 : vector<2x32xf32>
    %536 = math.exp %535 : vector<2x32xf32>
    %cst_182 = arith.constant 1.000000e+00 : f32
    %537 = vector.broadcast %cst_182 : f32 to vector<2x32xf32>
    %538 = arith.addf %537, %536 : vector<2x32xf32>
    %539 = arith.divf %537, %538 : vector<2x32xf32>
    %540 = vector.extract_strided_slice %521 {offsets = [0, 64], sizes = [2, 32], strides = [1, 1]} : vector<2x96xf32> to vector<2x32xf32>
    %541 = vector.extract_strided_slice %523 {offsets = [0, 64], sizes = [2, 32], strides = [1, 1]} : vector<2x96xf32> to vector<2x32xf32>
    %c0_183 = arith.constant 0 : index
    %c0_184 = arith.constant 0 : index
    %542 = vector.load %arg9[%c0_183, %c0_184] : memref<1x32xf32, #tpu.memory_space<vmem>>, vector<1x32xf32>
    %543 = vector.broadcast %542 : vector<1x32xf32> to vector<2x32xf32>
    %544 = arith.addf %541, %543 : vector<2x32xf32>
    %545 = arith.mulf %531, %544 : vector<2x32xf32>
    %546 = arith.addf %540, %545 : vector<2x32xf32>
    %547 = math.tanh %546 : vector<2x32xf32>
    %cst_185 = arith.constant 1.000000e+00 : f32
    %548 = vector.broadcast %cst_185 : f32 to vector<2x32xf32>
    %549 = arith.subf %548, %539 : vector<2x32xf32>
    %550 = arith.mulf %549, %547 : vector<2x32xf32>
    %551 = arith.mulf %539, %484 : vector<2x32xf32>
    %552 = arith.addf %550, %551 : vector<2x32xf32>
    %c0_186 = arith.constant 0 : index
    %c0_187 = arith.constant 0 : index
    %553 = vector.load %arg1[%c0_186, %c0_187] : memref<2x15xf32, #tpu.memory_space<vmem>>, vector<2x15xf32>
    %c0_188 = arith.constant 0 : index
    %c0_189 = arith.constant 0 : index
    %554 = vector.load %arg10[%c0_188, %c0_189] : memref<15x5xf32, #tpu.memory_space<vmem>>, vector<15x5xf32>
    %cst_190 = arith.constant dense<0.000000e+00> : vector<2x5xf32>
    %555 = tpu.matmul %553, %554, %cst_190 {dimension_numbers = #tpu.dot_dimension_numbers<[1], [0], [0], [1], [0, 0, 1, 1], [], []>} : vector<2x15xf32>, vector<15x5xf32>, vector<2x5xf32> -> vector<2x5xf32>
    %c0_191 = arith.constant 0 : index
    %c0_192 = arith.constant 0 : index
    %556 = vector.load %arg11[%c0_191, %c0_192] : memref<1x5xf32, #tpu.memory_space<vmem>>, vector<1x5xf32>
    %557 = vector.broadcast %556 : vector<1x5xf32> to vector<2x5xf32>
    %558 = arith.addf %555, %557 : vector<2x5xf32>
    %cst_193 = arith.constant 0.000000e+00 : f32
    %559 = vector.broadcast %cst_193 : f32 to vector<2x5xf32>
    %560 = arith.cmpf ogt, %558, %559 : vector<2x5xf32>
    %561 = math.exp %558 : vector<2x5xf32>
    %cst_194 = arith.constant 1.000000e+00 : f32
    %562 = vector.broadcast %cst_194 : f32 to vector<2x5xf32>
    %563 = arith.subf %561, %562 : vector<2x5xf32>
    %564 = arith.select %560, %558, %563 : vector<2x5xi1>, vector<2x5xf32>
    %c0_195 = arith.constant 0 : index
    %c0_196 = arith.constant 0 : index
    %565 = vector.load %arg12[%c0_195, %c0_196] : memref<32x64xf32, #tpu.memory_space<vmem>>, vector<32x64xf32>
    %cst_197 = arith.constant dense<0.000000e+00> : vector<2x64xf32>
    %566 = tpu.matmul %516, %565, %cst_197 {dimension_numbers = #tpu.dot_dimension_numbers<[1], [0], [0], [1], [0, 0, 1, 1], [], []>} : vector<2x32xf32>, vector<32x64xf32>, vector<2x64xf32> -> vector<2x64xf32>
    %c0_198 = arith.constant 0 : index
    %c0_199 = arith.constant 0 : index
    %567 = vector.load %arg13[%c0_198, %c0_199] : memref<32x64xf32, #tpu.memory_space<vmem>>, vector<32x64xf32>
    %cst_200 = arith.constant dense<0.000000e+00> : vector<2x64xf32>
    %568 = tpu.matmul %552, %567, %cst_200 {dimension_numbers = #tpu.dot_dimension_numbers<[1], [0], [0], [1], [0, 0, 1, 1], [], []>} : vector<2x32xf32>, vector<32x64xf32>, vector<2x64xf32> -> vector<2x64xf32>
    %569 = arith.addf %566, %568 : vector<2x64xf32>
    %c0_201 = arith.constant 0 : index
    %c0_202 = arith.constant 0 : index
    %570 = vector.load %arg14[%c0_201, %c0_202] : memref<1x64xf32, #tpu.memory_space<vmem>>, vector<1x64xf32>
    %571 = vector.broadcast %570 : vector<1x64xf32> to vector<2x64xf32>
    %572 = arith.addf %569, %571 : vector<2x64xf32>
    %cst_203 = arith.constant 0.000000e+00 : f32
    %573 = vector.broadcast %cst_203 : f32 to vector<2x64xf32>
    %574 = arith.cmpf ogt, %572, %573 : vector<2x64xf32>
    %575 = math.exp %572 : vector<2x64xf32>
    %cst_204 = arith.constant 1.000000e+00 : f32
    %576 = vector.broadcast %cst_204 : f32 to vector<2x64xf32>
    %577 = arith.subf %575, %576 : vector<2x64xf32>
    %578 = arith.select %574, %572, %577 : vector<2x64xi1>, vector<2x64xf32>
    %c0_205 = arith.constant 0 : index
    %c0_206 = arith.constant 0 : index
    %579 = vector.load %arg15[%c0_205, %c0_206] : memref<64x10xf32, #tpu.memory_space<vmem>>, vector<64x10xf32>
    %cst_207 = arith.constant dense<0.000000e+00> : vector<2x10xf32>
    %580 = tpu.matmul %578, %579, %cst_207 {dimension_numbers = #tpu.dot_dimension_numbers<[1], [0], [0], [1], [0, 0, 1, 1], [], []>} : vector<2x64xf32>, vector<64x10xf32>, vector<2x10xf32> -> vector<2x10xf32>
    %c0_208 = arith.constant 0 : index
    %c0_209 = arith.constant 0 : index
    %581 = vector.load %arg16[%c0_208, %c0_209] : memref<5x10xf32, #tpu.memory_space<vmem>>, vector<5x10xf32>
    %cst_210 = arith.constant dense<0.000000e+00> : vector<2x10xf32>
    %582 = tpu.matmul %564, %581, %cst_210 {dimension_numbers = #tpu.dot_dimension_numbers<[1], [0], [0], [1], [0, 0, 1, 1], [], []>} : vector<2x5xf32>, vector<5x10xf32>, vector<2x10xf32> -> vector<2x10xf32>
    %583 = arith.addf %580, %582 : vector<2x10xf32>
    %c0_211 = arith.constant 0 : index
    %c0_212 = arith.constant 0 : index
    %584 = vector.load %arg17[%c0_211, %c0_212] : memref<1x10xf32, #tpu.memory_space<vmem>>, vector<1x10xf32>
    %585 = vector.broadcast %584 : vector<1x10xf32> to vector<2x10xf32>
    %586 = arith.addf %583, %585 : vector<2x10xf32>
    %cst_213 = arith.constant 0.000000e+00 : f32
    %587 = vector.broadcast %cst_213 : f32 to vector<2x10xf32>
    %588 = arith.cmpf ogt, %586, %587 : vector<2x10xf32>
    %589 = math.exp %586 : vector<2x10xf32>
    %cst_214 = arith.constant 1.000000e+00 : f32
    %590 = vector.broadcast %cst_214 : f32 to vector<2x10xf32>
    %591 = arith.subf %589, %590 : vector<2x10xf32>
    %592 = arith.select %588, %586, %591 : vector<2x10xi1>, vector<2x10xf32>
    %c0_215 = arith.constant 0 : index
    %c0_216 = arith.constant 0 : index
    %593 = vector.load %arg18[%c0_215, %c0_216] : memref<10x1xf32, #tpu.memory_space<vmem>>, vector<10x1xf32>
    %cst_217 = arith.constant dense<0.000000e+00> : vector<2x1xf32>
    %594 = tpu.matmul %592, %593, %cst_217 {dimension_numbers = #tpu.dot_dimension_numbers<[1], [0], [0], [1], [0, 0, 1, 1], [], []>} : vector<2x10xf32>, vector<10x1xf32>, vector<2x1xf32> -> vector<2x1xf32>
    %c0_218 = arith.constant 0 : index
    %c0_219 = arith.constant 0 : index
    %595 = vector.load %arg19[%c0_218, %c0_219] : memref<1x1xf32, #tpu.memory_space<vmem>>, vector<1x1xf32>
    %596 = vector.broadcast %595 : vector<1x1xf32> to vector<2x1xf32>
    %597 = arith.addf %594, %596 : vector<2x1xf32>
    %c0_220 = arith.constant 0 : index
    %c0_221 = arith.constant 0 : index
    %598 = vector.load %arg20[%c0_220, %c0_221] : memref<2x1xf32, #tpu.memory_space<vmem>>, vector<2x1xf32>
    tpu.vector_store %arg20[%c0_220, %c0_221], %597 {strides = array<i32>} : memref<2x1xf32, #tpu.memory_space<vmem>>, vector<2x1xf32>,
    return
  }
}

</mosaic_0001>

<llo_original>
// kernel: gru_model_forward.1
$region0: #{gru_model_forward.1}
  #allocation0 [shape = 'u32[]', space=smem, size = 0x4, offset = 0x4, fixed_abs, tag = 'smem constant byte address 0x4 - core index']
  #allocation1 [shape = 'u32[144,128]{1,0:T(1,128)}', space=vmem, size = 0x12000, scoped, tag = 'internal scratch']
  #allocation2 [shape = 'f32[16,96]{1,0:T(8,128)}', space=vmem, size = 0x2000, scoped, tag = 'scratch operand']
  #allocation3 [shape = 'f32[1,1]{1,0:T(1,128)S(1)}', space=vmem, size = 0x200, scoped, tag = 'scoped memory for gru_model_forward.1']
  %s0 = inlined_call_operand.vmem [shape: f32[16,8], index: 0, kind: input, shape index: {}]
  %s1 = inlined_call_operand.hbm [shape: f32[2,15], index: 1, kind: input, shape index: {}]
  %s2 = inlined_call_operand.hbm [shape: f32[8,96], index: 2, kind: input, shape index: {}]
  %s3 = inlined_call_operand.vmem [shape: f32[32,96], index: 3, kind: input, shape index: {}]
  %s4 = inlined_call_operand.hbm [shape: f32[1,96], index: 4, kind: input, shape index: {}]
  %s5 = inlined_call_operand.hbm [shape: f32[1,32], index: 5, kind: input, shape index: {}]
  %s6 = inlined_call_operand.vmem [shape: f32[32,96], index: 6, kind: input, shape index: {}]
  %s7 = inlined_call_operand.vmem [shape: f32[32,96], index: 7, kind: input, shape index: {}]
  %s8 = inlined_call_operand.hbm [shape: f32[1,96], index: 8, kind: input, shape index: {}]
  %s9 = inlined_call_operand.hbm [shape: f32[1,32], index: 9, kind: input, shape index: {}]
  %s10 = inlined_call_operand.vmem [shape: f32[15,5], index: 10, kind: input, shape index: {}]
  %s11 = inlined_call_operand.hbm [shape: f32[1,5], index: 11, kind: input, shape index: {}]
  %s12 = inlined_call_operand.vmem [shape: f32[32,64], index: 12, kind: input, shape index: {}]
  %s13 = inlined_call_operand.vmem [shape: f32[32,64], index: 13, kind: input, shape index: {}]
  %s14 = inlined_call_operand.hbm [shape: f32[1,64], index: 14, kind: input, shape index: {}]
  %s15 = inlined_call_operand.vmem [shape: f32[64,10], index: 15, kind: input, shape index: {}]
  %s16 = inlined_call_operand.hbm [shape: f32[5,10], index: 16, kind: input, shape index: {}]
  %s17 = inlined_call_operand.hbm [shape: f32[1,10], index: 17, kind: input, shape index: {}]
  %s18 = inlined_call_operand.vmem [shape: f32[10,1], index: 18, kind: input, shape index: {}]
  %s19 = inlined_call_operand.<no memory space> [shape: f32[1,1], index: 19, kind: input, shape index: {}]
  %s20 = inlined_call_operand.vmem [shape: f32[2,1], index: 20, kind: output, shape index: {}]
  %s21 = sld [smem:[#allocation0]]
  $region130: #{gru_model_forward.1} parent=0
    _
  %s23 = ssub.s32 1, %s21
  %s24 = scalar_select 0, %s23, %s21
  %v25 = vstv %s19
  %26 = vst [vmem:[#allocation3] sm:$0x1] %v25
  $region1: #{gru_model_forward.1} parent=0
    #allocation4 [shape = 'u8[1024]{0}', space=vmem, size = 0x400, scoped, tag = 'input window, operand 1, single buffered']
    #allocation5 [shape = 's32[1]{0}', space=sflag, size = 0x4, scoped, tag = 'scoped memory for gru_model_forward.1']
    #allocation6 [shape = 'u8[4096]{0}', space=vmem, size = 0x1000, scoped, tag = 'input window, operand 2, single buffered']
    #allocation7 [shape = 's32[1]{0}', space=sflag, size = 0x4, scoped, tag = 'scoped memory for gru_model_forward.1']
    #allocation8 [shape = 'u8[512]{0}', space=vmem, size = 0x400, scoped, tag = 'input window, operand 4, single buffered']
    #allocation9 [shape = 'u8[512]{0}', space=vmem, size = 0x400, scoped, tag = 'input window, operand 5, single buffered']
    #allocation10 [shape = 's32[1]{0}', space=sflag, size = 0x4, scoped, tag = 'scoped memory for gru_model_forward.1']
    #allocation11 [shape = 'u8[512]{0}', space=vmem, size = 0x400, scoped, tag = 'input window, operand 8, single buffered']
    #allocation12 [shape = 'u8[512]{0}', space=vmem, size = 0x400, scoped, tag = 'input window, operand 9, single buffered']
    #allocation13 [shape = 's32[1]{0}', space=sflag, size = 0x4, scoped, tag = 'scoped memory for gru_model_forward.1']
    #allocation14 [shape = 'u8[512]{0}', space=vmem, size = 0x400, scoped, tag = 'input window, operand 11, single buffered']
    #allocation15 [shape = 'u8[512]{0}', space=vmem, size = 0x400, scoped, tag = 'input window, operand 14, single buffered']
    #allocation16 [shape = 's32[1]{0}', space=sflag, size = 0x4, scoped, tag = 'scoped memory for gru_model_forward.1']
    #allocation17 [shape = 'u8[4096]{0}', space=vmem, size = 0x1000, scoped, tag = 'input window, operand 16, single buffered']
    #allocation18 [shape = 'u8[512]{0}', space=vmem, size = 0x400, scoped, tag = 'input window, operand 17, single buffered']
    #allocation19 [shape = 's32[1]{0}', space=sflag, size = 0x4, scoped, tag = 'scoped memory for gru_model_forward.1']
    %27 = vsyncpa [#allocation5], 0
    %28 = vsyncpa [#allocation7], 0
    %29 = vsyncpa [#allocation10], 0
    %30 = vsyncpa [#allocation13], 0
    %31 = vsyncpa [#allocation16], 0
    %32 = vsyncpa [#allocation19], 0
    // Predicated region
    $region2: #{gru_model_forward.1} parent=1 // pred_check
      _
    $region3: #{gru_model_forward.1} parent=1 // pred_check_branch
      %34 = sbr.rel (0) target = $region5
    $region4: #{gru_model_forward.1} parent=1 // pred_region
      _
    $region5: #{gru_model_forward.1} parent=1 // pred_fallthru
      _
    // Predicated region
    $region6: #{gru_model_forward.1} parent=1 // pred_check
      _
    $region7: #{gru_model_forward.1} parent=1 // pred_check_branch
      %36 = sbr.rel (0) target = $region9
    $region8: #{gru_model_forward.1} parent=1 // pred_region
      %s38 = ssub.s32 32, 32
      %39 = vsyncadd [#allocation5], %s38
      %s41 = sshll.u32 [#allocation4], 4
      %s42 = int_to_ptr.vmem [resolvable:$true] %s41
      %44 = dma.hbm_to_vmem [thread:$0]  %s1, 32, %s42, [#allocation5]
    $region9: #{gru_model_forward.1} parent=1 // pred_fallthru
      _
    // Predicated region
    $region10: #{gru_model_forward.1} parent=1 // pred_check
      _
    $region11: #{gru_model_forward.1} parent=1 // pred_check_branch
      %46 = sbr.rel (0) target = $region13
    $region12: #{gru_model_forward.1} parent=1 // pred_region
      %s48 = ssub.s32 128, 128
      %49 = vsyncadd [#allocation7], %s48
      %s51 = sshll.u32 [#allocation6], 4
      %s52 = int_to_ptr.vmem [resolvable:$true] %s51
      %54 = dma.hbm_to_vmem [thread:$0]  %s2, 128, %s52, [#allocation7]
    $region13: #{gru_model_forward.1} parent=1 // pred_fallthru
      _
    // Predicated region
    $region14: #{gru_model_forward.1} parent=1 // pred_check
      _
    $region15: #{gru_model_forward.1} parent=1 // pred_check_branch
      %56 = sbr.rel (0) target = $region17
    $region16: #{gru_model_forward.1} parent=1 // pred_region
      _
    $region17: #{gru_model_forward.1} parent=1 // pred_fallthru
      _
    // Predicated region
    $region18: #{gru_model_forward.1} parent=1 // pred_check
      _
    $region19: #{gru_model_forward.1} parent=1 // pred_check_branch
      %58 = sbr.rel (0) target = $region21
    $region20: #{gru_model_forward.1} parent=1 // pred_region
      %s60 = ssub.s32 16, 16
      %61 = vsyncadd [#allocation7], %s60
      %s63 = sshll.u32 [#allocation8], 4
      %s64 = int_to_ptr.vmem [resolvable:$true] %s63
      %66 = dma.hbm_to_vmem [thread:$0]  %s4, 16, %s64, [#allocation7]
    $region21: #{gru_model_forward.1} parent=1 // pred_fallthru
      _
    // Predicated region
    $region22: #{gru_model_forward.1} parent=1 // pred_check
      _
    $region23: #{gru_model_forward.1} parent=1 // pred_check_branch
      %68 = sbr.rel (0) target = $region25
    $region24: #{gru_model_forward.1} parent=1 // pred_region
      %s70 = ssub.s32 16, 16
      %71 = vsyncadd [#allocation10], %s70
      %s73 = sshll.u32 [#allocation9], 4
      %s74 = int_to_ptr.vmem [resolvable:$true] %s73
      %76 = dma.hbm_to_vmem [thread:$0]  %s5, 16, %s74, [#allocation10]
    $region25: #{gru_model_forward.1} parent=1 // pred_fallthru
      _
    // Predicated region
    $region26: #{gru_model_forward.1} parent=1 // pred_check
      _
    $region27: #{gru_model_forward.1} parent=1 // pred_check_branch
      %78 = sbr.rel (0) target = $region29
    $region28: #{gru_model_forward.1} parent=1 // pred_region
      _
    $region29: #{gru_model_forward.1} parent=1 // pred_fallthru
      _
    // Predicated region
    $region30: #{gru_model_forward.1} parent=1 // pred_check
      _
    $region31: #{gru_model_forward.1} parent=1 // pred_check_branch
      %80 = sbr.rel (0) target = $region33
    $region32: #{gru_model_forward.1} parent=1 // pred_region
      _
    $region33: #{gru_model_forward.1} parent=1 // pred_fallthru
      _
    // Predicated region
    $region34: #{gru_model_forward.1} parent=1 // pred_check
      _
    $region35: #{gru_model_forward.1} parent=1 // pred_check_branch
      %82 = sbr.rel (0) target = $region37
    $region36: #{gru_model_forward.1} parent=1 // pred_region
      %s84 = ssub.s32 16, 16
      %85 = vsyncadd [#allocation10], %s84
      %s87 = sshll.u32 [#allocation11], 4
      %s88 = int_to_ptr.vmem [resolvable:$true] %s87
      %90 = dma.hbm_to_vmem [thread:$0]  %s8, 16, %s88, [#allocation10]
    $region37: #{gru_model_forward.1} parent=1 // pred_fallthru
      _
    // Predicated region
    $region38: #{gru_model_forward.1} parent=1 // pred_check
      _
    $region39: #{gru_model_forward.1} parent=1 // pred_check_branch
      %92 = sbr.rel (0) target = $region41
    $region40: #{gru_model_forward.1} parent=1 // pred_region
      %s94 = ssub.s32 16, 16
      %95 = vsyncadd [#allocation13], %s94
      %s97 = sshll.u32 [#allocation12], 4
      %s98 = int_to_ptr.vmem [resolvable:$true] %s97
      %100 = dma.hbm_to_vmem [thread:$0]  %s9, 16, %s98, [#allocation13]
    $region41: #{gru_model_forward.1} parent=1 // pred_fallthru
      _
    // Predicated region
    $region42: #{gru_model_forward.1} parent=1 // pred_check
      _
    $region43: #{gru_model_forward.1} parent=1 // pred_check_branch
      %102 = sbr.rel (0) target = $region45
    $region44: #{gru_model_forward.1} parent=1 // pred_region
      _
    $region45: #{gru_model_forward.1} parent=1 // pred_fallthru
      _
    // Predicated region
    $region46: #{gru_model_forward.1} parent=1 // pred_check
      _
    $region47: #{gru_model_forward.1} parent=1 // pred_check_branch
      %104 = sbr.rel (0) target = $region49
    $region48: #{gru_model_forward.1} parent=1 // pred_region
      %s106 = ssub.s32 16, 16
      %107 = vsyncadd [#allocation13], %s106
      %s109 = sshll.u32 [#allocation14], 4
      %s110 = int_to_ptr.vmem [resolvable:$true] %s109
      %112 = dma.hbm_to_vmem [thread:$0]  %s11, 16, %s110, [#allocation13]
    $region49: #{gru_model_forward.1} parent=1 // pred_fallthru
      _
    // Predicated region
    $region50: #{gru_model_forward.1} parent=1 // pred_check
      _
    $region51: #{gru_model_forward.1} parent=1 // pred_check_branch
      %114 = sbr.rel (0) target = $region53
    $region52: #{gru_model_forward.1} parent=1 // pred_region
      _
    $region53: #{gru_model_forward.1} parent=1 // pred_fallthru
      _
    // Predicated region
    $region54: #{gru_model_forward.1} parent=1 // pred_check
      _
    $region55: #{gru_model_forward.1} parent=1 // pred_check_branch
      %116 = sbr.rel (0) target = $region57
    $region56: #{gru_model_forward.1} parent=1 // pred_region
      _
    $region57: #{gru_model_forward.1} parent=1 // pred_fallthru
      _
    // Predicated region
    $region58: #{gru_model_forward.1} parent=1 // pred_check
      _
    $region59: #{gru_model_forward.1} parent=1 // pred_check_branch
      %118 = sbr.rel (0) target = $region61
    $region60: #{gru_model_forward.1} parent=1 // pred_region
      %s120 = ssub.s32 16, 16
      %121 = vsyncadd [#allocation16], %s120
      %s123 = sshll.u32 [#allocation15], 4
      %s124 = int_to_ptr.vmem [resolvable:$true] %s123
      %126 = dma.hbm_to_vmem [thread:$0]  %s14, 16, %s124, [#allocation16]
    $region61: #{gru_model_forward.1} parent=1 // pred_fallthru
      _
    // Predicated region
    $region62: #{gru_model_forward.1} parent=1 // pred_check
      _
    $region63: #{gru_model_forward.1} parent=1 // pred_check_branch
      %128 = sbr.rel (0) target = $region65
    $region64: #{gru_model_forward.1} parent=1 // pred_region
      _
    $region65: #{gru_model_forward.1} parent=1 // pred_fallthru
      _
    // Predicated region
    $region66: #{gru_model_forward.1} parent=1 // pred_check
      _
    $region67: #{gru_model_forward.1} parent=1 // pred_check_branch
      %130 = sbr.rel (0) target = $region69
    $region68: #{gru_model_forward.1} parent=1 // pred_region
      %s132 = ssub.s32 128, 128
      %133 = vsyncadd [#allocation16], %s132
      %s135 = sshll.u32 [#allocation17], 4
      %s136 = int_to_ptr.vmem [resolvable:$true] %s135
      %138 = dma.hbm_to_vmem [thread:$0]  %s16, 128, %s136, [#allocation16]
    $region69: #{gru_model_forward.1} parent=1 // pred_fallthru
      _
    // Predicated region
    $region70: #{gru_model_forward.1} parent=1 // pred_check
      _
    $region71: #{gru_model_forward.1} parent=1 // pred_check_branch
      %140 = sbr.rel (0) target = $region73
    $region72: #{gru_model_forward.1} parent=1 // pred_region
      %s142 = ssub.s32 16, 16
      %143 = vsyncadd [#allocation19], %s142
      %s145 = sshll.u32 [#allocation18], 4
      %s146 = int_to_ptr.vmem [resolvable:$true] %s145
      %148 = dma.hbm_to_vmem [thread:$0]  %s17, 16, %s146, [#allocation19]
    $region73: #{gru_model_forward.1} parent=1 // pred_fallthru
      _
    // Predicated region
    $region74: #{gru_model_forward.1} parent=1 // pred_check
      _
    $region75: #{gru_model_forward.1} parent=1 // pred_check_branch
      %150 = sbr.rel (0) target = $region77
    $region76: #{gru_model_forward.1} parent=1 // pred_region
      _
    $region77: #{gru_model_forward.1} parent=1 // pred_fallthru
      _
    // Predicated region
    $region78: #{gru_model_forward.1} parent=1 // pred_check
      _
    $region79: #{gru_model_forward.1} parent=1 // pred_check_branch
      %152 = sbr.rel (0) target = $region81
    $region80: #{gru_model_forward.1} parent=1 // pred_region
      _
    $region81: #{gru_model_forward.1} parent=1 // pred_fallthru
      _
    // Predicated region
    $region82: #{gru_model_forward.1} parent=1 // pred_check
      _
    $region83: #{gru_model_forward.1} parent=1 // pred_check_branch
      %154 = sbr.rel (0) target = $region85
    $region84: #{gru_model_forward.1} parent=1 // pred_region
      %155 = dma.done [#allocation5], 32
    $region85: #{gru_model_forward.1} parent=1 // pred_fallthru
      _
    // Predicated region
    $region86: #{gru_model_forward.1} parent=1 // pred_check
      _
    $region87: #{gru_model_forward.1} parent=1 // pred_check_branch
      %157 = sbr.rel (0) target = $region89
    $region88: #{gru_model_forward.1} parent=1 // pred_region
      %158 = dma.done [#allocation7], 128
    $region89: #{gru_model_forward.1} parent=1 // pred_fallthru
      _
    // Predicated region
    $region90: #{gru_model_forward.1} parent=1 // pred_check
      _
    $region91: #{gru_model_forward.1} parent=1 // pred_check_branch
      %160 = sbr.rel (0) target = $region93
    $region92: #{gru_model_forward.1} parent=1 // pred_region
      %161 = dma.done [#allocation7], 16
    $region93: #{gru_model_forward.1} parent=1 // pred_fallthru
      _
    // Predicated region
    $region94: #{gru_model_forward.1} parent=1 // pred_check
      _
    $region95: #{gru_model_forward.1} parent=1 // pred_check_branch
      %163 = sbr.rel (0) target = $region97
    $region96: #{gru_model_forward.1} parent=1 // pred_region
      %164 = dma.done [#allocation10], 16
    $region97: #{gru_model_forward.1} parent=1 // pred_fallthru
      _
    // Predicated region
    $region98: #{gru_model_forward.1} parent=1 // pred_check
      _
    $region99: #{gru_model_forward.1} parent=1 // pred_check_branch
      %166 = sbr.rel (0) target = $region101
    $region100: #{gru_model_forward.1} parent=1 // pred_region
      %167 = dma.done [#allocation10], 16
    $region101: #{gru_model_forward.1} parent=1 // pred_fallthru
      _
    // Predicated region
    $region102: #{gru_model_forward.1} parent=1 // pred_check
      _
    $region103: #{gru_model_forward.1} parent=1 // pred_check_branch
      %169 = sbr.rel (0) target = $region105
    $region104: #{gru_model_forward.1} parent=1 // pred_region
      %170 = dma.done [#allocation13], 16
    $region105: #{gru_model_forward.1} parent=1 // pred_fallthru
      _
    // Predicated region
    $region106: #{gru_model_forward.1} parent=1 // pred_check
      _
    $region107: #{gru_model_forward.1} parent=1 // pred_check_branch
      %172 = sbr.rel (0) target = $region109
    $region108: #{gru_model_forward.1} parent=1 // pred_region
      %173 = dma.done [#allocation13], 16
    $region109: #{gru_model_forward.1} parent=1 // pred_fallthru
      _
    // Predicated region
    $region110: #{gru_model_forward.1} parent=1 // pred_check
      _
    $region111: #{gru_model_forward.1} parent=1 // pred_check_branch
      %175 = sbr.rel (0) target = $region113
    $region112: #{gru_model_forward.1} parent=1 // pred_region
      %176 = dma.done [#allocation16], 16
    $region113: #{gru_model_forward.1} parent=1 // pred_fallthru
      _
    // Predicated region
    $region114: #{gru_model_forward.1} parent=1 // pred_check
      _
    $region115: #{gru_model_forward.1} parent=1 // pred_check_branch
      %178 = sbr.rel (0) target = $region117
    $region116: #{gru_model_forward.1} parent=1 // pred_region
      %179 = dma.done [#allocation16], 128
    $region117: #{gru_model_forward.1} parent=1 // pred_fallthru
      _
    // Predicated region
    $region118: #{gru_model_forward.1} parent=1 // pred_check
      _
    $region119: #{gru_model_forward.1} parent=1 // pred_check_branch
      %181 = sbr.rel (0) target = $region121
    $region120: #{gru_model_forward.1} parent=1 // pred_region
      %182 = dma.done [#allocation19], 16
    $region121: #{gru_model_forward.1} parent=1 // pred_fallthru
      _
    %v183 = vld [vmem:[%s0] sm:$0xff]
    %v184 = vld [vmem:[%s0 + $0x8] sm:$0xff]
    %v185 = vld [vmem:[#allocation6] sm:$0xff]
    %v186 = vld [vmem:[#allocation8] sm:$0x1]
    %v188 = vlaneseq
    %v189 = vshrl.u32 %v188, 7
    %v190 = vsub.s32 0, %v189
    %v191 = vrot.slane %v186, %v190
    %vm193 = vcmask 64512
    %v195 = vsel %vm193, %v183, 0
    %v198 = vsel %vm193, %v184, 0
    %200 = vmatprep.subr.mxu0 0.0
    %201 = vmatpush1.msra.mxu0 0.0
    %202 = vmatprep.subr.mxu0 0.0
    %203 = vmatpush1.msra.mxu0 0.0
    %204 = vmatprep.subr.mxu0 0.0
    %205 = vmatpush1.msra.mxu0 0.0
    %206 = vmatprep.subr.mxu0 0.0
    %207 = vmatpush1.msra.mxu0 0.0
    %208 = vmatprep.subr.mxu0 0.0
    %209 = vmatpush1.msra.mxu0 0.0
    %210 = vmatprep.subr.mxu0 0.0
    %211 = vmatpush1.msra.mxu0 0.0
    %212 = vmatprep.subr.mxu0 0.0
    %213 = vmatpush1.msra.mxu0 0.0
    %214 = vmatprep.subr.mxu0 0.0
    %215 = vmatpush1.msra.mxu0 0.0
    %216 = vmatprep.subr.mxu0 0.0
    %217 = vmatpush1.msra.mxu0 0.0
    %218 = vmatprep.subr.mxu0 0.0
    %219 = vmatpush1.msra.mxu0 0.0
    %220 = vmatprep.subr.mxu0 0.0
    %221 = vmatpush1.msra.mxu0 0.0
    %222 = vmatprep.subr.mxu0 0.0
    %223 = vmatpush1.msra.mxu0 0.0
    %224 = vmatprep.subr.mxu0 0.0
    %225 = vmatpush1.msra.mxu0 0.0
    %226 = vmatprep.subr.mxu0 0.0
    %227 = vmatpush1.msra.mxu0 0.0
    %228 = vmatprep.subr.mxu0 0.0
    %229 = vmatpush1.msra.mxu0 0.0
    %230 = vmatprep.subr.mxu0 0.0
    %231 = vmatpush1.msra.mxu0 %v185
    %232 = vmatprep.subr.mxu0 0.0
    %233 = vmatpush2.msra.mxu0 0.0
    %234 = vmatprep.subr.mxu0 0.0
    %235 = vmatpush2.msra.mxu0 0.0
    %236 = vmatprep.subr.mxu0 0.0
    %237 = vmatpush2.msra.mxu0 0.0
    %238 = vmatprep.subr.mxu0 0.0
    %239 = vmatpush2.msra.mxu0 0.0
    %240 = vmatprep.subr.mxu0 0.0
    %241 = vmatpush2.msra.mxu0 0.0
    %242 = vmatprep.subr.mxu0 0.0
    %243 = vmatpush2.msra.mxu0 0.0
    %244 = vmatprep.subr.mxu0 0.0
    %245 = vmatpush2.msra.mxu0 0.0
    %246 = vmatprep.subr.mxu0 0.0
    %247 = vmatpush2.msra.mxu0 0.0
    %248 = vmatprep.subr.mxu0 0.0
    %249 = vmatpush2.msra.mxu0 0.0
    %250 = vmatprep.subr.mxu0 0.0
    %251 = vmatpush2.msra.mxu0 0.0
    %252 = vmatprep.subr.mxu0 0.0
    %253 = vmatpush2.msra.mxu0 0.0
    %254 = vmatprep.subr.mxu0 0.0
    %255 = vmatpush2.msra.mxu0 0.0
    %256 = vmatprep.subr.mxu0 0.0
    %257 = vmatpush2.msra.mxu0 0.0
    %258 = vmatprep.subr.mxu0 0.0
    %259 = vmatpush2.msra.mxu0 0.0
    %260 = vmatprep.subr.mxu0 0.0
    %261 = vmatpush2.msra.mxu0 0.0
    %262 = vmatprep.subr.mxu0 0.0
    %263 = vmatpush2.msra.mxu0 0.0
    %264 = vmatprep.mubr.f32.mxu0 0.0
    %265 = vmatmul.mubr.f32.gmra.mxu0 %v195
    %v266 = vpop.f32.mrf.mxu0
    %v267 = vadd.f32 %v191, %v266
    %v268 = vpop.f32.mrf.mxu0
    %269 = vmatprep.mubr.f32.mxu0 0.0
    %270 = vmatmul.mubr.f32.gmra.mxu0 %v198
    %v271 = vpop.f32.mrf.mxu0
    %v272 = vadd.f32 %v191, %v271
    %v273 = vpop.f32.mrf.mxu0
    %274 = vdwg.mxu0
    %vm275 = vcmask 785408
    %276 = vst.msk [vmem:[#allocation2] sm:$0xff] %vm275, %v267
    %277 = vst.msk [vmem:[#allocation2 + $0x8] sm:$0xff] %vm275, %v272
    %v278 = vld [vmem:[#allocation2] sm:$0x3]
    %v279 = vld [vmem:[%s3] sm:$0xff]
    %v280 = vld [vmem:[%s3 + $0x8] sm:$0xff]
    %v281 = vld [vmem:[%s3 + $0x10] sm:$0xff]
    %v282 = vld [vmem:[%s3 + $0x18] sm:$0xff]
    %vm283 = vcmask 261120
    %v285 = vsel %vm283, 0.0, 0
    %287 = vmatprep.subr.mxu0 0.0
    %288 = vmatpush1.msra.mxu0 0.0
    %289 = vmatprep.subr.mxu0 0.0
    %290 = vmatpush1.msra.mxu0 0.0
    %291 = vmatprep.subr.mxu0 0.0
    %292 = vmatpush1.msra.mxu0 0.0
    %293 = vmatprep.subr.mxu0 0.0
    %294 = vmatpush1.msra.mxu0 0.0
    %295 = vmatprep.subr.mxu0 0.0
    %296 = vmatpush1.msra.mxu0 0.0
    %297 = vmatprep.subr.mxu0 0.0
    %298 = vmatpush1.msra.mxu0 0.0
    %299 = vmatprep.subr.mxu0 0.0
    %300 = vmatpush1.msra.mxu0 0.0
    %301 = vmatprep.subr.mxu0 0.0
    %302 = vmatpush1.msra.mxu0 0.0
    %303 = vmatprep.subr.mxu0 0.0
    %304 = vmatpush1.msra.mxu0 0.0
    %305 = vmatprep.subr.mxu0 0.0
    %306 = vmatpush1.msra.mxu0 0.0
    %307 = vmatprep.subr.mxu0 0.0
    %308 = vmatpush1.msra.mxu0 0.0
    %309 = vmatprep.subr.mxu0 0.0
    %310 = vmatpush1.msra.mxu0 0.0
    %311 = vmatprep.subr.mxu0 0.0
    %312 = vmatpush1.msra.mxu0 %v282
    %313 = vmatprep.subr.mxu0 0.0
    %314 = vmatpush1.msra.mxu0 %v281
    %315 = vmatprep.subr.mxu0 0.0
    %316 = vmatpush1.msra.mxu0 %v280
    %317 = vmatprep.subr.mxu0 0.0
    %318 = vmatpush1.msra.mxu0 %v279
    %319 = vmatprep.subr.mxu0 0.0
    %320 = vmatpush2.msra.mxu0 0.0
    %321 = vmatprep.subr.mxu0 0.0
    %322 = vmatpush2.msra.mxu0 0.0
    %323 = vmatprep.subr.mxu0 0.0
    %324 = vmatpush2.msra.mxu0 0.0
    %325 = vmatprep.subr.mxu0 0.0
    %326 = vmatpush2.msra.mxu0 0.0
    %327 = vmatprep.subr.mxu0 0.0
    %328 = vmatpush2.msra.mxu0 0.0
    %329 = vmatprep.subr.mxu0 0.0
    %330 = vmatpush2.msra.mxu0 0.0
    %331 = vmatprep.subr.mxu0 0.0
    %332 = vmatpush2.msra.mxu0 0.0
    %333 = vmatprep.subr.mxu0 0.0
    %334 = vmatpush2.msra.mxu0 0.0
    %335 = vmatprep.subr.mxu0 0.0
    %336 = vmatpush2.msra.mxu0 0.0
    %337 = vmatprep.subr.mxu0 0.0
    %338 = vmatpush2.msra.mxu0 0.0
    %339 = vmatprep.subr.mxu0 0.0
    %340 = vmatpush2.msra.mxu0 0.0
    %341 = vmatprep.subr.mxu0 0.0
    %342 = vmatpush2.msra.mxu0 0.0
    %343 = vmatprep.subr.mxu0 0.0
    %344 = vmatpush2.msra.mxu0 0.0
    %345 = vmatprep.subr.mxu0 0.0
    %346 = vmatpush2.msra.mxu0 0.0
    %347 = vmatprep.subr.mxu0 0.0
    %348 = vmatpush2.msra.mxu0 0.0
    %349 = vmatprep.subr.mxu0 0.0
    %350 = vmatpush2.msra.mxu0 0.0
    %351 = vmatprep.mubr.f32.mxu0 0.0
    %352 = vmatmul.mubr.f32.gmra.mxu0 %v285
    %v353 = vpop.f32.mrf.mxu0
    %v354 = vadd.f32 0.0, %v353
    %v355 = vpop.f32.mrf.mxu0
    %356 = vdwg.mxu0
    %v357 = vadd.f32 %v278, %v354
    %v358 = vxor.u32 %v357, 2147483648
    %v359 = vmul.f32 %v358, 1.442695
    %v360 = vpow.pop %v359
    %v361 = vadd.f32 %v360, 1.0
    %v362 = vrcp.pop %v361
    %v363 = vmul.f32 1.0, %v362
    %v364 = vld [vmem:[#allocation9] sm:$0x1]
    %v366 = vlaneseq
    %v367 = vshrl.u32 %v366, 7
    %v368 = vsub.s32 0, %v367
    %v369 = vrot.slane %v364, %v368
    %370 = vrot.lane.b32.xlu0 %v369, 64
    %v371 = vpop.permute.xlu0 %370
    %v373 = vadd.f32 %v354, %v371
    %375 = vrot.lane.b32.xlu0 %v373, 64
    %v376 = vpop.permute.xlu0 %375
    %v378 = vmul.f32 %v363, %v376
    %380 = vrot.lane.b32.xlu0 %v378, 64
    %v381 = vpop.permute.xlu0 %380
    %v383 = vadd.f32 %v278, %v381
    %v384 = vtanh.pop %v383
    %v385 = vsub.f32 1.0, %v363
    %387 = vrot.lane.b32.xlu0 %v384, 96
    %v388 = vpop.permute.xlu0 %387
    %v390 = vmul.f32 %v385, %v388
    %v391 = vmul.f32 %v363, 0.0
    %v392 = vadd.f32 %v390, %v391
    %v393 = vld [vmem:[%s6] sm:$0xff]
    %v394 = vld [vmem:[%s6 + $0x8] sm:$0xff]
    %v395 = vld [vmem:[%s6 + $0x10] sm:$0xff]
    %v396 = vld [vmem:[%s6 + $0x18] sm:$0xff]
    %v397 = vld [vmem:[#allocation11] sm:$0x1]
    %v399 = vlaneseq
    %v400 = vshrl.u32 %v399, 7
    %v401 = vsub.s32 0, %v400
    %v402 = vrot.slane %v397, %v401
    %405 = vrot.lane.b32.xlu0 %v392, 96
    %v406 = vpop.permute.xlu0 %405
    %v407 = vsel %vm283, %v406, 0
    %409 = vmatprep.subr.mxu0 0.0
    %410 = vmatpush1.msra.mxu0 0.0
    %411 = vmatprep.subr.mxu0 0.0
    %412 = vmatpush1.msra.mxu0 0.0
    %413 = vmatprep.subr.mxu0 0.0
    %414 = vmatpush1.msra.mxu0 0.0
    %415 = vmatprep.subr.mxu0 0.0
    %416 = vmatpush1.msra.mxu0 0.0
    %417 = vmatprep.subr.mxu0 0.0
    %418 = vmatpush1.msra.mxu0 0.0
    %419 = vmatprep.subr.mxu0 0.0
    %420 = vmatpush1.msra.mxu0 0.0
    %421 = vmatprep.subr.mxu0 0.0
    %422 = vmatpush1.msra.mxu0 0.0
    %423 = vmatprep.subr.mxu0 0.0
    %424 = vmatpush1.msra.mxu0 0.0
    %425 = vmatprep.subr.mxu0 0.0
    %426 = vmatpush1.msra.mxu0 0.0
    %427 = vmatprep.subr.mxu0 0.0
    %428 = vmatpush1.msra.mxu0 0.0
    %429 = vmatprep.subr.mxu0 0.0
    %430 = vmatpush1.msra.mxu0 0.0
    %431 = vmatprep.subr.mxu0 0.0
    %432 = vmatpush1.msra.mxu0 0.0
    %433 = vmatprep.subr.mxu0 0.0
    %434 = vmatpush1.msra.mxu0 %v396
    %435 = vmatprep.subr.mxu0 0.0
    %436 = vmatpush1.msra.mxu0 %v395
    %437 = vmatprep.subr.mxu0 0.0
    %438 = vmatpush1.msra.mxu0 %v394
    %439 = vmatprep.subr.mxu0 0.0
    %440 = vmatpush1.msra.mxu0 %v393
    %441 = vmatprep.subr.mxu0 0.0
    %442 = vmatpush2.msra.mxu0 0.0
    %443 = vmatprep.subr.mxu0 0.0
    %444 = vmatpush2.msra.mxu0 0.0
    %445 = vmatprep.subr.mxu0 0.0
    %446 = vmatpush2.msra.mxu0 0.0
    %447 = vmatprep.subr.mxu0 0.0
    %448 = vmatpush2.msra.mxu0 0.0
    %449 = vmatprep.subr.mxu0 0.0
    %450 = vmatpush2.msra.mxu0 0.0
    %451 = vmatprep.subr.mxu0 0.0
    %452 = vmatpush2.msra.mxu0 0.0
    %453 = vmatprep.subr.mxu0 0.0
    %454 = vmatpush2.msra.mxu0 0.0
    %455 = vmatprep.subr.mxu0 0.0
    %456 = vmatpush2.msra.mxu0 0.0
    %457 = vmatprep.subr.mxu0 0.0
    %458 = vmatpush2.msra.mxu0 0.0
    %459 = vmatprep.subr.mxu0 0.0
    %460 = vmatpush2.msra.mxu0 0.0
    %461 = vmatprep.subr.mxu0 0.0
    %462 = vmatpush2.msra.mxu0 0.0
    %463 = vmatprep.subr.mxu0 0.0
    %464 = vmatpush2.msra.mxu0 0.0
    %465 = vmatprep.subr.mxu0 0.0
    %466 = vmatpush2.msra.mxu0 0.0
    %467 = vmatprep.subr.mxu0 0.0
    %468 = vmatpush2.msra.mxu0 0.0
    %469 = vmatprep.subr.mxu0 0.0
    %470 = vmatpush2.msra.mxu0 0.0
    %471 = vmatprep.subr.mxu0 0.0
    %472 = vmatpush2.msra.mxu0 0.0
    %473 = vmatprep.mubr.f32.mxu0 0.0
    %474 = vmatmul.mubr.f32.gmra.mxu0 %v407
    %v475 = vpop.f32.mrf.mxu0
    %v476 = vadd.f32 %v402, %v475
    %v477 = vpop.f32.mrf.mxu0
    %478 = vdwg.mxu0
    %v479 = vld [vmem:[%s7] sm:$0xff]
    %v480 = vld [vmem:[%s7 + $0x8] sm:$0xff]
    %v481 = vld [vmem:[%s7 + $0x10] sm:$0xff]
    %v482 = vld [vmem:[%s7 + $0x18] sm:$0xff]
    %483 = vmatprep.subr.mxu0 0.0
    %484 = vmatpush1.msra.mxu0 0.0
    %485 = vmatprep.subr.mxu0 0.0
    %486 = vmatpush1.msra.mxu0 0.0
    %487 = vmatprep.subr.mxu0 0.0
    %488 = vmatpush1.msra.mxu0 0.0
    %489 = vmatprep.subr.mxu0 0.0
    %490 = vmatpush1.msra.mxu0 0.0
    %491 = vmatprep.subr.mxu0 0.0
    %492 = vmatpush1.msra.mxu0 0.0
    %493 = vmatprep.subr.mxu0 0.0
    %494 = vmatpush1.msra.mxu0 0.0
    %495 = vmatprep.subr.mxu0 0.0
    %496 = vmatpush1.msra.mxu0 0.0
    %497 = vmatprep.subr.mxu0 0.0
    %498 = vmatpush1.msra.mxu0 0.0
    %499 = vmatprep.subr.mxu0 0.0
    %500 = vmatpush1.msra.mxu0 0.0
    %501 = vmatprep.subr.mxu0 0.0
    %502 = vmatpush1.msra.mxu0 0.0
    %503 = vmatprep.subr.mxu0 0.0
    %504 = vmatpush1.msra.mxu0 0.0
    %505 = vmatprep.subr.mxu0 0.0
    %506 = vmatpush1.msra.mxu0 0.0
    %507 = vmatprep.subr.mxu0 0.0
    %508 = vmatpush1.msra.mxu0 %v482
    %509 = vmatprep.subr.mxu0 0.0
    %510 = vmatpush1.msra.mxu0 %v481
    %511 = vmatprep.subr.mxu0 0.0
    %512 = vmatpush1.msra.mxu0 %v480
    %513 = vmatprep.subr.mxu0 0.0
    %514 = vmatpush1.msra.mxu0 %v479
    %515 = vmatprep.subr.mxu0 0.0
    %516 = vmatpush2.msra.mxu0 0.0
    %517 = vmatprep.subr.mxu0 0.0
    %518 = vmatpush2.msra.mxu0 0.0
    %519 = vmatprep.subr.mxu0 0.0
    %520 = vmatpush2.msra.mxu0 0.0
    %521 = vmatprep.subr.mxu0 0.0
    %522 = vmatpush2.msra.mxu0 0.0
    %523 = vmatprep.subr.mxu0 0.0
    %524 = vmatpush2.msra.mxu0 0.0
    %525 = vmatprep.subr.mxu0 0.0
    %526 = vmatpush2.msra.mxu0 0.0
    %527 = vmatprep.subr.mxu0 0.0
    %528 = vmatpush2.msra.mxu0 0.0
    %529 = vmatprep.subr.mxu0 0.0
    %530 = vmatpush2.msra.mxu0 0.0
    %531 = vmatprep.subr.mxu0 0.0
    %532 = vmatpush2.msra.mxu0 0.0
    %533 = vmatprep.subr.mxu0 0.0
    %534 = vmatpush2.msra.mxu0 0.0
    %535 = vmatprep.subr.mxu0 0.0
    %536 = vmatpush2.msra.mxu0 0.0
    %537 = vmatprep.subr.mxu0 0.0
    %538 = vmatpush2.msra.mxu0 0.0
    %539 = vmatprep.subr.mxu0 0.0
    %540 = vmatpush2.msra.mxu0 0.0
    %541 = vmatprep.subr.mxu0 0.0
    %542 = vmatpush2.msra.mxu0 0.0
    %543 = vmatprep.subr.mxu0 0.0
    %544 = vmatpush2.msra.mxu0 0.0
    %545 = vmatprep.subr.mxu0 0.0
    %546 = vmatpush2.msra.mxu0 0.0
    %547 = vmatprep.mubr.f32.mxu0 0.0
    %548 = vmatmul.mubr.f32.gmra.mxu0 %v285
    %v549 = vpop.f32.mrf.mxu0
    %v550 = vadd.f32 0.0, %v549
    %v551 = vpop.f32.mrf.mxu0
    %552 = vdwg.mxu0
    %v553 = vadd.f32 %v476, %v550
    %v554 = vxor.u32 %v553, 2147483648
    %v555 = vmul.f32 %v554, 1.442695
    %v556 = vpow.pop %v555
    %v557 = vadd.f32 %v556, 1.0
    %v558 = vrcp.pop %v557
    %v559 = vmul.f32 1.0, %v558
    %v560 = vld [vmem:[#allocation12] sm:$0x1]
    %v562 = vlaneseq
    %v563 = vshrl.u32 %v562, 7
    %v564 = vsub.s32 0, %v563
    %v565 = vrot.slane %v560, %v564
    %566 = vrot.lane.b32.xlu0 %v565, 64
    %v567 = vpop.permute.xlu0 %566
    %v569 = vadd.f32 %v550, %v567
    %571 = vrot.lane.b32.xlu0 %v569, 64
    %v572 = vpop.permute.xlu0 %571
    %v574 = vmul.f32 %v559, %v572
    %576 = vrot.lane.b32.xlu0 %v574, 64
    %v577 = vpop.permute.xlu0 %576
    %v579 = vadd.f32 %v476, %v577
    %v580 = vtanh.pop %v579
    %v581 = vsub.f32 1.0, %v559
    %583 = vrot.lane.b32.xlu0 %v580, 96
    %v584 = vpop.permute.xlu0 %583
    %v586 = vmul.f32 %v581, %v584
    %v587 = vmul.f32 %v559, 0.0
    %v588 = vadd.f32 %v586, %v587
    %v589 = vld [vmem:[#allocation2 + $0x2] sm:$0x3]
    %590 = vmatprep.subr.mxu0 0.0
    %591 = vmatpush1.msra.mxu0 0.0
    %592 = vmatprep.subr.mxu0 0.0
    %593 = vmatpush1.msra.mxu0 0.0
    %594 = vmatprep.subr.mxu0 0.0
    %595 = vmatpush1.msra.mxu0 0.0
    %596 = vmatprep.subr.mxu0 0.0
    %597 = vmatpush1.msra.mxu0 0.0
    %598 = vmatprep.subr.mxu0 0.0
    %599 = vmatpush1.msra.mxu0 0.0
    %600 = vmatprep.subr.mxu0 0.0
    %601 = vmatpush1.msra.mxu0 0.0
    %602 = vmatprep.subr.mxu0 0.0
    %603 = vmatpush1.msra.mxu0 0.0
    %604 = vmatprep.subr.mxu0 0.0
    %605 = vmatpush1.msra.mxu0 0.0
    %606 = vmatprep.subr.mxu0 0.0
    %607 = vmatpush1.msra.mxu0 0.0
    %608 = vmatprep.subr.mxu0 0.0
    %609 = vmatpush1.msra.mxu0 0.0
    %610 = vmatprep.subr.mxu0 0.0
    %611 = vmatpush1.msra.mxu0 0.0
    %612 = vmatprep.subr.mxu0 0.0
    %613 = vmatpush1.msra.mxu0 0.0
    %614 = vmatprep.subr.mxu0 0.0
    %615 = vmatpush1.msra.mxu0 %v282
    %616 = vmatprep.subr.mxu0 0.0
    %617 = vmatpush1.msra.mxu0 %v281
    %618 = vmatprep.subr.mxu0 0.0
    %619 = vmatpush1.msra.mxu0 %v280
    %620 = vmatprep.subr.mxu0 0.0
    %621 = vmatpush1.msra.mxu0 %v279
    %622 = vmatprep.subr.mxu0 0.0
    %623 = vmatpush2.msra.mxu0 0.0
    %624 = vmatprep.subr.mxu0 0.0
    %625 = vmatpush2.msra.mxu0 0.0
    %626 = vmatprep.subr.mxu0 0.0
    %627 = vmatpush2.msra.mxu0 0.0
    %628 = vmatprep.subr.mxu0 0.0
    %629 = vmatpush2.msra.mxu0 0.0
    %630 = vmatprep.subr.mxu0 0.0
    %631 = vmatpush2.msra.mxu0 0.0
    %632 = vmatprep.subr.mxu0 0.0
    %633 = vmatpush2.msra.mxu0 0.0
    %634 = vmatprep.subr.mxu0 0.0
    %635 = vmatpush2.msra.mxu0 0.0
    %636 = vmatprep.subr.mxu0 0.0
    %637 = vmatpush2.msra.mxu0 0.0
    %638 = vmatprep.subr.mxu0 0.0
    %639 = vmatpush2.msra.mxu0 0.0
    %640 = vmatprep.subr.mxu0 0.0
    %641 = vmatpush2.msra.mxu0 0.0
    %642 = vmatprep.subr.mxu0 0.0
    %643 = vmatpush2.msra.mxu0 0.0
    %644 = vmatprep.subr.mxu0 0.0
    %645 = vmatpush2.msra.mxu0 0.0
    %646 = vmatprep.subr.mxu0 0.0
    %647 = vmatpush2.msra.mxu0 0.0
    %648 = vmatprep.subr.mxu0 0.0
    %649 = vmatpush2.msra.mxu0 0.0
    %650 = vmatprep.subr.mxu0 0.0
    %651 = vmatpush2.msra.mxu0 0.0
    %652 = vmatprep.subr.mxu0 0.0
    %653 = vmatpush2.msra.mxu0 0.0
    %654 = vmatprep.mubr.f32.mxu0 0.0
    %655 = vmatmul.mubr.f32.gmra.mxu0 %v407
    %v656 = vpop.f32.mrf.mxu0
    %v657 = vadd.f32 0.0, %v656
    %v658 = vpop.f32.mrf.mxu0
    %659 = vdwg.mxu0
    %v660 = vadd.f32 %v589, %v657
    %v661 = vxor.u32 %v660, 2147483648
    %v662 = vmul.f32 %v661, 1.442695
    %v663 = vpow.pop %v662
    %v664 = vadd.f32 %v663, 1.0
    %v665 = vrcp.pop %v664
    %v666 = vmul.f32 1.0, %v665
    %v667 = vadd.f32 %v657, %v371
    %669 = vrot.lane.b32.xlu0 %v667, 64
    %v670 = vpop.permute.xlu0 %669
    %v672 = vmul.f32 %v666, %v670
    %674 = vrot.lane.b32.xlu0 %v672, 64
    %v675 = vpop.permute.xlu0 %674
    %v677 = vadd.f32 %v589, %v675
    %v678 = vtanh.pop %v677
    %v679 = vsub.f32 1.0, %v666
    %681 = vrot.lane.b32.xlu0 %v678, 96
    %v682 = vpop.permute.xlu0 %681
    %v684 = vmul.f32 %v679, %v682
    %v685 = vmul.f32 %v666, %v392
    %v686 = vadd.f32 %v684, %v685
    %688 = vrot.lane.b32.xlu0 %v686, 96
    %v689 = vpop.permute.xlu0 %688
    %v690 = vsel %vm283, %v689, 0
    %692 = vmatprep.subr.mxu0 0.0
    %693 = vmatpush1.msra.mxu0 0.0
    %694 = vmatprep.subr.mxu0 0.0
    %695 = vmatpush1.msra.mxu0 0.0
    %696 = vmatprep.subr.mxu0 0.0
    %697 = vmatpush1.msra.mxu0 0.0
    %698 = vmatprep.subr.mxu0 0.0
    %699 = vmatpush1.msra.mxu0 0.0
    %700 = vmatprep.subr.mxu0 0.0
    %701 = vmatpush1.msra.mxu0 0.0
    %702 = vmatprep.subr.mxu0 0.0
    %703 = vmatpush1.msra.mxu0 0.0
    %704 = vmatprep.subr.mxu0 0.0
    %705 = vmatpush1.msra.mxu0 0.0
    %706 = vmatprep.subr.mxu0 0.0
    %707 = vmatpush1.msra.mxu0 0.0
    %708 = vmatprep.subr.mxu0 0.0
    %709 = vmatpush1.msra.mxu0 0.0
    %710 = vmatprep.subr.mxu0 0.0
    %711 = vmatpush1.msra.mxu0 0.0
    %712 = vmatprep.subr.mxu0 0.0
    %713 = vmatpush1.msra.mxu0 0.0
    %714 = vmatprep.subr.mxu0 0.0
    %715 = vmatpush1.msra.mxu0 0.0
    %716 = vmatprep.subr.mxu0 0.0
    %717 = vmatpush1.msra.mxu0 %v396
    %718 = vmatprep.subr.mxu0 0.0
    %719 = vmatpush1.msra.mxu0 %v395
    %720 = vmatprep.subr.mxu0 0.0
    %721 = vmatpush1.msra.mxu0 %v394
    %722 = vmatprep.subr.mxu0 0.0
    %723 = vmatpush1.msra.mxu0 %v393
    %724 = vmatprep.subr.mxu0 0.0
    %725 = vmatpush2.msra.mxu0 0.0
    %726 = vmatprep.subr.mxu0 0.0
    %727 = vmatpush2.msra.mxu0 0.0
    %728 = vmatprep.subr.mxu0 0.0
    %729 = vmatpush2.msra.mxu0 0.0
    %730 = vmatprep.subr.mxu0 0.0
    %731 = vmatpush2.msra.mxu0 0.0
    %732 = vmatprep.subr.mxu0 0.0
    %733 = vmatpush2.msra.mxu0 0.0
    %734 = vmatprep.subr.mxu0 0.0
    %735 = vmatpush2.msra.mxu0 0.0
    %736 = vmatprep.subr.mxu0 0.0
    %737 = vmatpush2.msra.mxu0 0.0
    %738 = vmatprep.subr.mxu0 0.0
    %739 = vmatpush2.msra.mxu0 0.0
    %740 = vmatprep.subr.mxu0 0.0
    %741 = vmatpush2.msra.mxu0 0.0
    %742 = vmatprep.subr.mxu0 0.0
    %743 = vmatpush2.msra.mxu0 0.0
    %744 = vmatprep.subr.mxu0 0.0
    %745 = vmatpush2.msra.mxu0 0.0
    %746 = vmatprep.subr.mxu0 0.0
    %747 = vmatpush2.msra.mxu0 0.0
    %748 = vmatprep.subr.mxu0 0.0
    %749 = vmatpush2.msra.mxu0 0.0
    %750 = vmatprep.subr.mxu0 0.0
    %751 = vmatpush2.msra.mxu0 0.0
    %752 = vmatprep.subr.mxu0 0.0
    %753 = vmatpush2.msra.mxu0 0.0
    %754 = vmatprep.subr.mxu0 0.0
    %755 = vmatpush2.msra.mxu0 0.0
    %756 = vmatprep.mubr.f32.mxu0 0.0
    %757 = vmatmul.mubr.f32.gmra.mxu0 %v690
    %v758 = vpop.f32.mrf.mxu0
    %v759 = vadd.f32 %v402, %v758
    %v760 = vpop.f32.mrf.mxu0
    %761 = vdwg.mxu0
    %763 = vrot.lane.b32.xlu0 %v588, 96
    %v764 = vpop.permute.xlu0 %763
    %v765 = vsel %vm283, %v764, 0
    %767 = vmatprep.subr.mxu0 0.0
    %768 = vmatpush1.msra.mxu0 0.0
    %769 = vmatprep.subr.mxu0 0.0
    %770 = vmatpush1.msra.mxu0 0.0
    %771 = vmatprep.subr.mxu0 0.0
    %772 = vmatpush1.msra.mxu0 0.0
    %773 = vmatprep.subr.mxu0 0.0
    %774 = vmatpush1.msra.mxu0 0.0
    %775 = vmatprep.subr.mxu0 0.0
    %776 = vmatpush1.msra.mxu0 0.0
    %777 = vmatprep.subr.mxu0 0.0
    %778 = vmatpush1.msra.mxu0 0.0
    %779 = vmatprep.subr.mxu0 0.0
    %780 = vmatpush1.msra.mxu0 0.0
    %781 = vmatprep.subr.mxu0 0.0
    %782 = vmatpush1.msra.mxu0 0.0
    %783 = vmatprep.subr.mxu0 0.0
    %784 = vmatpush1.msra.mxu0 0.0
    %785 = vmatprep.subr.mxu0 0.0
    %786 = vmatpush1.msra.mxu0 0.0
    %787 = vmatprep.subr.mxu0 0.0
    %788 = vmatpush1.msra.mxu0 0.0
    %789 = vmatprep.subr.mxu0 0.0
    %790 = vmatpush1.msra.mxu0 0.0
    %791 = vmatprep.subr.mxu0 0.0
    %792 = vmatpush1.msra.mxu0 %v482
    %793 = vmatprep.subr.mxu0 0.0
    %794 = vmatpush1.msra.mxu0 %v481
    %795 = vmatprep.subr.mxu0 0.0
    %796 = vmatpush1.msra.mxu0 %v480
    %797 = vmatprep.subr.mxu0 0.0
    %798 = vmatpush1.msra.mxu0 %v479
    %799 = vmatprep.subr.mxu0 0.0
    %800 = vmatpush2.msra.mxu0 0.0
    %801 = vmatprep.subr.mxu0 0.0
    %802 = vmatpush2.msra.mxu0 0.0
    %803 = vmatprep.subr.mxu0 0.0
    %804 = vmatpush2.msra.mxu0 0.0
    %805 = vmatprep.subr.mxu0 0.0
    %806 = vmatpush2.msra.mxu0 0.0
    %807 = vmatprep.subr.mxu0 0.0
    %808 = vmatpush2.msra.mxu0 0.0
    %809 = vmatprep.subr.mxu0 0.0
    %810 = vmatpush2.msra.mxu0 0.0
    %811 = vmatprep.subr.mxu0 0.0
    %812 = vmatpush2.msra.mxu0 0.0
    %813 = vmatprep.subr.mxu0 0.0
    %814 = vmatpush2.msra.mxu0 0.0
    %815 = vmatprep.subr.mxu0 0.0
    %816 = vmatpush2.msra.mxu0 0.0
    %817 = vmatprep.subr.mxu0 0.0
    %818 = vmatpush2.msra.mxu0 0.0
    %819 = vmatprep.subr.mxu0 0.0
    %820 = vmatpush2.msra.mxu0 0.0
    %821 = vmatprep.subr.mxu0 0.0
    %822 = vmatpush2.msra.mxu0 0.0
    %823 = vmatprep.subr.mxu0 0.0
    %824 = vmatpush2.msra.mxu0 0.0
    %825 = vmatprep.subr.mxu0 0.0
    %826 = vmatpush2.msra.mxu0 0.0
    %827 = vmatprep.subr.mxu0 0.0
    %828 = vmatpush2.msra.mxu0 0.0
    %829 = vmatprep.subr.mxu0 0.0
    %830 = vmatpush2.msra.mxu0 0.0
    %831 = vmatprep.mubr.f32.mxu0 0.0
    %832 = vmatmul.mubr.f32.gmra.mxu0 %v765
    %v833 = vpop.f32.mrf.mxu0
    %v834 = vadd.f32 0.0, %v833
    %v835 = vpop.f32.mrf.mxu0
    %836 = vdwg.mxu0
    %v837 = vadd.f32 %v759, %v834
    %v838 = vxor.u32 %v837, 2147483648
    %v839 = vmul.f32 %v838, 1.442695
    %v840 = vpow.pop %v839
    %v841 = vadd.f32 %v840, 1.0
    %v842 = vrcp.pop %v841
    %v843 = vmul.f32 1.0, %v842
    %v844 = vadd.f32 %v834, %v567
    %846 = vrot.lane.b32.xlu0 %v844, 64
    %v847 = vpop.permute.xlu0 %846
    %v849 = vmul.f32 %v843, %v847
    %851 = vrot.lane.b32.xlu0 %v849, 64
    %v852 = vpop.permute.xlu0 %851
    %v854 = vadd.f32 %v759, %v852
    %v855 = vtanh.pop %v854
    %v856 = vsub.f32 1.0, %v843
    %858 = vrot.lane.b32.xlu0 %v855, 96
    %v859 = vpop.permute.xlu0 %858
    %v861 = vmul.f32 %v856, %v859
    %v862 = vmul.f32 %v843, %v588
    %v863 = vadd.f32 %v861, %v862
    %v864 = vld [vmem:[#allocation2 + $0x4] sm:$0x3]
    %865 = vmatprep.subr.mxu0 0.0
    %866 = vmatpush1.msra.mxu0 0.0
    %867 = vmatprep.subr.mxu0 0.0
    %868 = vmatpush1.msra.mxu0 0.0
    %869 = vmatprep.subr.mxu0 0.0
    %870 = vmatpush1.msra.mxu0 0.0
    %871 = vmatprep.subr.mxu0 0.0
    %872 = vmatpush1.msra.mxu0 0.0
    %873 = vmatprep.subr.mxu0 0.0
    %874 = vmatpush1.msra.mxu0 0.0
    %875 = vmatprep.subr.mxu0 0.0
    %876 = vmatpush1.msra.mxu0 0.0
    %877 = vmatprep.subr.mxu0 0.0
    %878 = vmatpush1.msra.mxu0 0.0
    %879 = vmatprep.subr.mxu0 0.0
    %880 = vmatpush1.msra.mxu0 0.0
    %881 = vmatprep.subr.mxu0 0.0
    %882 = vmatpush1.msra.mxu0 0.0
    %883 = vmatprep.subr.mxu0 0.0
    %884 = vmatpush1.msra.mxu0 0.0
    %885 = vmatprep.subr.mxu0 0.0
    %886 = vmatpush1.msra.mxu0 0.0
    %887 = vmatprep.subr.mxu0 0.0
    %888 = vmatpush1.msra.mxu0 0.0
    %889 = vmatprep.subr.mxu0 0.0
    %890 = vmatpush1.msra.mxu0 %v282
    %891 = vmatprep.subr.mxu0 0.0
    %892 = vmatpush1.msra.mxu0 %v281
    %893 = vmatprep.subr.mxu0 0.0
    %894 = vmatpush1.msra.mxu0 %v280
    %895 = vmatprep.subr.mxu0 0.0
    %896 = vmatpush1.msra.mxu0 %v279
    %897 = vmatprep.subr.mxu0 0.0
    %898 = vmatpush2.msra.mxu0 0.0
    %899 = vmatprep.subr.mxu0 0.0
    %900 = vmatpush2.msra.mxu0 0.0
    %901 = vmatprep.subr.mxu0 0.0
    %902 = vmatpush2.msra.mxu0 0.0
    %903 = vmatprep.subr.mxu0 0.0
    %904 = vmatpush2.msra.mxu0 0.0
    %905 = vmatprep.subr.mxu0 0.0
    %906 = vmatpush2.msra.mxu0 0.0
    %907 = vmatprep.subr.mxu0 0.0
    %908 = vmatpush2.msra.mxu0 0.0
    %909 = vmatprep.subr.mxu0 0.0
    %910 = vmatpush2.msra.mxu0 0.0
    %911 = vmatprep.subr.mxu0 0.0
    %912 = vmatpush2.msra.mxu0 0.0
    %913 = vmatprep.subr.mxu0 0.0
    %914 = vmatpush2.msra.mxu0 0.0
    %915 = vmatprep.subr.mxu0 0.0
    %916 = vmatpush2.msra.mxu0 0.0
    %917 = vmatprep.subr.mxu0 0.0
    %918 = vmatpush2.msra.mxu0 0.0
    %919 = vmatprep.subr.mxu0 0.0
    %920 = vmatpush2.msra.mxu0 0.0
    %921 = vmatprep.subr.mxu0 0.0
    %922 = vmatpush2.msra.mxu0 0.0
    %923 = vmatprep.subr.mxu0 0.0
    %924 = vmatpush2.msra.mxu0 0.0
    %925 = vmatprep.subr.mxu0 0.0
    %926 = vmatpush2.msra.mxu0 0.0
    %927 = vmatprep.subr.mxu0 0.0
    %928 = vmatpush2.msra.mxu0 0.0
    %929 = vmatprep.mubr.f32.mxu0 0.0
    %930 = vmatmul.mubr.f32.gmra.mxu0 %v690
    %v931 = vpop.f32.mrf.mxu0
    %v932 = vadd.f32 0.0, %v931
    %v933 = vpop.f32.mrf.mxu0
    %934 = vdwg.mxu0
    %v935 = vadd.f32 %v864, %v932
    %v936 = vxor.u32 %v935, 2147483648
    %v937 = vmul.f32 %v936, 1.442695
    %v938 = vpow.pop %v937
    %v939 = vadd.f32 %v938, 1.0
    %v940 = vrcp.pop %v939
    %v941 = vmul.f32 1.0, %v940
    %v942 = vadd.f32 %v932, %v371
    %944 = vrot.lane.b32.xlu0 %v942, 64
    %v945 = vpop.permute.xlu0 %944
    %v947 = vmul.f32 %v941, %v945
    %949 = vrot.lane.b32.xlu0 %v947, 64
    %v950 = vpop.permute.xlu0 %949
    %v952 = vadd.f32 %v864, %v950
    %v953 = vtanh.pop %v952
    %v954 = vsub.f32 1.0, %v941
    %956 = vrot.lane.b32.xlu0 %v953, 96
    %v957 = vpop.permute.xlu0 %956
    %v959 = vmul.f32 %v954, %v957
    %v960 = vmul.f32 %v941, %v686
    %v961 = vadd.f32 %v959, %v960
    %963 = vrot.lane.b32.xlu0 %v961, 96
    %v964 = vpop.permute.xlu0 %963
    %v965 = vsel %vm283, %v964, 0
    %967 = vmatprep.subr.mxu0 0.0
    %968 = vmatpush1.msra.mxu0 0.0
    %969 = vmatprep.subr.mxu0 0.0
    %970 = vmatpush1.msra.mxu0 0.0
    %971 = vmatprep.subr.mxu0 0.0
    %972 = vmatpush1.msra.mxu0 0.0
    %973 = vmatprep.subr.mxu0 0.0
    %974 = vmatpush1.msra.mxu0 0.0
    %975 = vmatprep.subr.mxu0 0.0
    %976 = vmatpush1.msra.mxu0 0.0
    %977 = vmatprep.subr.mxu0 0.0
    %978 = vmatpush1.msra.mxu0 0.0
    %979 = vmatprep.subr.mxu0 0.0
    %980 = vmatpush1.msra.mxu0 0.0
    %981 = vmatprep.subr.mxu0 0.0
    %982 = vmatpush1.msra.mxu0 0.0
    %983 = vmatprep.subr.mxu0 0.0
    %984 = vmatpush1.msra.mxu0 0.0
    %985 = vmatprep.subr.mxu0 0.0
    %986 = vmatpush1.msra.mxu0 0.0
    %987 = vmatprep.subr.mxu0 0.0
    %988 = vmatpush1.msra.mxu0 0.0
    %989 = vmatprep.subr.mxu0 0.0
    %990 = vmatpush1.msra.mxu0 0.0
    %991 = vmatprep.subr.mxu0 0.0
    %992 = vmatpush1.msra.mxu0 %v396
    %993 = vmatprep.subr.mxu0 0.0
    %994 = vmatpush1.msra.mxu0 %v395
    %995 = vmatprep.subr.mxu0 0.0
    %996 = vmatpush1.msra.mxu0 %v394
    %997 = vmatprep.subr.mxu0 0.0
    %998 = vmatpush1.msra.mxu0 %v393
    %999 = vmatprep.subr.mxu0 0.0
    %1000 = vmatpush2.msra.mxu0 0.0
    %1001 = vmatprep.subr.mxu0 0.0
    %1002 = vmatpush2.msra.mxu0 0.0
    %1003 = vmatprep.subr.mxu0 0.0
    %1004 = vmatpush2.msra.mxu0 0.0
    %1005 = vmatprep.subr.mxu0 0.0
    %1006 = vmatpush2.msra.mxu0 0.0
    %1007 = vmatprep.subr.mxu0 0.0
    %1008 = vmatpush2.msra.mxu0 0.0
    %1009 = vmatprep.subr.mxu0 0.0
    %1010 = vmatpush2.msra.mxu0 0.0
    %1011 = vmatprep.subr.mxu0 0.0
    %1012 = vmatpush2.msra.mxu0 0.0
    %1013 = vmatprep.subr.mxu0 0.0
    %1014 = vmatpush2.msra.mxu0 0.0
    %1015 = vmatprep.subr.mxu0 0.0
    %1016 = vmatpush2.msra.mxu0 0.0
    %1017 = vmatprep.subr.mxu0 0.0
    %1018 = vmatpush2.msra.mxu0 0.0
    %1019 = vmatprep.subr.mxu0 0.0
    %1020 = vmatpush2.msra.mxu0 0.0
    %1021 = vmatprep.subr.mxu0 0.0
    %1022 = vmatpush2.msra.mxu0 0.0
    %1023 = vmatprep.subr.mxu0 0.0
    %1024 = vmatpush2.msra.mxu0 0.0
    %1025 = vmatprep.subr.mxu0 0.0
    %1026 = vmatpush2.msra.mxu0 0.0
    %1027 = vmatprep.subr.mxu0 0.0
    %1028 = vmatpush2.msra.mxu0 0.0
    %1029 = vmatprep.subr.mxu0 0.0
    %1030 = vmatpush2.msra.mxu0 0.0
    %1031 = vmatprep.mubr.f32.mxu0 0.0
    %1032 = vmatmul.mubr.f32.gmra.mxu0 %v965
    %v1033 = vpop.f32.mrf.mxu0
    %v1034 = vadd.f32 %v402, %v1033
    %v1035 = vpop.f32.mrf.mxu0
    %1036 = vdwg.mxu0
    %1038 = vrot.lane.b32.xlu0 %v863, 96
    %v1039 = vpop.permute.xlu0 %1038
    %v1040 = vsel %vm283, %v1039, 0
    %1042 = vmatprep.subr.mxu0 0.0
    %1043 = vmatpush1.msra.mxu0 0.0
    %1044 = vmatprep.subr.mxu0 0.0
    %1045 = vmatpush1.msra.mxu0 0.0
    %1046 = vmatprep.subr.mxu0 0.0
    %1047 = vmatpush1.msra.mxu0 0.0
    %1048 = vmatprep.subr.mxu0 0.0
    %1049 = vmatpush1.msra.mxu0 0.0
    %1050 = vmatprep.subr.mxu0 0.0
    %1051 = vmatpush1.msra.mxu0 0.0
    %1052 = vmatprep.subr.mxu0 0.0
    %1053 = vmatpush1.msra.mxu0 0.0
    %1054 = vmatprep.subr.mxu0 0.0
    %1055 = vmatpush1.msra.mxu0 0.0
    %1056 = vmatprep.subr.mxu0 0.0
    %1057 = vmatpush1.msra.mxu0 0.0
    %1058 = vmatprep.subr.mxu0 0.0
    %1059 = vmatpush1.msra.mxu0 0.0
    %1060 = vmatprep.subr.mxu0 0.0
    %1061 = vmatpush1.msra.mxu0 0.0
    %1062 = vmatprep.subr.mxu0 0.0
    %1063 = vmatpush1.msra.mxu0 0.0
    %1064 = vmatprep.subr.mxu0 0.0
    %1065 = vmatpush1.msra.mxu0 0.0
    %1066 = vmatprep.subr.mxu0 0.0
    %1067 = vmatpush1.msra.mxu0 %v482
    %1068 = vmatprep.subr.mxu0 0.0
    %1069 = vmatpush1.msra.mxu0 %v481
    %1070 = vmatprep.subr.mxu0 0.0
    %1071 = vmatpush1.msra.mxu0 %v480
    %1072 = vmatprep.subr.mxu0 0.0
    %1073 = vmatpush1.msra.mxu0 %v479
    %1074 = vmatprep.subr.mxu0 0.0
    %1075 = vmatpush2.msra.mxu0 0.0
    %1076 = vmatprep.subr.mxu0 0.0
    %1077 = vmatpush2.msra.mxu0 0.0
    %1078 = vmatprep.subr.mxu0 0.0
    %1079 = vmatpush2.msra.mxu0 0.0
    %1080 = vmatprep.subr.mxu0 0.0
    %1081 = vmatpush2.msra.mxu0 0.0
    %1082 = vmatprep.subr.mxu0 0.0
    %1083 = vmatpush2.msra.mxu0 0.0
    %1084 = vmatprep.subr.mxu0 0.0
    %1085 = vmatpush2.msra.mxu0 0.0
    %1086 = vmatprep.subr.mxu0 0.0
    %1087 = vmatpush2.msra.mxu0 0.0
    %1088 = vmatprep.subr.mxu0 0.0
    %1089 = vmatpush2.msra.mxu0 0.0
    %1090 = vmatprep.subr.mxu0 0.0
    %1091 = vmatpush2.msra.mxu0 0.0
    %1092 = vmatprep.subr.mxu0 0.0
    %1093 = vmatpush2.msra.mxu0 0.0
    %1094 = vmatprep.subr.mxu0 0.0
    %1095 = vmatpush2.msra.mxu0 0.0
    %1096 = vmatprep.subr.mxu0 0.0
    %1097 = vmatpush2.msra.mxu0 0.0
    %1098 = vmatprep.subr.mxu0 0.0
    %1099 = vmatpush2.msra.mxu0 0.0
    %1100 = vmatprep.subr.mxu0 0.0
    %1101 = vmatpush2.msra.mxu0 0.0
    %1102 = vmatprep.subr.mxu0 0.0
    %1103 = vmatpush2.msra.mxu0 0.0
    %1104 = vmatprep.subr.mxu0 0.0
    %1105 = vmatpush2.msra.mxu0 0.0
    %1106 = vmatprep.mubr.f32.mxu0 0.0
    %1107 = vmatmul.mubr.f32.gmra.mxu0 %v1040
    %v1108 = vpop.f32.mrf.mxu0
    %v1109 = vadd.f32 0.0, %v1108
    %v1110 = vpop.f32.mrf.mxu0
    %1111 = vdwg.mxu0
    %v1112 = vadd.f32 %v1034, %v1109
    %v1113 = vxor.u32 %v1112, 2147483648
    %v1114 = vmul.f32 %v1113, 1.442695
    %v1115 = vpow.pop %v1114
    %v1116 = vadd.f32 %v1115, 1.0
    %v1117 = vrcp.pop %v1116
    %v1118 = vmul.f32 1.0, %v1117
    %v1119 = vadd.f32 %v1109, %v567
    %1121 = vrot.lane.b32.xlu0 %v1119, 64
    %v1122 = vpop.permute.xlu0 %1121
    %v1124 = vmul.f32 %v1118, %v1122
    %1126 = vrot.lane.b32.xlu0 %v1124, 64
    %v1127 = vpop.permute.xlu0 %1126
    %v1129 = vadd.f32 %v1034, %v1127
    %v1130 = vtanh.pop %v1129
    %v1131 = vsub.f32 1.0, %v1118
    %1133 = vrot.lane.b32.xlu0 %v1130, 96
    %v1134 = vpop.permute.xlu0 %1133
    %v1136 = vmul.f32 %v1131, %v1134
    %v1137 = vmul.f32 %v1118, %v863
    %v1138 = vadd.f32 %v1136, %v1137
    %v1139 = vld [vmem:[#allocation2 + $0x6] sm:$0x3]
    %1140 = vmatprep.subr.mxu0 0.0
    %1141 = vmatpush1.msra.mxu0 0.0
    %1142 = vmatprep.subr.mxu0 0.0
    %1143 = vmatpush1.msra.mxu0 0.0
    %1144 = vmatprep.subr.mxu0 0.0
    %1145 = vmatpush1.msra.mxu0 0.0
    %1146 = vmatprep.subr.mxu0 0.0
    %1147 = vmatpush1.msra.mxu0 0.0
    %1148 = vmatprep.subr.mxu0 0.0
    %1149 = vmatpush1.msra.mxu0 0.0
    %1150 = vmatprep.subr.mxu0 0.0
    %1151 = vmatpush1.msra.mxu0 0.0
    %1152 = vmatprep.subr.mxu0 0.0
    %1153 = vmatpush1.msra.mxu0 0.0
    %1154 = vmatprep.subr.mxu0 0.0
    %1155 = vmatpush1.msra.mxu0 0.0
    %1156 = vmatprep.subr.mxu0 0.0
    %1157 = vmatpush1.msra.mxu0 0.0
    %1158 = vmatprep.subr.mxu0 0.0
    %1159 = vmatpush1.msra.mxu0 0.0
    %1160 = vmatprep.subr.mxu0 0.0
    %1161 = vmatpush1.msra.mxu0 0.0
    %1162 = vmatprep.subr.mxu0 0.0
    %1163 = vmatpush1.msra.mxu0 0.0
    %1164 = vmatprep.subr.mxu0 0.0
    %1165 = vmatpush1.msra.mxu0 %v282
    %1166 = vmatprep.subr.mxu0 0.0
    %1167 = vmatpush1.msra.mxu0 %v281
    %1168 = vmatprep.subr.mxu0 0.0
    %1169 = vmatpush1.msra.mxu0 %v280
    %1170 = vmatprep.subr.mxu0 0.0
    %1171 = vmatpush1.msra.mxu0 %v279
    %1172 = vmatprep.subr.mxu0 0.0
    %1173 = vmatpush2.msra.mxu0 0.0
    %1174 = vmatprep.subr.mxu0 0.0
    %1175 = vmatpush2.msra.mxu0 0.0
    %1176 = vmatprep.subr.mxu0 0.0
    %1177 = vmatpush2.msra.mxu0 0.0
    %1178 = vmatprep.subr.mxu0 0.0
    %1179 = vmatpush2.msra.mxu0 0.0
    %1180 = vmatprep.subr.mxu0 0.0
    %1181 = vmatpush2.msra.mxu0 0.0
    %1182 = vmatprep.subr.mxu0 0.0
    %1183 = vmatpush2.msra.mxu0 0.0
    %1184 = vmatprep.subr.mxu0 0.0
    %1185 = vmatpush2.msra.mxu0 0.0
    %1186 = vmatprep.subr.mxu0 0.0
    %1187 = vmatpush2.msra.mxu0 0.0
    %1188 = vmatprep.subr.mxu0 0.0
    %1189 = vmatpush2.msra.mxu0 0.0
    %1190 = vmatprep.subr.mxu0 0.0
    %1191 = vmatpush2.msra.mxu0 0.0
    %1192 = vmatprep.subr.mxu0 0.0
    %1193 = vmatpush2.msra.mxu0 0.0
    %1194 = vmatprep.subr.mxu0 0.0
    %1195 = vmatpush2.msra.mxu0 0.0
    %1196 = vmatprep.subr.mxu0 0.0
    %1197 = vmatpush2.msra.mxu0 0.0
    %1198 = vmatprep.subr.mxu0 0.0
    %1199 = vmatpush2.msra.mxu0 0.0
    %1200 = vmatprep.subr.mxu0 0.0
    %1201 = vmatpush2.msra.mxu0 0.0
    %1202 = vmatprep.subr.mxu0 0.0
    %1203 = vmatpush2.msra.mxu0 0.0
    %1204 = vmatprep.mubr.f32.mxu0 0.0
    %1205 = vmatmul.mubr.f32.gmra.mxu0 %v965
    %v1206 = vpop.f32.mrf.mxu0
    %v1207 = vadd.f32 0.0, %v1206
    %v1208 = vpop.f32.mrf.mxu0
    %1209 = vdwg.mxu0
    %v1210 = vadd.f32 %v1139, %v1207
    %v1211 = vxor.u32 %v1210, 2147483648
    %v1212 = vmul.f32 %v1211, 1.442695
    %v1213 = vpow.pop %v1212
    %v1214 = vadd.f32 %v1213, 1.0
    %v1215 = vrcp.pop %v1214
    %v1216 = vmul.f32 1.0, %v1215
    %v1217 = vadd.f32 %v1207, %v371
    %1219 = vrot.lane.b32.xlu0 %v1217, 64
    %v1220 = vpop.permute.xlu0 %1219
    %v1222 = vmul.f32 %v1216, %v1220
    %1224 = vrot.lane.b32.xlu0 %v1222, 64
    %v1225 = vpop.permute.xlu0 %1224
    %v1227 = vadd.f32 %v1139, %v1225
    %v1228 = vtanh.pop %v1227
    %v1229 = vsub.f32 1.0, %v1216
    %1231 = vrot.lane.b32.xlu0 %v1228, 96
    %v1232 = vpop.permute.xlu0 %1231
    %v1234 = vmul.f32 %v1229, %v1232
    %v1235 = vmul.f32 %v1216, %v961
    %v1236 = vadd.f32 %v1234, %v1235
    %1238 = vrot.lane.b32.xlu0 %v1236, 96
    %v1239 = vpop.permute.xlu0 %1238
    %v1240 = vsel %vm283, %v1239, 0
    %1242 = vmatprep.subr.mxu0 0.0
    %1243 = vmatpush1.msra.mxu0 0.0
    %1244 = vmatprep.subr.mxu0 0.0
    %1245 = vmatpush1.msra.mxu0 0.0
    %1246 = vmatprep.subr.mxu0 0.0
    %1247 = vmatpush1.msra.mxu0 0.0
    %1248 = vmatprep.subr.mxu0 0.0
    %1249 = vmatpush1.msra.mxu0 0.0
    %1250 = vmatprep.subr.mxu0 0.0
    %1251 = vmatpush1.msra.mxu0 0.0
    %1252 = vmatprep.subr.mxu0 0.0
    %1253 = vmatpush1.msra.mxu0 0.0
    %1254 = vmatprep.subr.mxu0 0.0
    %1255 = vmatpush1.msra.mxu0 0.0
    %1256 = vmatprep.subr.mxu0 0.0
    %1257 = vmatpush1.msra.mxu0 0.0
    %1258 = vmatprep.subr.mxu0 0.0
    %1259 = vmatpush1.msra.mxu0 0.0
    %1260 = vmatprep.subr.mxu0 0.0
    %1261 = vmatpush1.msra.mxu0 0.0
    %1262 = vmatprep.subr.mxu0 0.0
    %1263 = vmatpush1.msra.mxu0 0.0
    %1264 = vmatprep.subr.mxu0 0.0
    %1265 = vmatpush1.msra.mxu0 0.0
    %1266 = vmatprep.subr.mxu0 0.0
    %1267 = vmatpush1.msra.mxu0 %v396
    %1268 = vmatprep.subr.mxu0 0.0
    %1269 = vmatpush1.msra.mxu0 %v395
    %1270 = vmatprep.subr.mxu0 0.0
    %1271 = vmatpush1.msra.mxu0 %v394
    %1272 = vmatprep.subr.mxu0 0.0
    %1273 = vmatpush1.msra.mxu0 %v393
    %1274 = vmatprep.subr.mxu0 0.0
    %1275 = vmatpush2.msra.mxu0 0.0
    %1276 = vmatprep.subr.mxu0 0.0
    %1277 = vmatpush2.msra.mxu0 0.0
    %1278 = vmatprep.subr.mxu0 0.0
    %1279 = vmatpush2.msra.mxu0 0.0
    %1280 = vmatprep.subr.mxu0 0.0
    %1281 = vmatpush2.msra.mxu0 0.0
    %1282 = vmatprep.subr.mxu0 0.0
    %1283 = vmatpush2.msra.mxu0 0.0
    %1284 = vmatprep.subr.mxu0 0.0
    %1285 = vmatpush2.msra.mxu0 0.0
    %1286 = vmatprep.subr.mxu0 0.0
    %1287 = vmatpush2.msra.mxu0 0.0
    %1288 = vmatprep.subr.mxu0 0.0
    %1289 = vmatpush2.msra.mxu0 0.0
    %1290 = vmatprep.subr.mxu0 0.0
    %1291 = vmatpush2.msra.mxu0 0.0
    %1292 = vmatprep.subr.mxu0 0.0
    %1293 = vmatpush2.msra.mxu0 0.0
    %1294 = vmatprep.subr.mxu0 0.0
    %1295 = vmatpush2.msra.mxu0 0.0
    %1296 = vmatprep.subr.mxu0 0.0
    %1297 = vmatpush2.msra.mxu0 0.0
    %1298 = vmatprep.subr.mxu0 0.0
    %1299 = vmatpush2.msra.mxu0 0.0
    %1300 = vmatprep.subr.mxu0 0.0
    %1301 = vmatpush2.msra.mxu0 0.0
    %1302 = vmatprep.subr.mxu0 0.0
    %1303 = vmatpush2.msra.mxu0 0.0
    %1304 = vmatprep.subr.mxu0 0.0
    %1305 = vmatpush2.msra.mxu0 0.0
    %1306 = vmatprep.mubr.f32.mxu0 0.0
    %1307 = vmatmul.mubr.f32.gmra.mxu0 %v1240
    %v1308 = vpop.f32.mrf.mxu0
    %v1309 = vadd.f32 %v402, %v1308
    %v1310 = vpop.f32.mrf.mxu0
    %1311 = vdwg.mxu0
    %1313 = vrot.lane.b32.xlu0 %v1138, 96
    %v1314 = vpop.permute.xlu0 %1313
    %v1315 = vsel %vm283, %v1314, 0
    %1317 = vmatprep.subr.mxu0 0.0
    %1318 = vmatpush1.msra.mxu0 0.0
    %1319 = vmatprep.subr.mxu0 0.0
    %1320 = vmatpush1.msra.mxu0 0.0
    %1321 = vmatprep.subr.mxu0 0.0
    %1322 = vmatpush1.msra.mxu0 0.0
    %1323 = vmatprep.subr.mxu0 0.0
    %1324 = vmatpush1.msra.mxu0 0.0
    %1325 = vmatprep.subr.mxu0 0.0
    %1326 = vmatpush1.msra.mxu0 0.0
    %1327 = vmatprep.subr.mxu0 0.0
    %1328 = vmatpush1.msra.mxu0 0.0
    %1329 = vmatprep.subr.mxu0 0.0
    %1330 = vmatpush1.msra.mxu0 0.0
    %1331 = vmatprep.subr.mxu0 0.0
    %1332 = vmatpush1.msra.mxu0 0.0
    %1333 = vmatprep.subr.mxu0 0.0
    %1334 = vmatpush1.msra.mxu0 0.0
    %1335 = vmatprep.subr.mxu0 0.0
    %1336 = vmatpush1.msra.mxu0 0.0
    %1337 = vmatprep.subr.mxu0 0.0
    %1338 = vmatpush1.msra.mxu0 0.0
    %1339 = vmatprep.subr.mxu0 0.0
    %1340 = vmatpush1.msra.mxu0 0.0
    %1341 = vmatprep.subr.mxu0 0.0
    %1342 = vmatpush1.msra.mxu0 %v482
    %1343 = vmatprep.subr.mxu0 0.0
    %1344 = vmatpush1.msra.mxu0 %v481
    %1345 = vmatprep.subr.mxu0 0.0
    %1346 = vmatpush1.msra.mxu0 %v480
    %1347 = vmatprep.subr.mxu0 0.0
    %1348 = vmatpush1.msra.mxu0 %v479
    %1349 = vmatprep.subr.mxu0 0.0
    %1350 = vmatpush2.msra.mxu0 0.0
    %1351 = vmatprep.subr.mxu0 0.0
    %1352 = vmatpush2.msra.mxu0 0.0
    %1353 = vmatprep.subr.mxu0 0.0
    %1354 = vmatpush2.msra.mxu0 0.0
    %1355 = vmatprep.subr.mxu0 0.0
    %1356 = vmatpush2.msra.mxu0 0.0
    %1357 = vmatprep.subr.mxu0 0.0
    %1358 = vmatpush2.msra.mxu0 0.0
    %1359 = vmatprep.subr.mxu0 0.0
    %1360 = vmatpush2.msra.mxu0 0.0
    %1361 = vmatprep.subr.mxu0 0.0
    %1362 = vmatpush2.msra.mxu0 0.0
    %1363 = vmatprep.subr.mxu0 0.0
    %1364 = vmatpush2.msra.mxu0 0.0
    %1365 = vmatprep.subr.mxu0 0.0
    %1366 = vmatpush2.msra.mxu0 0.0
    %1367 = vmatprep.subr.mxu0 0.0
    %1368 = vmatpush2.msra.mxu0 0.0
    %1369 = vmatprep.subr.mxu0 0.0
    %1370 = vmatpush2.msra.mxu0 0.0
    %1371 = vmatprep.subr.mxu0 0.0
    %1372 = vmatpush2.msra.mxu0 0.0
    %1373 = vmatprep.subr.mxu0 0.0
    %1374 = vmatpush2.msra.mxu0 0.0
    %1375 = vmatprep.subr.mxu0 0.0
    %1376 = vmatpush2.msra.mxu0 0.0
    %1377 = vmatprep.subr.mxu0 0.0
    %1378 = vmatpush2.msra.mxu0 0.0
    %1379 = vmatprep.subr.mxu0 0.0
    %1380 = vmatpush2.msra.mxu0 0.0
    %1381 = vmatprep.mubr.f32.mxu0 0.0
    %1382 = vmatmul.mubr.f32.gmra.mxu0 %v1315
    %v1383 = vpop.f32.mrf.mxu0
    %v1384 = vadd.f32 0.0, %v1383
    %v1385 = vpop.f32.mrf.mxu0
    %1386 = vdwg.mxu0
    %v1387 = vadd.f32 %v1309, %v1384
    %v1388 = vxor.u32 %v1387, 2147483648
    %v1389 = vmul.f32 %v1388, 1.442695
    %v1390 = vpow.pop %v1389
    %v1391 = vadd.f32 %v1390, 1.0
    %v1392 = vrcp.pop %v1391
    %v1393 = vmul.f32 1.0, %v1392
    %v1394 = vadd.f32 %v1384, %v567
    %1396 = vrot.lane.b32.xlu0 %v1394, 64
    %v1397 = vpop.permute.xlu0 %1396
    %v1399 = vmul.f32 %v1393, %v1397
    %1401 = vrot.lane.b32.xlu0 %v1399, 64
    %v1402 = vpop.permute.xlu0 %1401
    %v1404 = vadd.f32 %v1309, %v1402
    %v1405 = vtanh.pop %v1404
    %v1406 = vsub.f32 1.0, %v1393
    %1408 = vrot.lane.b32.xlu0 %v1405, 96
    %v1409 = vpop.permute.xlu0 %1408
    %v1411 = vmul.f32 %v1406, %v1409
    %v1412 = vmul.f32 %v1393, %v1138
    %v1413 = vadd.f32 %v1411, %v1412
    %v1414 = vld [vmem:[#allocation2 + $0x8] sm:$0x3]
    %1415 = vmatprep.subr.mxu0 0.0
    %1416 = vmatpush1.msra.mxu0 0.0
    %1417 = vmatprep.subr.mxu0 0.0
    %1418 = vmatpush1.msra.mxu0 0.0
    %1419 = vmatprep.subr.mxu0 0.0
    %1420 = vmatpush1.msra.mxu0 0.0
    %1421 = vmatprep.subr.mxu0 0.0
    %1422 = vmatpush1.msra.mxu0 0.0
    %1423 = vmatprep.subr.mxu0 0.0
    %1424 = vmatpush1.msra.mxu0 0.0
    %1425 = vmatprep.subr.mxu0 0.0
    %1426 = vmatpush1.msra.mxu0 0.0
    %1427 = vmatprep.subr.mxu0 0.0
    %1428 = vmatpush1.msra.mxu0 0.0
    %1429 = vmatprep.subr.mxu0 0.0
    %1430 = vmatpush1.msra.mxu0 0.0
    %1431 = vmatprep.subr.mxu0 0.0
    %1432 = vmatpush1.msra.mxu0 0.0
    %1433 = vmatprep.subr.mxu0 0.0
    %1434 = vmatpush1.msra.mxu0 0.0
    %1435 = vmatprep.subr.mxu0 0.0
    %1436 = vmatpush1.msra.mxu0 0.0
    %1437 = vmatprep.subr.mxu0 0.0
    %1438 = vmatpush1.msra.mxu0 0.0
    %1439 = vmatprep.subr.mxu0 0.0
    %1440 = vmatpush1.msra.mxu0 %v282
    %1441 = vmatprep.subr.mxu0 0.0
    %1442 = vmatpush1.msra.mxu0 %v281
    %1443 = vmatprep.subr.mxu0 0.0
    %1444 = vmatpush1.msra.mxu0 %v280
    %1445 = vmatprep.subr.mxu0 0.0
    %1446 = vmatpush1.msra.mxu0 %v279
    %1447 = vmatprep.subr.mxu0 0.0
    %1448 = vmatpush2.msra.mxu0 0.0
    %1449 = vmatprep.subr.mxu0 0.0
    %1450 = vmatpush2.msra.mxu0 0.0
    %1451 = vmatprep.subr.mxu0 0.0
    %1452 = vmatpush2.msra.mxu0 0.0
    %1453 = vmatprep.subr.mxu0 0.0
    %1454 = vmatpush2.msra.mxu0 0.0
    %1455 = vmatprep.subr.mxu0 0.0
    %1456 = vmatpush2.msra.mxu0 0.0
    %1457 = vmatprep.subr.mxu0 0.0
    %1458 = vmatpush2.msra.mxu0 0.0
    %1459 = vmatprep.subr.mxu0 0.0
    %1460 = vmatpush2.msra.mxu0 0.0
    %1461 = vmatprep.subr.mxu0 0.0
    %1462 = vmatpush2.msra.mxu0 0.0
    %1463 = vmatprep.subr.mxu0 0.0
    %1464 = vmatpush2.msra.mxu0 0.0
    %1465 = vmatprep.subr.mxu0 0.0
    %1466 = vmatpush2.msra.mxu0 0.0
    %1467 = vmatprep.subr.mxu0 0.0
    %1468 = vmatpush2.msra.mxu0 0.0
    %1469 = vmatprep.subr.mxu0 0.0
    %1470 = vmatpush2.msra.mxu0 0.0
    %1471 = vmatprep.subr.mxu0 0.0
    %1472 = vmatpush2.msra.mxu0 0.0
    %1473 = vmatprep.subr.mxu0 0.0
    %1474 = vmatpush2.msra.mxu0 0.0
    %1475 = vmatprep.subr.mxu0 0.0
    %1476 = vmatpush2.msra.mxu0 0.0
    %1477 = vmatprep.subr.mxu0 0.0
    %1478 = vmatpush2.msra.mxu0 0.0
    %1479 = vmatprep.mubr.f32.mxu0 0.0
    %1480 = vmatmul.mubr.f32.gmra.mxu0 %v1240
    %v1481 = vpop.f32.mrf.mxu0
    %v1482 = vadd.f32 0.0, %v1481
    %v1483 = vpop.f32.mrf.mxu0
    %1484 = vdwg.mxu0
    %v1485 = vadd.f32 %v1414, %v1482
    %v1486 = vxor.u32 %v1485, 2147483648
    %v1487 = vmul.f32 %v1486, 1.442695
    %v1488 = vpow.pop %v1487
    %v1489 = vadd.f32 %v1488, 1.0
    %v1490 = vrcp.pop %v1489
    %v1491 = vmul.f32 1.0, %v1490
    %v1492 = vadd.f32 %v1482, %v371
    %1494 = vrot.lane.b32.xlu0 %v1492, 64
    %v1495 = vpop.permute.xlu0 %1494
    %v1497 = vmul.f32 %v1491, %v1495
    %1499 = vrot.lane.b32.xlu0 %v1497, 64
    %v1500 = vpop.permute.xlu0 %1499
    %v1502 = vadd.f32 %v1414, %v1500
    %v1503 = vtanh.pop %v1502
    %v1504 = vsub.f32 1.0, %v1491
    %1506 = vrot.lane.b32.xlu0 %v1503, 96
    %v1507 = vpop.permute.xlu0 %1506
    %v1509 = vmul.f32 %v1504, %v1507
    %v1510 = vmul.f32 %v1491, %v1236
    %v1511 = vadd.f32 %v1509, %v1510
    %1513 = vrot.lane.b32.xlu0 %v1511, 96
    %v1514 = vpop.permute.xlu0 %1513
    %v1515 = vsel %vm283, %v1514, 0
    %1517 = vmatprep.subr.mxu0 0.0
    %1518 = vmatpush1.msra.mxu0 0.0
    %1519 = vmatprep.subr.mxu0 0.0
    %1520 = vmatpush1.msra.mxu0 0.0
    %1521 = vmatprep.subr.mxu0 0.0
    %1522 = vmatpush1.msra.mxu0 0.0
    %1523 = vmatprep.subr.mxu0 0.0
    %1524 = vmatpush1.msra.mxu0 0.0
    %1525 = vmatprep.subr.mxu0 0.0
    %1526 = vmatpush1.msra.mxu0 0.0
    %1527 = vmatprep.subr.mxu0 0.0
    %1528 = vmatpush1.msra.mxu0 0.0
    %1529 = vmatprep.subr.mxu0 0.0
    %1530 = vmatpush1.msra.mxu0 0.0
    %1531 = vmatprep.subr.mxu0 0.0
    %1532 = vmatpush1.msra.mxu0 0.0
    %1533 = vmatprep.subr.mxu0 0.0
    %1534 = vmatpush1.msra.mxu0 0.0
    %1535 = vmatprep.subr.mxu0 0.0
    %1536 = vmatpush1.msra.mxu0 0.0
    %1537 = vmatprep.subr.mxu0 0.0
    %1538 = vmatpush1.msra.mxu0 0.0
    %1539 = vmatprep.subr.mxu0 0.0
    %1540 = vmatpush1.msra.mxu0 0.0
    %1541 = vmatprep.subr.mxu0 0.0
    %1542 = vmatpush1.msra.mxu0 %v396
    %1543 = vmatprep.subr.mxu0 0.0
    %1544 = vmatpush1.msra.mxu0 %v395
    %1545 = vmatprep.subr.mxu0 0.0
    %1546 = vmatpush1.msra.mxu0 %v394
    %1547 = vmatprep.subr.mxu0 0.0
    %1548 = vmatpush1.msra.mxu0 %v393
    %1549 = vmatprep.subr.mxu0 0.0
    %1550 = vmatpush2.msra.mxu0 0.0
    %1551 = vmatprep.subr.mxu0 0.0
    %1552 = vmatpush2.msra.mxu0 0.0
    %1553 = vmatprep.subr.mxu0 0.0
    %1554 = vmatpush2.msra.mxu0 0.0
    %1555 = vmatprep.subr.mxu0 0.0
    %1556 = vmatpush2.msra.mxu0 0.0
    %1557 = vmatprep.subr.mxu0 0.0
    %1558 = vmatpush2.msra.mxu0 0.0
    %1559 = vmatprep.subr.mxu0 0.0
    %1560 = vmatpush2.msra.mxu0 0.0
    %1561 = vmatprep.subr.mxu0 0.0
    %1562 = vmatpush2.msra.mxu0 0.0
    %1563 = vmatprep.subr.mxu0 0.0
    %1564 = vmatpush2.msra.mxu0 0.0
    %1565 = vmatprep.subr.mxu0 0.0
    %1566 = vmatpush2.msra.mxu0 0.0
    %1567 = vmatprep.subr.mxu0 0.0
    %1568 = vmatpush2.msra.mxu0 0.0
    %1569 = vmatprep.subr.mxu0 0.0
    %1570 = vmatpush2.msra.mxu0 0.0
    %1571 = vmatprep.subr.mxu0 0.0
    %1572 = vmatpush2.msra.mxu0 0.0
    %1573 = vmatprep.subr.mxu0 0.0
    %1574 = vmatpush2.msra.mxu0 0.0
    %1575 = vmatprep.subr.mxu0 0.0
    %1576 = vmatpush2.msra.mxu0 0.0
    %1577 = vmatprep.subr.mxu0 0.0
    %1578 = vmatpush2.msra.mxu0 0.0
    %1579 = vmatprep.subr.mxu0 0.0
    %1580 = vmatpush2.msra.mxu0 0.0
    %1581 = vmatprep.mubr.f32.mxu0 0.0
    %1582 = vmatmul.mubr.f32.gmra.mxu0 %v1515
    %v1583 = vpop.f32.mrf.mxu0
    %v1584 = vadd.f32 %v402, %v1583
    %v1585 = vpop.f32.mrf.mxu0
    %1586 = vdwg.mxu0
    %1588 = vrot.lane.b32.xlu0 %v1413, 96
    %v1589 = vpop.permute.xlu0 %1588
    %v1590 = vsel %vm283, %v1589, 0
    %1592 = vmatprep.subr.mxu0 0.0
    %1593 = vmatpush1.msra.mxu0 0.0
    %1594 = vmatprep.subr.mxu0 0.0
    %1595 = vmatpush1.msra.mxu0 0.0
    %1596 = vmatprep.subr.mxu0 0.0
    %1597 = vmatpush1.msra.mxu0 0.0
    %1598 = vmatprep.subr.mxu0 0.0
    %1599 = vmatpush1.msra.mxu0 0.0
    %1600 = vmatprep.subr.mxu0 0.0
    %1601 = vmatpush1.msra.mxu0 0.0
    %1602 = vmatprep.subr.mxu0 0.0
    %1603 = vmatpush1.msra.mxu0 0.0
    %1604 = vmatprep.subr.mxu0 0.0
    %1605 = vmatpush1.msra.mxu0 0.0
    %1606 = vmatprep.subr.mxu0 0.0
    %1607 = vmatpush1.msra.mxu0 0.0
    %1608 = vmatprep.subr.mxu0 0.0
    %1609 = vmatpush1.msra.mxu0 0.0
    %1610 = vmatprep.subr.mxu0 0.0
    %1611 = vmatpush1.msra.mxu0 0.0
    %1612 = vmatprep.subr.mxu0 0.0
    %1613 = vmatpush1.msra.mxu0 0.0
    %1614 = vmatprep.subr.mxu0 0.0
    %1615 = vmatpush1.msra.mxu0 0.0
    %1616 = vmatprep.subr.mxu0 0.0
    %1617 = vmatpush1.msra.mxu0 %v482
    %1618 = vmatprep.subr.mxu0 0.0
    %1619 = vmatpush1.msra.mxu0 %v481
    %1620 = vmatprep.subr.mxu0 0.0
    %1621 = vmatpush1.msra.mxu0 %v480
    %1622 = vmatprep.subr.mxu0 0.0
    %1623 = vmatpush1.msra.mxu0 %v479
    %1624 = vmatprep.subr.mxu0 0.0
    %1625 = vmatpush2.msra.mxu0 0.0
    %1626 = vmatprep.subr.mxu0 0.0
    %1627 = vmatpush2.msra.mxu0 0.0
    %1628 = vmatprep.subr.mxu0 0.0
    %1629 = vmatpush2.msra.mxu0 0.0
    %1630 = vmatprep.subr.mxu0 0.0
    %1631 = vmatpush2.msra.mxu0 0.0
    %1632 = vmatprep.subr.mxu0 0.0
    %1633 = vmatpush2.msra.mxu0 0.0
    %1634 = vmatprep.subr.mxu0 0.0
    %1635 = vmatpush2.msra.mxu0 0.0
    %1636 = vmatprep.subr.mxu0 0.0
    %1637 = vmatpush2.msra.mxu0 0.0
    %1638 = vmatprep.subr.mxu0 0.0
    %1639 = vmatpush2.msra.mxu0 0.0
    %1640 = vmatprep.subr.mxu0 0.0
    %1641 = vmatpush2.msra.mxu0 0.0
    %1642 = vmatprep.subr.mxu0 0.0
    %1643 = vmatpush2.msra.mxu0 0.0
    %1644 = vmatprep.subr.mxu0 0.0
    %1645 = vmatpush2.msra.mxu0 0.0
    %1646 = vmatprep.subr.mxu0 0.0
    %1647 = vmatpush2.msra.mxu0 0.0
    %1648 = vmatprep.subr.mxu0 0.0
    %1649 = vmatpush2.msra.mxu0 0.0
    %1650 = vmatprep.subr.mxu0 0.0
    %1651 = vmatpush2.msra.mxu0 0.0
    %1652 = vmatprep.subr.mxu0 0.0
    %1653 = vmatpush2.msra.mxu0 0.0
    %1654 = vmatprep.subr.mxu0 0.0
    %1655 = vmatpush2.msra.mxu0 0.0
    %1656 = vmatprep.mubr.f32.mxu0 0.0
    %1657 = vmatmul.mubr.f32.gmra.mxu0 %v1590
    %v1658 = vpop.f32.mrf.mxu0
    %v1659 = vadd.f32 0.0, %v1658
    %v1660 = vpop.f32.mrf.mxu0
    %1661 = vdwg.mxu0
    %v1662 = vadd.f32 %v1584, %v1659
    %v1663 = vxor.u32 %v1662, 2147483648
    %v1664 = vmul.f32 %v1663, 1.442695
    %v1665 = vpow.pop %v1664
    %v1666 = vadd.f32 %v1665, 1.0
    %v1667 = vrcp.pop %v1666
    %v1668 = vmul.f32 1.0, %v1667
    %v1669 = vadd.f32 %v1659, %v567
    %1671 = vrot.lane.b32.xlu0 %v1669, 64
    %v1672 = vpop.permute.xlu0 %1671
    %v1674 = vmul.f32 %v1668, %v1672
    %1676 = vrot.lane.b32.xlu0 %v1674, 64
    %v1677 = vpop.permute.xlu0 %1676
    %v1679 = vadd.f32 %v1584, %v1677
    %v1680 = vtanh.pop %v1679
    %v1681 = vsub.f32 1.0, %v1668
    %1683 = vrot.lane.b32.xlu0 %v1680, 96
    %v1684 = vpop.permute.xlu0 %1683
    %v1686 = vmul.f32 %v1681, %v1684
    %v1687 = vmul.f32 %v1668, %v1413
    %v1688 = vadd.f32 %v1686, %v1687
    %v1689 = vld [vmem:[#allocation2 + $0xa] sm:$0x3]
    %1690 = vmatprep.subr.mxu0 0.0
    %1691 = vmatpush1.msra.mxu0 0.0
    %1692 = vmatprep.subr.mxu0 0.0
    %1693 = vmatpush1.msra.mxu0 0.0
    %1694 = vmatprep.subr.mxu0 0.0
    %1695 = vmatpush1.msra.mxu0 0.0
    %1696 = vmatprep.subr.mxu0 0.0
    %1697 = vmatpush1.msra.mxu0 0.0
    %1698 = vmatprep.subr.mxu0 0.0
    %1699 = vmatpush1.msra.mxu0 0.0
    %1700 = vmatprep.subr.mxu0 0.0
    %1701 = vmatpush1.msra.mxu0 0.0
    %1702 = vmatprep.subr.mxu0 0.0
    %1703 = vmatpush1.msra.mxu0 0.0
    %1704 = vmatprep.subr.mxu0 0.0
    %1705 = vmatpush1.msra.mxu0 0.0
    %1706 = vmatprep.subr.mxu0 0.0
    %1707 = vmatpush1.msra.mxu0 0.0
    %1708 = vmatprep.subr.mxu0 0.0
    %1709 = vmatpush1.msra.mxu0 0.0
    %1710 = vmatprep.subr.mxu0 0.0
    %1711 = vmatpush1.msra.mxu0 0.0
    %1712 = vmatprep.subr.mxu0 0.0
    %1713 = vmatpush1.msra.mxu0 0.0
    %1714 = vmatprep.subr.mxu0 0.0
    %1715 = vmatpush1.msra.mxu0 %v282
    %1716 = vmatprep.subr.mxu0 0.0
    %1717 = vmatpush1.msra.mxu0 %v281
    %1718 = vmatprep.subr.mxu0 0.0
    %1719 = vmatpush1.msra.mxu0 %v280
    %1720 = vmatprep.subr.mxu0 0.0
    %1721 = vmatpush1.msra.mxu0 %v279
    %1722 = vmatprep.subr.mxu0 0.0
    %1723 = vmatpush2.msra.mxu0 0.0
    %1724 = vmatprep.subr.mxu0 0.0
    %1725 = vmatpush2.msra.mxu0 0.0
    %1726 = vmatprep.subr.mxu0 0.0
    %1727 = vmatpush2.msra.mxu0 0.0
    %1728 = vmatprep.subr.mxu0 0.0
    %1729 = vmatpush2.msra.mxu0 0.0
    %1730 = vmatprep.subr.mxu0 0.0
    %1731 = vmatpush2.msra.mxu0 0.0
    %1732 = vmatprep.subr.mxu0 0.0
    %1733 = vmatpush2.msra.mxu0 0.0
    %1734 = vmatprep.subr.mxu0 0.0
    %1735 = vmatpush2.msra.mxu0 0.0
    %1736 = vmatprep.subr.mxu0 0.0
    %1737 = vmatpush2.msra.mxu0 0.0
    %1738 = vmatprep.subr.mxu0 0.0
    %1739 = vmatpush2.msra.mxu0 0.0
    %1740 = vmatprep.subr.mxu0 0.0
    %1741 = vmatpush2.msra.mxu0 0.0
    %1742 = vmatprep.subr.mxu0 0.0
    %1743 = vmatpush2.msra.mxu0 0.0
    %1744 = vmatprep.subr.mxu0 0.0
    %1745 = vmatpush2.msra.mxu0 0.0
    %1746 = vmatprep.subr.mxu0 0.0
    %1747 = vmatpush2.msra.mxu0 0.0
    %1748 = vmatprep.subr.mxu0 0.0
    %1749 = vmatpush2.msra.mxu0 0.0
    %1750 = vmatprep.subr.mxu0 0.0
    %1751 = vmatpush2.msra.mxu0 0.0
    %1752 = vmatprep.subr.mxu0 0.0
    %1753 = vmatpush2.msra.mxu0 0.0
    %1754 = vmatprep.mubr.f32.mxu0 0.0
    %1755 = vmatmul.mubr.f32.gmra.mxu0 %v1515
    %v1756 = vpop.f32.mrf.mxu0
    %v1757 = vadd.f32 0.0, %v1756
    %v1758 = vpop.f32.mrf.mxu0
    %1759 = vdwg.mxu0
    %v1760 = vadd.f32 %v1689, %v1757
    %v1761 = vxor.u32 %v1760, 2147483648
    %v1762 = vmul.f32 %v1761, 1.442695
    %v1763 = vpow.pop %v1762
    %v1764 = vadd.f32 %v1763, 1.0
    %v1765 = vrcp.pop %v1764
    %v1766 = vmul.f32 1.0, %v1765
    %v1767 = vadd.f32 %v1757, %v371
    %1769 = vrot.lane.b32.xlu0 %v1767, 64
    %v1770 = vpop.permute.xlu0 %1769
    %v1772 = vmul.f32 %v1766, %v1770
    %1774 = vrot.lane.b32.xlu0 %v1772, 64
    %v1775 = vpop.permute.xlu0 %1774
    %v1777 = vadd.f32 %v1689, %v1775
    %v1778 = vtanh.pop %v1777
    %v1779 = vsub.f32 1.0, %v1766
    %1781 = vrot.lane.b32.xlu0 %v1778, 96
    %v1782 = vpop.permute.xlu0 %1781
    %v1784 = vmul.f32 %v1779, %v1782
    %v1785 = vmul.f32 %v1766, %v1511
    %v1786 = vadd.f32 %v1784, %v1785
    %1788 = vrot.lane.b32.xlu0 %v1786, 96
    %v1789 = vpop.permute.xlu0 %1788
    %v1790 = vsel %vm283, %v1789, 0
    %1792 = vmatprep.subr.mxu0 0.0
    %1793 = vmatpush1.msra.mxu0 0.0
    %1794 = vmatprep.subr.mxu0 0.0
    %1795 = vmatpush1.msra.mxu0 0.0
    %1796 = vmatprep.subr.mxu0 0.0
    %1797 = vmatpush1.msra.mxu0 0.0
    %1798 = vmatprep.subr.mxu0 0.0
    %1799 = vmatpush1.msra.mxu0 0.0
    %1800 = vmatprep.subr.mxu0 0.0
    %1801 = vmatpush1.msra.mxu0 0.0
    %1802 = vmatprep.subr.mxu0 0.0
    %1803 = vmatpush1.msra.mxu0 0.0
    %1804 = vmatprep.subr.mxu0 0.0
    %1805 = vmatpush1.msra.mxu0 0.0
    %1806 = vmatprep.subr.mxu0 0.0
    %1807 = vmatpush1.msra.mxu0 0.0
    %1808 = vmatprep.subr.mxu0 0.0
    %1809 = vmatpush1.msra.mxu0 0.0
    %1810 = vmatprep.subr.mxu0 0.0
    %1811 = vmatpush1.msra.mxu0 0.0
    %1812 = vmatprep.subr.mxu0 0.0
    %1813 = vmatpush1.msra.mxu0 0.0
    %1814 = vmatprep.subr.mxu0 0.0
    %1815 = vmatpush1.msra.mxu0 0.0
    %1816 = vmatprep.subr.mxu0 0.0
    %1817 = vmatpush1.msra.mxu0 %v396
    %1818 = vmatprep.subr.mxu0 0.0
    %1819 = vmatpush1.msra.mxu0 %v395
    %1820 = vmatprep.subr.mxu0 0.0
    %1821 = vmatpush1.msra.mxu0 %v394
    %1822 = vmatprep.subr.mxu0 0.0
    %1823 = vmatpush1.msra.mxu0 %v393
    %1824 = vmatprep.subr.mxu0 0.0
    %1825 = vmatpush2.msra.mxu0 0.0
    %1826 = vmatprep.subr.mxu0 0.0
    %1827 = vmatpush2.msra.mxu0 0.0
    %1828 = vmatprep.subr.mxu0 0.0
    %1829 = vmatpush2.msra.mxu0 0.0
    %1830 = vmatprep.subr.mxu0 0.0
    %1831 = vmatpush2.msra.mxu0 0.0
    %1832 = vmatprep.subr.mxu0 0.0
    %1833 = vmatpush2.msra.mxu0 0.0
    %1834 = vmatprep.subr.mxu0 0.0
    %1835 = vmatpush2.msra.mxu0 0.0
    %1836 = vmatprep.subr.mxu0 0.0
    %1837 = vmatpush2.msra.mxu0 0.0
    %1838 = vmatprep.subr.mxu0 0.0
    %1839 = vmatpush2.msra.mxu0 0.0
    %1840 = vmatprep.subr.mxu0 0.0
    %1841 = vmatpush2.msra.mxu0 0.0
    %1842 = vmatprep.subr.mxu0 0.0
    %1843 = vmatpush2.msra.mxu0 0.0
    %1844 = vmatprep.subr.mxu0 0.0
    %1845 = vmatpush2.msra.mxu0 0.0
    %1846 = vmatprep.subr.mxu0 0.0
    %1847 = vmatpush2.msra.mxu0 0.0
    %1848 = vmatprep.subr.mxu0 0.0
    %1849 = vmatpush2.msra.mxu0 0.0
    %1850 = vmatprep.subr.mxu0 0.0
    %1851 = vmatpush2.msra.mxu0 0.0
    %1852 = vmatprep.subr.mxu0 0.0
    %1853 = vmatpush2.msra.mxu0 0.0
    %1854 = vmatprep.subr.mxu0 0.0
    %1855 = vmatpush2.msra.mxu0 0.0
    %1856 = vmatprep.mubr.f32.mxu0 0.0
    %1857 = vmatmul.mubr.f32.gmra.mxu0 %v1790
    %v1858 = vpop.f32.mrf.mxu0
    %v1859 = vadd.f32 %v402, %v1858
    %v1860 = vpop.f32.mrf.mxu0
    %1861 = vdwg.mxu0
    %1863 = vrot.lane.b32.xlu0 %v1688, 96
    %v1864 = vpop.permute.xlu0 %1863
    %v1865 = vsel %vm283, %v1864, 0
    %1867 = vmatprep.subr.mxu0 0.0
    %1868 = vmatpush1.msra.mxu0 0.0
    %1869 = vmatprep.subr.mxu0 0.0
    %1870 = vmatpush1.msra.mxu0 0.0
    %1871 = vmatprep.subr.mxu0 0.0
    %1872 = vmatpush1.msra.mxu0 0.0
    %1873 = vmatprep.subr.mxu0 0.0
    %1874 = vmatpush1.msra.mxu0 0.0
    %1875 = vmatprep.subr.mxu0 0.0
    %1876 = vmatpush1.msra.mxu0 0.0
    %1877 = vmatprep.subr.mxu0 0.0
    %1878 = vmatpush1.msra.mxu0 0.0
    %1879 = vmatprep.subr.mxu0 0.0
    %1880 = vmatpush1.msra.mxu0 0.0
    %1881 = vmatprep.subr.mxu0 0.0
    %1882 = vmatpush1.msra.mxu0 0.0
    %1883 = vmatprep.subr.mxu0 0.0
    %1884 = vmatpush1.msra.mxu0 0.0
    %1885 = vmatprep.subr.mxu0 0.0
    %1886 = vmatpush1.msra.mxu0 0.0
    %1887 = vmatprep.subr.mxu0 0.0
    %1888 = vmatpush1.msra.mxu0 0.0
    %1889 = vmatprep.subr.mxu0 0.0
    %1890 = vmatpush1.msra.mxu0 0.0
    %1891 = vmatprep.subr.mxu0 0.0
    %1892 = vmatpush1.msra.mxu0 %v482
    %1893 = vmatprep.subr.mxu0 0.0
    %1894 = vmatpush1.msra.mxu0 %v481
    %1895 = vmatprep.subr.mxu0 0.0
    %1896 = vmatpush1.msra.mxu0 %v480
    %1897 = vmatprep.subr.mxu0 0.0
    %1898 = vmatpush1.msra.mxu0 %v479
    %1899 = vmatprep.subr.mxu0 0.0
    %1900 = vmatpush2.msra.mxu0 0.0
    %1901 = vmatprep.subr.mxu0 0.0
    %1902 = vmatpush2.msra.mxu0 0.0
    %1903 = vmatprep.subr.mxu0 0.0
    %1904 = vmatpush2.msra.mxu0 0.0
    %1905 = vmatprep.subr.mxu0 0.0
    %1906 = vmatpush2.msra.mxu0 0.0
    %1907 = vmatprep.subr.mxu0 0.0
    %1908 = vmatpush2.msra.mxu0 0.0
    %1909 = vmatprep.subr.mxu0 0.0
    %1910 = vmatpush2.msra.mxu0 0.0
    %1911 = vmatprep.subr.mxu0 0.0
    %1912 = vmatpush2.msra.mxu0 0.0
    %1913 = vmatprep.subr.mxu0 0.0
    %1914 = vmatpush2.msra.mxu0 0.0
    %1915 = vmatprep.subr.mxu0 0.0
    %1916 = vmatpush2.msra.mxu0 0.0
    %1917 = vmatprep.subr.mxu0 0.0
    %1918 = vmatpush2.msra.mxu0 0.0
    %1919 = vmatprep.subr.mxu0 0.0
    %1920 = vmatpush2.msra.mxu0 0.0
    %1921 = vmatprep.subr.mxu0 0.0
    %1922 = vmatpush2.msra.mxu0 0.0
    %1923 = vmatprep.subr.mxu0 0.0
    %1924 = vmatpush2.msra.mxu0 0.0
    %1925 = vmatprep.subr.mxu0 0.0
    %1926 = vmatpush2.msra.mxu0 0.0
    %1927 = vmatprep.subr.mxu0 0.0
    %1928 = vmatpush2.msra.mxu0 0.0
    %1929 = vmatprep.subr.mxu0 0.0
    %1930 = vmatpush2.msra.mxu0 0.0
    %1931 = vmatprep.mubr.f32.mxu0 0.0
    %1932 = vmatmul.mubr.f32.gmra.mxu0 %v1865
    %v1933 = vpop.f32.mrf.mxu0
    %v1934 = vadd.f32 0.0, %v1933
    %v1935 = vpop.f32.mrf.mxu0
    %1936 = vdwg.mxu0
    %v1937 = vadd.f32 %v1859, %v1934
    %v1938 = vxor.u32 %v1937, 2147483648
    %v1939 = vmul.f32 %v1938, 1.442695
    %v1940 = vpow.pop %v1939
    %v1941 = vadd.f32 %v1940, 1.0
    %v1942 = vrcp.pop %v1941
    %v1943 = vmul.f32 1.0, %v1942
    %v1944 = vadd.f32 %v1934, %v567
    %1946 = vrot.lane.b32.xlu0 %v1944, 64
    %v1947 = vpop.permute.xlu0 %1946
    %v1949 = vmul.f32 %v1943, %v1947
    %1951 = vrot.lane.b32.xlu0 %v1949, 64
    %v1952 = vpop.permute.xlu0 %1951
    %v1954 = vadd.f32 %v1859, %v1952
    %v1955 = vtanh.pop %v1954
    %v1956 = vsub.f32 1.0, %v1943
    %1958 = vrot.lane.b32.xlu0 %v1955, 96
    %v1959 = vpop.permute.xlu0 %1958
    %v1961 = vmul.f32 %v1956, %v1959
    %v1962 = vmul.f32 %v1943, %v1688
    %v1963 = vadd.f32 %v1961, %v1962
    %v1964 = vld [vmem:[#allocation2 + $0xc] sm:$0x3]
    %1965 = vmatprep.subr.mxu0 0.0
    %1966 = vmatpush1.msra.mxu0 0.0
    %1967 = vmatprep.subr.mxu0 0.0
    %1968 = vmatpush1.msra.mxu0 0.0
    %1969 = vmatprep.subr.mxu0 0.0
    %1970 = vmatpush1.msra.mxu0 0.0
    %1971 = vmatprep.subr.mxu0 0.0
    %1972 = vmatpush1.msra.mxu0 0.0
    %1973 = vmatprep.subr.mxu0 0.0
    %1974 = vmatpush1.msra.mxu0 0.0
    %1975 = vmatprep.subr.mxu0 0.0
    %1976 = vmatpush1.msra.mxu0 0.0
    %1977 = vmatprep.subr.mxu0 0.0
    %1978 = vmatpush1.msra.mxu0 0.0
    %1979 = vmatprep.subr.mxu0 0.0
    %1980 = vmatpush1.msra.mxu0 0.0
    %1981 = vmatprep.subr.mxu0 0.0
    %1982 = vmatpush1.msra.mxu0 0.0
    %1983 = vmatprep.subr.mxu0 0.0
    %1984 = vmatpush1.msra.mxu0 0.0
    %1985 = vmatprep.subr.mxu0 0.0
    %1986 = vmatpush1.msra.mxu0 0.0
    %1987 = vmatprep.subr.mxu0 0.0
    %1988 = vmatpush1.msra.mxu0 0.0
    %1989 = vmatprep.subr.mxu0 0.0
    %1990 = vmatpush1.msra.mxu0 %v282
    %1991 = vmatprep.subr.mxu0 0.0
    %1992 = vmatpush1.msra.mxu0 %v281
    %1993 = vmatprep.subr.mxu0 0.0
    %1994 = vmatpush1.msra.mxu0 %v280
    %1995 = vmatprep.subr.mxu0 0.0
    %1996 = vmatpush1.msra.mxu0 %v279
    %1997 = vmatprep.subr.mxu0 0.0
    %1998 = vmatpush2.msra.mxu0 0.0
    %1999 = vmatprep.subr.mxu0 0.0
    %2000 = vmatpush2.msra.mxu0 0.0
    %2001 = vmatprep.subr.mxu0 0.0
    %2002 = vmatpush2.msra.mxu0 0.0
    %2003 = vmatprep.subr.mxu0 0.0
    %2004 = vmatpush2.msra.mxu0 0.0
    %2005 = vmatprep.subr.mxu0 0.0
    %2006 = vmatpush2.msra.mxu0 0.0
    %2007 = vmatprep.subr.mxu0 0.0
    %2008 = vmatpush2.msra.mxu0 0.0
    %2009 = vmatprep.subr.mxu0 0.0
    %2010 = vmatpush2.msra.mxu0 0.0
    %2011 = vmatprep.subr.mxu0 0.0
    %2012 = vmatpush2.msra.mxu0 0.0
    %2013 = vmatprep.subr.mxu0 0.0
    %2014 = vmatpush2.msra.mxu0 0.0
    %2015 = vmatprep.subr.mxu0 0.0
    %2016 = vmatpush2.msra.mxu0 0.0
    %2017 = vmatprep.subr.mxu0 0.0
    %2018 = vmatpush2.msra.mxu0 0.0
    %2019 = vmatprep.subr.mxu0 0.0
    %2020 = vmatpush2.msra.mxu0 0.0
    %2021 = vmatprep.subr.mxu0 0.0
    %2022 = vmatpush2.msra.mxu0 0.0
    %2023 = vmatprep.subr.mxu0 0.0
    %2024 = vmatpush2.msra.mxu0 0.0
    %2025 = vmatprep.subr.mxu0 0.0
    %2026 = vmatpush2.msra.mxu0 0.0
    %2027 = vmatprep.subr.mxu0 0.0
    %2028 = vmatpush2.msra.mxu0 0.0
    %2029 = vmatprep.mubr.f32.mxu0 0.0
    %2030 = vmatmul.mubr.f32.gmra.mxu0 %v1790
    %v2031 = vpop.f32.mrf.mxu0
    %v2032 = vadd.f32 0.0, %v2031
    %v2033 = vpop.f32.mrf.mxu0
    %2034 = vdwg.mxu0
    %v2035 = vadd.f32 %v1964, %v2032
    %v2036 = vxor.u32 %v2035, 2147483648
    %v2037 = vmul.f32 %v2036, 1.442695
    %v2038 = vpow.pop %v2037
    %v2039 = vadd.f32 %v2038, 1.0
    %v2040 = vrcp.pop %v2039
    %v2041 = vmul.f32 1.0, %v2040
    %v2042 = vadd.f32 %v2032, %v371
    %2044 = vrot.lane.b32.xlu0 %v2042, 64
    %v2045 = vpop.permute.xlu0 %2044
    %v2047 = vmul.f32 %v2041, %v2045
    %2049 = vrot.lane.b32.xlu0 %v2047, 64
    %v2050 = vpop.permute.xlu0 %2049
    %v2052 = vadd.f32 %v1964, %v2050
    %v2053 = vtanh.pop %v2052
    %v2054 = vsub.f32 1.0, %v2041
    %2056 = vrot.lane.b32.xlu0 %v2053, 96
    %v2057 = vpop.permute.xlu0 %2056
    %v2059 = vmul.f32 %v2054, %v2057
    %v2060 = vmul.f32 %v2041, %v1786
    %v2061 = vadd.f32 %v2059, %v2060
    %2063 = vrot.lane.b32.xlu0 %v2061, 96
    %v2064 = vpop.permute.xlu0 %2063
    %v2065 = vsel %vm283, %v2064, 0
    %2067 = vmatprep.subr.mxu0 0.0
    %2068 = vmatpush1.msra.mxu0 0.0
    %2069 = vmatprep.subr.mxu0 0.0
    %2070 = vmatpush1.msra.mxu0 0.0
    %2071 = vmatprep.subr.mxu0 0.0
    %2072 = vmatpush1.msra.mxu0 0.0
    %2073 = vmatprep.subr.mxu0 0.0
    %2074 = vmatpush1.msra.mxu0 0.0
    %2075 = vmatprep.subr.mxu0 0.0
    %2076 = vmatpush1.msra.mxu0 0.0
    %2077 = vmatprep.subr.mxu0 0.0
    %2078 = vmatpush1.msra.mxu0 0.0
    %2079 = vmatprep.subr.mxu0 0.0
    %2080 = vmatpush1.msra.mxu0 0.0
    %2081 = vmatprep.subr.mxu0 0.0
    %2082 = vmatpush1.msra.mxu0 0.0
    %2083 = vmatprep.subr.mxu0 0.0
    %2084 = vmatpush1.msra.mxu0 0.0
    %2085 = vmatprep.subr.mxu0 0.0
    %2086 = vmatpush1.msra.mxu0 0.0
    %2087 = vmatprep.subr.mxu0 0.0
    %2088 = vmatpush1.msra.mxu0 0.0
    %2089 = vmatprep.subr.mxu0 0.0
    %2090 = vmatpush1.msra.mxu0 0.0
    %2091 = vmatprep.subr.mxu0 0.0
    %2092 = vmatpush1.msra.mxu0 %v396
    %2093 = vmatprep.subr.mxu0 0.0
    %2094 = vmatpush1.msra.mxu0 %v395
    %2095 = vmatprep.subr.mxu0 0.0
    %2096 = vmatpush1.msra.mxu0 %v394
    %2097 = vmatprep.subr.mxu0 0.0
    %2098 = vmatpush1.msra.mxu0 %v393
    %2099 = vmatprep.subr.mxu0 0.0
    %2100 = vmatpush2.msra.mxu0 0.0
    %2101 = vmatprep.subr.mxu0 0.0
    %2102 = vmatpush2.msra.mxu0 0.0
    %2103 = vmatprep.subr.mxu0 0.0
    %2104 = vmatpush2.msra.mxu0 0.0
    %2105 = vmatprep.subr.mxu0 0.0
    %2106 = vmatpush2.msra.mxu0 0.0
    %2107 = vmatprep.subr.mxu0 0.0
    %2108 = vmatpush2.msra.mxu0 0.0
    %2109 = vmatprep.subr.mxu0 0.0
    %2110 = vmatpush2.msra.mxu0 0.0
    %2111 = vmatprep.subr.mxu0 0.0
    %2112 = vmatpush2.msra.mxu0 0.0
    %2113 = vmatprep.subr.mxu0 0.0
    %2114 = vmatpush2.msra.mxu0 0.0
    %2115 = vmatprep.subr.mxu0 0.0
    %2116 = vmatpush2.msra.mxu0 0.0
    %2117 = vmatprep.subr.mxu0 0.0
    %2118 = vmatpush2.msra.mxu0 0.0
    %2119 = vmatprep.subr.mxu0 0.0
    %2120 = vmatpush2.msra.mxu0 0.0
    %2121 = vmatprep.subr.mxu0 0.0
    %2122 = vmatpush2.msra.mxu0 0.0
    %2123 = vmatprep.subr.mxu0 0.0
    %2124 = vmatpush2.msra.mxu0 0.0
    %2125 = vmatprep.subr.mxu0 0.0
    %2126 = vmatpush2.msra.mxu0 0.0
    %2127 = vmatprep.subr.mxu0 0.0
    %2128 = vmatpush2.msra.mxu0 0.0
    %2129 = vmatprep.subr.mxu0 0.0
    %2130 = vmatpush2.msra.mxu0 0.0
    %2131 = vmatprep.mubr.f32.mxu0 0.0
    %2132 = vmatmul.mubr.f32.gmra.mxu0 %v2065
    %v2133 = vpop.f32.mrf.mxu0
    %v2134 = vadd.f32 %v402, %v2133
    %v2135 = vpop.f32.mrf.mxu0
    %2136 = vdwg.mxu0
    %2138 = vrot.lane.b32.xlu0 %v1963, 96
    %v2139 = vpop.permute.xlu0 %2138
    %v2140 = vsel %vm283, %v2139, 0
    %2142 = vmatprep.subr.mxu0 0.0
    %2143 = vmatpush1.msra.mxu0 0.0
    %2144 = vmatprep.subr.mxu0 0.0
    %2145 = vmatpush1.msra.mxu0 0.0
    %2146 = vmatprep.subr.mxu0 0.0
    %2147 = vmatpush1.msra.mxu0 0.0
    %2148 = vmatprep.subr.mxu0 0.0
    %2149 = vmatpush1.msra.mxu0 0.0
    %2150 = vmatprep.subr.mxu0 0.0
    %2151 = vmatpush1.msra.mxu0 0.0
    %2152 = vmatprep.subr.mxu0 0.0
    %2153 = vmatpush1.msra.mxu0 0.0
    %2154 = vmatprep.subr.mxu0 0.0
    %2155 = vmatpush1.msra.mxu0 0.0
    %2156 = vmatprep.subr.mxu0 0.0
    %2157 = vmatpush1.msra.mxu0 0.0
    %2158 = vmatprep.subr.mxu0 0.0
    %2159 = vmatpush1.msra.mxu0 0.0
    %2160 = vmatprep.subr.mxu0 0.0
    %2161 = vmatpush1.msra.mxu0 0.0
    %2162 = vmatprep.subr.mxu0 0.0
    %2163 = vmatpush1.msra.mxu0 0.0
    %2164 = vmatprep.subr.mxu0 0.0
    %2165 = vmatpush1.msra.mxu0 0.0
    %2166 = vmatprep.subr.mxu0 0.0
    %2167 = vmatpush1.msra.mxu0 %v482
    %2168 = vmatprep.subr.mxu0 0.0
    %2169 = vmatpush1.msra.mxu0 %v481
    %2170 = vmatprep.subr.mxu0 0.0
    %2171 = vmatpush1.msra.mxu0 %v480
    %2172 = vmatprep.subr.mxu0 0.0
    %2173 = vmatpush1.msra.mxu0 %v479
    %2174 = vmatprep.subr.mxu0 0.0
    %2175 = vmatpush2.msra.mxu0 0.0
    %2176 = vmatprep.subr.mxu0 0.0
    %2177 = vmatpush2.msra.mxu0 0.0
    %2178 = vmatprep.subr.mxu0 0.0
    %2179 = vmatpush2.msra.mxu0 0.0
    %2180 = vmatprep.subr.mxu0 0.0
    %2181 = vmatpush2.msra.mxu0 0.0
    %2182 = vmatprep.subr.mxu0 0.0
    %2183 = vmatpush2.msra.mxu0 0.0
    %2184 = vmatprep.subr.mxu0 0.0
    %2185 = vmatpush2.msra.mxu0 0.0
    %2186 = vmatprep.subr.mxu0 0.0
    %2187 = vmatpush2.msra.mxu0 0.0
    %2188 = vmatprep.subr.mxu0 0.0
    %2189 = vmatpush2.msra.mxu0 0.0
    %2190 = vmatprep.subr.mxu0 0.0
    %2191 = vmatpush2.msra.mxu0 0.0
    %2192 = vmatprep.subr.mxu0 0.0
    %2193 = vmatpush2.msra.mxu0 0.0
    %2194 = vmatprep.subr.mxu0 0.0
    %2195 = vmatpush2.msra.mxu0 0.0
    %2196 = vmatprep.subr.mxu0 0.0
    %2197 = vmatpush2.msra.mxu0 0.0
    %2198 = vmatprep.subr.mxu0 0.0
    %2199 = vmatpush2.msra.mxu0 0.0
    %2200 = vmatprep.subr.mxu0 0.0
    %2201 = vmatpush2.msra.mxu0 0.0
    %2202 = vmatprep.subr.mxu0 0.0
    %2203 = vmatpush2.msra.mxu0 0.0
    %2204 = vmatprep.subr.mxu0 0.0
    %2205 = vmatpush2.msra.mxu0 0.0
    %2206 = vmatprep.mubr.f32.mxu0 0.0
    %2207 = vmatmul.mubr.f32.gmra.mxu0 %v2140
    %v2208 = vpop.f32.mrf.mxu0
    %v2209 = vadd.f32 0.0, %v2208
    %v2210 = vpop.f32.mrf.mxu0
    %2211 = vdwg.mxu0
    %v2212 = vadd.f32 %v2134, %v2209
    %v2213 = vxor.u32 %v2212, 2147483648
    %v2214 = vmul.f32 %v2213, 1.442695
    %v2215 = vpow.pop %v2214
    %v2216 = vadd.f32 %v2215, 1.0
    %v2217 = vrcp.pop %v2216
    %v2218 = vmul.f32 1.0, %v2217
    %v2219 = vadd.f32 %v2209, %v567
    %2221 = vrot.lane.b32.xlu0 %v2219, 64
    %v2222 = vpop.permute.xlu0 %2221
    %v2224 = vmul.f32 %v2218, %v2222
    %2226 = vrot.lane.b32.xlu0 %v2224, 64
    %v2227 = vpop.permute.xlu0 %2226
    %v2229 = vadd.f32 %v2134, %v2227
    %v2230 = vtanh.pop %v2229
    %v2231 = vsub.f32 1.0, %v2218
    %2233 = vrot.lane.b32.xlu0 %v2230, 96
    %v2234 = vpop.permute.xlu0 %2233
    %v2236 = vmul.f32 %v2231, %v2234
    %v2237 = vmul.f32 %v2218, %v1963
    %v2238 = vadd.f32 %v2236, %v2237
    %v2239 = vld [vmem:[#allocation2 + $0xe] sm:$0x3]
    %2240 = vmatprep.subr.mxu0 0.0
    %2241 = vmatpush1.msra.mxu0 0.0
    %2242 = vmatprep.subr.mxu0 0.0
    %2243 = vmatpush1.msra.mxu0 0.0
    %2244 = vmatprep.subr.mxu0 0.0
    %2245 = vmatpush1.msra.mxu0 0.0
    %2246 = vmatprep.subr.mxu0 0.0
    %2247 = vmatpush1.msra.mxu0 0.0
    %2248 = vmatprep.subr.mxu0 0.0
    %2249 = vmatpush1.msra.mxu0 0.0
    %2250 = vmatprep.subr.mxu0 0.0
    %2251 = vmatpush1.msra.mxu0 0.0
    %2252 = vmatprep.subr.mxu0 0.0
    %2253 = vmatpush1.msra.mxu0 0.0
    %2254 = vmatprep.subr.mxu0 0.0
    %2255 = vmatpush1.msra.mxu0 0.0
    %2256 = vmatprep.subr.mxu0 0.0
    %2257 = vmatpush1.msra.mxu0 0.0
    %2258 = vmatprep.subr.mxu0 0.0
    %2259 = vmatpush1.msra.mxu0 0.0
    %2260 = vmatprep.subr.mxu0 0.0
    %2261 = vmatpush1.msra.mxu0 0.0
    %2262 = vmatprep.subr.mxu0 0.0
    %2263 = vmatpush1.msra.mxu0 0.0
    %2264 = vmatprep.subr.mxu0 0.0
    %2265 = vmatpush1.msra.mxu0 %v282
    %2266 = vmatprep.subr.mxu0 0.0
    %2267 = vmatpush1.msra.mxu0 %v281
    %2268 = vmatprep.subr.mxu0 0.0
    %2269 = vmatpush1.msra.mxu0 %v280
    %2270 = vmatprep.subr.mxu0 0.0
    %2271 = vmatpush1.msra.mxu0 %v279
    %2272 = vmatprep.subr.mxu0 0.0
    %2273 = vmatpush2.msra.mxu0 0.0
    %2274 = vmatprep.subr.mxu0 0.0
    %2275 = vmatpush2.msra.mxu0 0.0
    %2276 = vmatprep.subr.mxu0 0.0
    %2277 = vmatpush2.msra.mxu0 0.0
    %2278 = vmatprep.subr.mxu0 0.0
    %2279 = vmatpush2.msra.mxu0 0.0
    %2280 = vmatprep.subr.mxu0 0.0
    %2281 = vmatpush2.msra.mxu0 0.0
    %2282 = vmatprep.subr.mxu0 0.0
    %2283 = vmatpush2.msra.mxu0 0.0
    %2284 = vmatprep.subr.mxu0 0.0
    %2285 = vmatpush2.msra.mxu0 0.0
    %2286 = vmatprep.subr.mxu0 0.0
    %2287 = vmatpush2.msra.mxu0 0.0
    %2288 = vmatprep.subr.mxu0 0.0
    %2289 = vmatpush2.msra.mxu0 0.0
    %2290 = vmatprep.subr.mxu0 0.0
    %2291 = vmatpush2.msra.mxu0 0.0
    %2292 = vmatprep.subr.mxu0 0.0
    %2293 = vmatpush2.msra.mxu0 0.0
    %2294 = vmatprep.subr.mxu0 0.0
    %2295 = vmatpush2.msra.mxu0 0.0
    %2296 = vmatprep.subr.mxu0 0.0
    %2297 = vmatpush2.msra.mxu0 0.0
    %2298 = vmatprep.subr.mxu0 0.0
    %2299 = vmatpush2.msra.mxu0 0.0
    %2300 = vmatprep.subr.mxu0 0.0
    %2301 = vmatpush2.msra.mxu0 0.0
    %2302 = vmatprep.subr.mxu0 0.0
    %2303 = vmatpush2.msra.mxu0 0.0
    %2304 = vmatprep.mubr.f32.mxu0 0.0
    %2305 = vmatmul.mubr.f32.gmra.mxu0 %v2065
    %v2306 = vpop.f32.mrf.mxu0
    %v2307 = vadd.f32 0.0, %v2306
    %v2308 = vpop.f32.mrf.mxu0
    %2309 = vdwg.mxu0
    %v2310 = vadd.f32 %v2239, %v2307
    %v2311 = vxor.u32 %v2310, 2147483648
    %v2312 = vmul.f32 %v2311, 1.442695
    %v2313 = vpow.pop %v2312
    %v2314 = vadd.f32 %v2313, 1.0
    %v2315 = vrcp.pop %v2314
    %v2316 = vmul.f32 1.0, %v2315
    %v2317 = vadd.f32 %v2307, %v371
    %2319 = vrot.lane.b32.xlu0 %v2317, 64
    %v2320 = vpop.permute.xlu0 %2319
    %v2322 = vmul.f32 %v2316, %v2320
    %2324 = vrot.lane.b32.xlu0 %v2322, 64
    %v2325 = vpop.permute.xlu0 %2324
    %v2327 = vadd.f32 %v2239, %v2325
    %v2328 = vtanh.pop %v2327
    %v2329 = vsub.f32 1.0, %v2316
    %2331 = vrot.lane.b32.xlu0 %v2328, 96
    %v2332 = vpop.permute.xlu0 %2331
    %v2334 = vmul.f32 %v2329, %v2332
    %v2335 = vmul.f32 %v2316, %v2061
    %v2336 = vadd.f32 %v2334, %v2335
    %2338 = vrot.lane.b32.xlu0 %v2336, 96
    %v2339 = vpop.permute.xlu0 %2338
    %v2340 = vsel %vm283, %v2339, 0
    %2342 = vmatprep.subr.mxu0 0.0
    %2343 = vmatpush1.msra.mxu0 0.0
    %2344 = vmatprep.subr.mxu0 0.0
    %2345 = vmatpush1.msra.mxu0 0.0
    %2346 = vmatprep.subr.mxu0 0.0
    %2347 = vmatpush1.msra.mxu0 0.0
    %2348 = vmatprep.subr.mxu0 0.0
    %2349 = vmatpush1.msra.mxu0 0.0
    %2350 = vmatprep.subr.mxu0 0.0
    %2351 = vmatpush1.msra.mxu0 0.0
    %2352 = vmatprep.subr.mxu0 0.0
    %2353 = vmatpush1.msra.mxu0 0.0
    %2354 = vmatprep.subr.mxu0 0.0
    %2355 = vmatpush1.msra.mxu0 0.0
    %2356 = vmatprep.subr.mxu0 0.0
    %2357 = vmatpush1.msra.mxu0 0.0
    %2358 = vmatprep.subr.mxu0 0.0
    %2359 = vmatpush1.msra.mxu0 0.0
    %2360 = vmatprep.subr.mxu0 0.0
    %2361 = vmatpush1.msra.mxu0 0.0
    %2362 = vmatprep.subr.mxu0 0.0
    %2363 = vmatpush1.msra.mxu0 0.0
    %2364 = vmatprep.subr.mxu0 0.0
    %2365 = vmatpush1.msra.mxu0 0.0
    %2366 = vmatprep.subr.mxu0 0.0
    %2367 = vmatpush1.msra.mxu0 %v396
    %2368 = vmatprep.subr.mxu0 0.0
    %2369 = vmatpush1.msra.mxu0 %v395
    %2370 = vmatprep.subr.mxu0 0.0
    %2371 = vmatpush1.msra.mxu0 %v394
    %2372 = vmatprep.subr.mxu0 0.0
    %2373 = vmatpush1.msra.mxu0 %v393
    %2374 = vmatprep.subr.mxu0 0.0
    %2375 = vmatpush2.msra.mxu0 0.0
    %2376 = vmatprep.subr.mxu0 0.0
    %2377 = vmatpush2.msra.mxu0 0.0
    %2378 = vmatprep.subr.mxu0 0.0
    %2379 = vmatpush2.msra.mxu0 0.0
    %2380 = vmatprep.subr.mxu0 0.0
    %2381 = vmatpush2.msra.mxu0 0.0
    %2382 = vmatprep.subr.mxu0 0.0
    %2383 = vmatpush2.msra.mxu0 0.0
    %2384 = vmatprep.subr.mxu0 0.0
    %2385 = vmatpush2.msra.mxu0 0.0
    %2386 = vmatprep.subr.mxu0 0.0
    %2387 = vmatpush2.msra.mxu0 0.0
    %2388 = vmatprep.subr.mxu0 0.0
    %2389 = vmatpush2.msra.mxu0 0.0
    %2390 = vmatprep.subr.mxu0 0.0
    %2391 = vmatpush2.msra.mxu0 0.0
    %2392 = vmatprep.subr.mxu0 0.0
    %2393 = vmatpush2.msra.mxu0 0.0
    %2394 = vmatprep.subr.mxu0 0.0
    %2395 = vmatpush2.msra.mxu0 0.0
    %2396 = vmatprep.subr.mxu0 0.0
    %2397 = vmatpush2.msra.mxu0 0.0
    %2398 = vmatprep.subr.mxu0 0.0
    %2399 = vmatpush2.msra.mxu0 0.0
    %2400 = vmatprep.subr.mxu0 0.0
    %2401 = vmatpush2.msra.mxu0 0.0
    %2402 = vmatprep.subr.mxu0 0.0
    %2403 = vmatpush2.msra.mxu0 0.0
    %2404 = vmatprep.subr.mxu0 0.0
    %2405 = vmatpush2.msra.mxu0 0.0
    %2406 = vmatprep.mubr.f32.mxu0 0.0
    %2407 = vmatmul.mubr.f32.gmra.mxu0 %v2340
    %v2408 = vpop.f32.mrf.mxu0
    %v2409 = vadd.f32 %v402, %v2408
    %v2410 = vpop.f32.mrf.mxu0
    %2411 = vdwg.mxu0
    %2413 = vrot.lane.b32.xlu0 %v2238, 96
    %v2414 = vpop.permute.xlu0 %2413
    %v2415 = vsel %vm283, %v2414, 0
    %2417 = vmatprep.subr.mxu0 0.0
    %2418 = vmatpush1.msra.mxu0 0.0
    %2419 = vmatprep.subr.mxu0 0.0
    %2420 = vmatpush1.msra.mxu0 0.0
    %2421 = vmatprep.subr.mxu0 0.0
    %2422 = vmatpush1.msra.mxu0 0.0
    %2423 = vmatprep.subr.mxu0 0.0
    %2424 = vmatpush1.msra.mxu0 0.0
    %2425 = vmatprep.subr.mxu0 0.0
    %2426 = vmatpush1.msra.mxu0 0.0
    %2427 = vmatprep.subr.mxu0 0.0
    %2428 = vmatpush1.msra.mxu0 0.0
    %2429 = vmatprep.subr.mxu0 0.0
    %2430 = vmatpush1.msra.mxu0 0.0
    %2431 = vmatprep.subr.mxu0 0.0
    %2432 = vmatpush1.msra.mxu0 0.0
    %2433 = vmatprep.subr.mxu0 0.0
    %2434 = vmatpush1.msra.mxu0 0.0
    %2435 = vmatprep.subr.mxu0 0.0
    %2436 = vmatpush1.msra.mxu0 0.0
    %2437 = vmatprep.subr.mxu0 0.0
    %2438 = vmatpush1.msra.mxu0 0.0
    %2439 = vmatprep.subr.mxu0 0.0
    %2440 = vmatpush1.msra.mxu0 0.0
    %2441 = vmatprep.subr.mxu0 0.0
    %2442 = vmatpush1.msra.mxu0 %v482
    %2443 = vmatprep.subr.mxu0 0.0
    %2444 = vmatpush1.msra.mxu0 %v481
    %2445 = vmatprep.subr.mxu0 0.0
    %2446 = vmatpush1.msra.mxu0 %v480
    %2447 = vmatprep.subr.mxu0 0.0
    %2448 = vmatpush1.msra.mxu0 %v479
    %2449 = vmatprep.subr.mxu0 0.0
    %2450 = vmatpush2.msra.mxu0 0.0
    %2451 = vmatprep.subr.mxu0 0.0
    %2452 = vmatpush2.msra.mxu0 0.0
    %2453 = vmatprep.subr.mxu0 0.0
    %2454 = vmatpush2.msra.mxu0 0.0
    %2455 = vmatprep.subr.mxu0 0.0
    %2456 = vmatpush2.msra.mxu0 0.0
    %2457 = vmatprep.subr.mxu0 0.0
    %2458 = vmatpush2.msra.mxu0 0.0
    %2459 = vmatprep.subr.mxu0 0.0
    %2460 = vmatpush2.msra.mxu0 0.0
    %2461 = vmatprep.subr.mxu0 0.0
    %2462 = vmatpush2.msra.mxu0 0.0
    %2463 = vmatprep.subr.mxu0 0.0
    %2464 = vmatpush2.msra.mxu0 0.0
    %2465 = vmatprep.subr.mxu0 0.0
    %2466 = vmatpush2.msra.mxu0 0.0
    %2467 = vmatprep.subr.mxu0 0.0
    %2468 = vmatpush2.msra.mxu0 0.0
    %2469 = vmatprep.subr.mxu0 0.0
    %2470 = vmatpush2.msra.mxu0 0.0
    %2471 = vmatprep.subr.mxu0 0.0
    %2472 = vmatpush2.msra.mxu0 0.0
    %2473 = vmatprep.subr.mxu0 0.0
    %2474 = vmatpush2.msra.mxu0 0.0
    %2475 = vmatprep.subr.mxu0 0.0
    %2476 = vmatpush2.msra.mxu0 0.0
    %2477 = vmatprep.subr.mxu0 0.0
    %2478 = vmatpush2.msra.mxu0 0.0
    %2479 = vmatprep.subr.mxu0 0.0
    %2480 = vmatpush2.msra.mxu0 0.0
    %2481 = vmatprep.mubr.f32.mxu0 0.0
    %2482 = vmatmul.mubr.f32.gmra.mxu0 %v2415
    %v2483 = vpop.f32.mrf.mxu0
    %v2484 = vadd.f32 0.0, %v2483
    %v2485 = vpop.f32.mrf.mxu0
    %2486 = vdwg.mxu0
    %v2487 = vadd.f32 %v2409, %v2484
    %v2488 = vxor.u32 %v2487, 2147483648
    %v2489 = vmul.f32 %v2488, 1.442695
    %v2490 = vpow.pop %v2489
    %v2491 = vadd.f32 %v2490, 1.0
    %v2492 = vrcp.pop %v2491
    %v2493 = vmul.f32 1.0, %v2492
    %v2494 = vadd.f32 %v2484, %v567
    %2496 = vrot.lane.b32.xlu0 %v2494, 64
    %v2497 = vpop.permute.xlu0 %2496
    %v2499 = vmul.f32 %v2493, %v2497
    %2501 = vrot.lane.b32.xlu0 %v2499, 64
    %v2502 = vpop.permute.xlu0 %2501
    %v2504 = vadd.f32 %v2409, %v2502
    %v2505 = vtanh.pop %v2504
    %v2506 = vsub.f32 1.0, %v2493
    %2508 = vrot.lane.b32.xlu0 %v2505, 96
    %v2509 = vpop.permute.xlu0 %2508
    %v2511 = vmul.f32 %v2506, %v2509
    %v2512 = vmul.f32 %v2493, %v2238
    %v2513 = vadd.f32 %v2511, %v2512
    %v2514 = vld [vmem:[#allocation4] sm:$0x3]
    %v2515 = vld [vmem:[%s10] sm:$0xff]
    %v2516 = vld [vmem:[%s10 + $0x8] sm:$0x7f]
    %v2517 = vld [vmem:[#allocation14] sm:$0x1]
    %v2519 = vlaneseq
    %v2520 = vshrl.u32 %v2519, 7
    %v2521 = vsub.s32 0, %v2520
    %v2522 = vrot.slane %v2517, %v2521
    %vm2524 = vcmask 121856
    %v2526 = vsel %vm2524, %v2514, 0
    %vm2528 = vcmask 1046528
    %v2530 = vsel %vm2528, %v2516, 0
    %2532 = vmatprep.subr.mxu0 0.0
    %2533 = vmatpush1.msra.mxu0 0.0
    %2534 = vmatprep.subr.mxu0 0.0
    %2535 = vmatpush1.msra.mxu0 0.0
    %2536 = vmatprep.subr.mxu0 0.0
    %2537 = vmatpush1.msra.mxu0 0.0
    %2538 = vmatprep.subr.mxu0 0.0
    %2539 = vmatpush1.msra.mxu0 0.0
    %2540 = vmatprep.subr.mxu0 0.0
    %2541 = vmatpush1.msra.mxu0 0.0
    %2542 = vmatprep.subr.mxu0 0.0
    %2543 = vmatpush1.msra.mxu0 0.0
    %2544 = vmatprep.subr.mxu0 0.0
    %2545 = vmatpush1.msra.mxu0 0.0
    %2546 = vmatprep.subr.mxu0 0.0
    %2547 = vmatpush1.msra.mxu0 0.0
    %2548 = vmatprep.subr.mxu0 0.0
    %2549 = vmatpush1.msra.mxu0 0.0
    %2550 = vmatprep.subr.mxu0 0.0
    %2551 = vmatpush1.msra.mxu0 0.0
    %2552 = vmatprep.subr.mxu0 0.0
    %2553 = vmatpush1.msra.mxu0 0.0
    %2554 = vmatprep.subr.mxu0 0.0
    %2555 = vmatpush1.msra.mxu0 0.0
    %2556 = vmatprep.subr.mxu0 0.0
    %2557 = vmatpush1.msra.mxu0 0.0
    %2558 = vmatprep.subr.mxu0 0.0
    %2559 = vmatpush1.msra.mxu0 0.0
    %2560 = vmatprep.subr.mxu0 0.0
    %2561 = vmatpush1.msra.mxu0 %v2530
    %2562 = vmatprep.subr.mxu0 0.0
    %2563 = vmatpush1.msra.mxu0 %v2515
    %2564 = vmatprep.subr.mxu0 0.0
    %2565 = vmatpush2.msra.mxu0 0.0
    %2566 = vmatprep.subr.mxu0 0.0
    %2567 = vmatpush2.msra.mxu0 0.0
    %2568 = vmatprep.subr.mxu0 0.0
    %2569 = vmatpush2.msra.mxu0 0.0
    %2570 = vmatprep.subr.mxu0 0.0
    %2571 = vmatpush2.msra.mxu0 0.0
    %2572 = vmatprep.subr.mxu0 0.0
    %2573 = vmatpush2.msra.mxu0 0.0
    %2574 = vmatprep.subr.mxu0 0.0
    %2575 = vmatpush2.msra.mxu0 0.0
    %2576 = vmatprep.subr.mxu0 0.0
    %2577 = vmatpush2.msra.mxu0 0.0
    %2578 = vmatprep.subr.mxu0 0.0
    %2579 = vmatpush2.msra.mxu0 0.0
    %2580 = vmatprep.subr.mxu0 0.0
    %2581 = vmatpush2.msra.mxu0 0.0
    %2582 = vmatprep.subr.mxu0 0.0
    %2583 = vmatpush2.msra.mxu0 0.0
    %2584 = vmatprep.subr.mxu0 0.0
    %2585 = vmatpush2.msra.mxu0 0.0
    %2586 = vmatprep.subr.mxu0 0.0
    %2587 = vmatpush2.msra.mxu0 0.0
    %2588 = vmatprep.subr.mxu0 0.0
    %2589 = vmatpush2.msra.mxu0 0.0
    %2590 = vmatprep.subr.mxu0 0.0
    %2591 = vmatpush2.msra.mxu0 0.0
    %2592 = vmatprep.subr.mxu0 0.0
    %2593 = vmatpush2.msra.mxu0 0.0
    %2594 = vmatprep.subr.mxu0 0.0
    %2595 = vmatpush2.msra.mxu0 0.0
    %2596 = vmatprep.mubr.f32.mxu0 0.0
    %2597 = vmatmul.mubr.f32.gmra.mxu0 %v2526
    %v2598 = vpop.f32.mrf.mxu0
    %v2599 = vadd.f32 %v2522, %v2598
    %v2600 = vpop.f32.mrf.mxu0
    %2601 = vdwg.mxu0
    %vm2602 = vcmp.gt.f32.partialorder %v2599, 0.0
    %v2603 = vmul.f32 %v2599, 1.442695
    %v2604 = vpow.pop %v2603
    %v2605 = vsub.f32 %v2604, 1.0
    %v2606 = vsel %vm2602, %v2599, %v2605
    %v2607 = vld [vmem:[%s12] sm:$0xff]
    %v2608 = vld [vmem:[%s12 + $0x8] sm:$0xff]
    %v2609 = vld [vmem:[%s12 + $0x10] sm:$0xff]
    %v2610 = vld [vmem:[%s12 + $0x18] sm:$0xff]
    %v2611 = vld [vmem:[%s13] sm:$0xff]
    %v2612 = vld [vmem:[%s13 + $0x8] sm:$0xff]
    %v2613 = vld [vmem:[%s13 + $0x10] sm:$0xff]
    %v2614 = vld [vmem:[%s13 + $0x18] sm:$0xff]
    %2616 = vrot.lane.b32.xlu0 %v2513, 96
    %v2617 = vpop.permute.xlu0 %2616
    %v2618 = vsel %vm283, %v2617, 0
    %2620 = vmatprep.subr.mxu0 0.0
    %2621 = vmatpush1.msra.mxu0 0.0
    %2622 = vmatprep.subr.mxu0 0.0
    %2623 = vmatpush1.msra.mxu0 0.0
    %2624 = vmatprep.subr.mxu0 0.0
    %2625 = vmatpush1.msra.mxu0 0.0
    %2626 = vmatprep.subr.mxu0 0.0
    %2627 = vmatpush1.msra.mxu0 0.0
    %2628 = vmatprep.subr.mxu0 0.0
    %2629 = vmatpush1.msra.mxu0 0.0
    %2630 = vmatprep.subr.mxu0 0.0
    %2631 = vmatpush1.msra.mxu0 0.0
    %2632 = vmatprep.subr.mxu0 0.0
    %2633 = vmatpush1.msra.mxu0 0.0
    %2634 = vmatprep.subr.mxu0 0.0
    %2635 = vmatpush1.msra.mxu0 0.0
    %2636 = vmatprep.subr.mxu0 0.0
    %2637 = vmatpush1.msra.mxu0 0.0
    %2638 = vmatprep.subr.mxu0 0.0
    %2639 = vmatpush1.msra.mxu0 0.0
    %2640 = vmatprep.subr.mxu0 0.0
    %2641 = vmatpush1.msra.mxu0 0.0
    %2642 = vmatprep.subr.mxu0 0.0
    %2643 = vmatpush1.msra.mxu0 0.0
    %2644 = vmatprep.subr.mxu0 0.0
    %2645 = vmatpush1.msra.mxu0 %v2614
    %2646 = vmatprep.subr.mxu0 0.0
    %2647 = vmatpush1.msra.mxu0 %v2613
    %2648 = vmatprep.subr.mxu0 0.0
    %2649 = vmatpush1.msra.mxu0 %v2612
    %2650 = vmatprep.subr.mxu0 0.0
    %2651 = vmatpush1.msra.mxu0 %v2611
    %2652 = vmatprep.subr.mxu0 0.0
    %2653 = vmatpush2.msra.mxu0 0.0
    %2654 = vmatprep.subr.mxu0 0.0
    %2655 = vmatpush2.msra.mxu0 0.0
    %2656 = vmatprep.subr.mxu0 0.0
    %2657 = vmatpush2.msra.mxu0 0.0
    %2658 = vmatprep.subr.mxu0 0.0
    %2659 = vmatpush2.msra.mxu0 0.0
    %2660 = vmatprep.subr.mxu0 0.0
    %2661 = vmatpush2.msra.mxu0 0.0
    %2662 = vmatprep.subr.mxu0 0.0
    %2663 = vmatpush2.msra.mxu0 0.0
    %2664 = vmatprep.subr.mxu0 0.0
    %2665 = vmatpush2.msra.mxu0 0.0
    %2666 = vmatprep.subr.mxu0 0.0
    %2667 = vmatpush2.msra.mxu0 0.0
    %2668 = vmatprep.subr.mxu0 0.0
    %2669 = vmatpush2.msra.mxu0 0.0
    %2670 = vmatprep.subr.mxu0 0.0
    %2671 = vmatpush2.msra.mxu0 0.0
    %2672 = vmatprep.subr.mxu0 0.0
    %2673 = vmatpush2.msra.mxu0 0.0
    %2674 = vmatprep.subr.mxu0 0.0
    %2675 = vmatpush2.msra.mxu0 0.0
    %2676 = vmatprep.subr.mxu0 0.0
    %2677 = vmatpush2.msra.mxu0 0.0
    %2678 = vmatprep.subr.mxu0 0.0
    %2679 = vmatpush2.msra.mxu0 0.0
    %2680 = vmatprep.subr.mxu0 0.0
    %2681 = vmatpush2.msra.mxu0 0.0
    %2682 = vmatprep.subr.mxu0 0.0
    %2683 = vmatpush2.msra.mxu0 0.0
    %2684 = vmatprep.mubr.f32.mxu0 0.0
    %2685 = vmatmul.mubr.f32.gmra.mxu0 %v2618
    %v2686 = vpop.f32.mrf.mxu0
    %v2687 = vadd.f32 0.0, %v2686
    %v2688 = vpop.f32.mrf.mxu0
    %2689 = vdwg.mxu0
    %2690 = vmatprep.subr.mxu0 0.0
    %2691 = vmatpush1.msra.mxu0 0.0
    %2692 = vmatprep.subr.mxu0 0.0
    %2693 = vmatpush1.msra.mxu0 0.0
    %2694 = vmatprep.subr.mxu0 0.0
    %2695 = vmatpush1.msra.mxu0 0.0
    %2696 = vmatprep.subr.mxu0 0.0
    %2697 = vmatpush1.msra.mxu0 0.0
    %2698 = vmatprep.subr.mxu0 0.0
    %2699 = vmatpush1.msra.mxu0 0.0
    %2700 = vmatprep.subr.mxu0 0.0
    %2701 = vmatpush1.msra.mxu0 0.0
    %2702 = vmatprep.subr.mxu0 0.0
    %2703 = vmatpush1.msra.mxu0 0.0
    %2704 = vmatprep.subr.mxu0 0.0
    %2705 = vmatpush1.msra.mxu0 0.0
    %2706 = vmatprep.subr.mxu0 0.0
    %2707 = vmatpush1.msra.mxu0 0.0
    %2708 = vmatprep.subr.mxu0 0.0
    %2709 = vmatpush1.msra.mxu0 0.0
    %2710 = vmatprep.subr.mxu0 0.0
    %2711 = vmatpush1.msra.mxu0 0.0
    %2712 = vmatprep.subr.mxu0 0.0
    %2713 = vmatpush1.msra.mxu0 0.0
    %2714 = vmatprep.subr.mxu0 0.0
    %2715 = vmatpush1.msra.mxu0 %v2610
    %2716 = vmatprep.subr.mxu0 0.0
    %2717 = vmatpush1.msra.mxu0 %v2609
    %2718 = vmatprep.subr.mxu0 0.0
    %2719 = vmatpush1.msra.mxu0 %v2608
    %2720 = vmatprep.subr.mxu0 0.0
    %2721 = vmatpush1.msra.mxu0 %v2607
    %2722 = vmatprep.subr.mxu0 0.0
    %2723 = vmatpush2.msra.mxu0 0.0
    %2724 = vmatprep.subr.mxu0 0.0
    %2725 = vmatpush2.msra.mxu0 0.0
    %2726 = vmatprep.subr.mxu0 0.0
    %2727 = vmatpush2.msra.mxu0 0.0
    %2728 = vmatprep.subr.mxu0 0.0
    %2729 = vmatpush2.msra.mxu0 0.0
    %2730 = vmatprep.subr.mxu0 0.0
    %2731 = vmatpush2.msra.mxu0 0.0
    %2732 = vmatprep.subr.mxu0 0.0
    %2733 = vmatpush2.msra.mxu0 0.0
    %2734 = vmatprep.subr.mxu0 0.0
    %2735 = vmatpush2.msra.mxu0 0.0
    %2736 = vmatprep.subr.mxu0 0.0
    %2737 = vmatpush2.msra.mxu0 0.0
    %2738 = vmatprep.subr.mxu0 0.0
    %2739 = vmatpush2.msra.mxu0 0.0
    %2740 = vmatprep.subr.mxu0 0.0
    %2741 = vmatpush2.msra.mxu0 0.0
    %2742 = vmatprep.subr.mxu0 0.0
    %2743 = vmatpush2.msra.mxu0 0.0
    %2744 = vmatprep.subr.mxu0 0.0
    %2745 = vmatpush2.msra.mxu0 0.0
    %2746 = vmatprep.subr.mxu0 0.0
    %2747 = vmatpush2.msra.mxu0 0.0
    %2748 = vmatprep.subr.mxu0 0.0
    %2749 = vmatpush2.msra.mxu0 0.0
    %2750 = vmatprep.subr.mxu0 0.0
    %2751 = vmatpush2.msra.mxu0 0.0
    %2752 = vmatprep.subr.mxu0 0.0
    %2753 = vmatpush2.msra.mxu0 0.0
    %2754 = vmatprep.mubr.f32.mxu0 0.0
    %2755 = vmatmul.mubr.f32.gmra.mxu0 %v2340
    %v2756 = vpop.f32.mrf.mxu0
    %v2757 = vadd.f32 %v2687, %v2756
    %v2758 = vpop.f32.mrf.mxu0
    %2759 = vdwg.mxu0
    %v2760 = vld [vmem:[#allocation15] sm:$0x1]
    %v2762 = vlaneseq
    %v2763 = vshrl.u32 %v2762, 7
    %v2764 = vsub.s32 0, %v2763
    %v2765 = vrot.slane %v2760, %v2764
    %v2767 = vadd.f32 %v2757, %v2765
    %vm2768 = vcmp.gt.f32.partialorder %v2767, 0.0
    %v2769 = vmul.f32 %v2767, 1.442695
    %v2770 = vpow.pop %v2769
    %v2771 = vsub.f32 %v2770, 1.0
    %v2772 = vsel %vm2768, %v2767, %v2771
    %v2773 = vld [vmem:[%s15] sm:$0xff]
    %v2774 = vld [vmem:[%s15 + $0x8] sm:$0xff]
    %v2775 = vld [vmem:[%s15 + $0x10] sm:$0xff]
    %v2776 = vld [vmem:[%s15 + $0x18] sm:$0xff]
    %v2777 = vld [vmem:[%s15 + $0x20] sm:$0xff]
    %v2778 = vld [vmem:[%s15 + $0x28] sm:$0xff]
    %v2779 = vld [vmem:[%s15 + $0x30] sm:$0xff]
    %v2780 = vld [vmem:[%s15 + $0x38] sm:$0xff]
    %v2781 = vld [vmem:[#allocation17] sm:$0x1f]
    %vm2782 = vcmask 39936
    %v2784 = vsel %vm2782, %v2606, 0
    %vm2786 = vcmask 1044480
    %v2788 = vsel %vm2786, %v2781, 0
    %2790 = vmatprep.subr.mxu0 0.0
    %2791 = vmatpush1.msra.mxu0 0.0
    %2792 = vmatprep.subr.mxu0 0.0
    %2793 = vmatpush1.msra.mxu0 0.0
    %2794 = vmatprep.subr.mxu0 0.0
    %2795 = vmatpush1.msra.mxu0 0.0
    %2796 = vmatprep.subr.mxu0 0.0
    %2797 = vmatpush1.msra.mxu0 0.0
    %2798 = vmatprep.subr.mxu0 0.0
    %2799 = vmatpush1.msra.mxu0 0.0
    %2800 = vmatprep.subr.mxu0 0.0
    %2801 = vmatpush1.msra.mxu0 0.0
    %2802 = vmatprep.subr.mxu0 0.0
    %2803 = vmatpush1.msra.mxu0 0.0
    %2804 = vmatprep.subr.mxu0 0.0
    %2805 = vmatpush1.msra.mxu0 0.0
    %2806 = vmatprep.subr.mxu0 0.0
    %2807 = vmatpush1.msra.mxu0 0.0
    %2808 = vmatprep.subr.mxu0 0.0
    %2809 = vmatpush1.msra.mxu0 0.0
    %2810 = vmatprep.subr.mxu0 0.0
    %2811 = vmatpush1.msra.mxu0 0.0
    %2812 = vmatprep.subr.mxu0 0.0
    %2813 = vmatpush1.msra.mxu0 0.0
    %2814 = vmatprep.subr.mxu0 0.0
    %2815 = vmatpush1.msra.mxu0 0.0
    %2816 = vmatprep.subr.mxu0 0.0
    %2817 = vmatpush1.msra.mxu0 0.0
    %2818 = vmatprep.subr.mxu0 0.0
    %2819 = vmatpush1.msra.mxu0 0.0
    %2820 = vmatprep.subr.mxu0 0.0
    %2821 = vmatpush1.msra.mxu0 %v2788
    %2822 = vmatprep.subr.mxu0 0.0
    %2823 = vmatpush2.msra.mxu0 0.0
    %2824 = vmatprep.subr.mxu0 0.0
    %2825 = vmatpush2.msra.mxu0 0.0
    %2826 = vmatprep.subr.mxu0 0.0
    %2827 = vmatpush2.msra.mxu0 0.0
    %2828 = vmatprep.subr.mxu0 0.0
    %2829 = vmatpush2.msra.mxu0 0.0
    %2830 = vmatprep.subr.mxu0 0.0
    %2831 = vmatpush2.msra.mxu0 0.0
    %2832 = vmatprep.subr.mxu0 0.0
    %2833 = vmatpush2.msra.mxu0 0.0
    %2834 = vmatprep.subr.mxu0 0.0
    %2835 = vmatpush2.msra.mxu0 0.0
    %2836 = vmatprep.subr.mxu0 0.0
    %2837 = vmatpush2.msra.mxu0 0.0
    %2838 = vmatprep.subr.mxu0 0.0
    %2839 = vmatpush2.msra.mxu0 0.0
    %2840 = vmatprep.subr.mxu0 0.0
    %2841 = vmatpush2.msra.mxu0 0.0
    %2842 = vmatprep.subr.mxu0 0.0
    %2843 = vmatpush2.msra.mxu0 0.0
    %2844 = vmatprep.subr.mxu0 0.0
    %2845 = vmatpush2.msra.mxu0 0.0
    %2846 = vmatprep.subr.mxu0 0.0
    %2847 = vmatpush2.msra.mxu0 0.0
    %2848 = vmatprep.subr.mxu0 0.0
    %2849 = vmatpush2.msra.mxu0 0.0
    %2850 = vmatprep.subr.mxu0 0.0
    %2851 = vmatpush2.msra.mxu0 0.0
    %2852 = vmatprep.subr.mxu0 0.0
    %2853 = vmatpush2.msra.mxu0 0.0
    %2854 = vmatprep.mubr.f32.mxu0 0.0
    %2855 = vmatmul.mubr.f32.gmra.mxu0 %v2784
    %v2856 = vpop.f32.mrf.mxu0
    %v2857 = vadd.f32 0.0, %v2856
    %v2858 = vpop.f32.mrf.mxu0
    %2859 = vdwg.mxu0
    %vm2860 = vcmask 523264
    %v2862 = vsel %vm2860, %v2772, 0
    %2864 = vmatprep.subr.mxu0 0.0
    %2865 = vmatpush1.msra.mxu0 0.0
    %2866 = vmatprep.subr.mxu0 0.0
    %2867 = vmatpush1.msra.mxu0 0.0
    %2868 = vmatprep.subr.mxu0 0.0
    %2869 = vmatpush1.msra.mxu0 0.0
    %2870 = vmatprep.subr.mxu0 0.0
    %2871 = vmatpush1.msra.mxu0 0.0
    %2872 = vmatprep.subr.mxu0 0.0
    %2873 = vmatpush1.msra.mxu0 0.0
    %2874 = vmatprep.subr.mxu0 0.0
    %2875 = vmatpush1.msra.mxu0 0.0
    %2876 = vmatprep.subr.mxu0 0.0
    %2877 = vmatpush1.msra.mxu0 0.0
    %2878 = vmatprep.subr.mxu0 0.0
    %2879 = vmatpush1.msra.mxu0 0.0
    %2880 = vmatprep.subr.mxu0 0.0
    %2881 = vmatpush1.msra.mxu0 %v2780
    %2882 = vmatprep.subr.mxu0 0.0
    %2883 = vmatpush1.msra.mxu0 %v2779
    %2884 = vmatprep.subr.mxu0 0.0
    %2885 = vmatpush1.msra.mxu0 %v2778
    %2886 = vmatprep.subr.mxu0 0.0
    %2887 = vmatpush1.msra.mxu0 %v2777
    %2888 = vmatprep.subr.mxu0 0.0
    %2889 = vmatpush1.msra.mxu0 %v2776
    %2890 = vmatprep.subr.mxu0 0.0
    %2891 = vmatpush1.msra.mxu0 %v2775
    %2892 = vmatprep.subr.mxu0 0.0
    %2893 = vmatpush1.msra.mxu0 %v2774
    %2894 = vmatprep.subr.mxu0 0.0
    %2895 = vmatpush1.msra.mxu0 %v2773
    %2896 = vmatprep.subr.mxu0 0.0
    %2897 = vmatpush2.msra.mxu0 0.0
    %2898 = vmatprep.subr.mxu0 0.0
    %2899 = vmatpush2.msra.mxu0 0.0
    %2900 = vmatprep.subr.mxu0 0.0
    %2901 = vmatpush2.msra.mxu0 0.0
    %2902 = vmatprep.subr.mxu0 0.0
    %2903 = vmatpush2.msra.mxu0 0.0
    %2904 = vmatprep.subr.mxu0 0.0
    %2905 = vmatpush2.msra.mxu0 0.0
    %2906 = vmatprep.subr.mxu0 0.0
    %2907 = vmatpush2.msra.mxu0 0.0
    %2908 = vmatprep.subr.mxu0 0.0
    %2909 = vmatpush2.msra.mxu0 0.0
    %2910 = vmatprep.subr.mxu0 0.0
    %2911 = vmatpush2.msra.mxu0 0.0
    %2912 = vmatprep.subr.mxu0 0.0
    %2913 = vmatpush2.msra.mxu0 0.0
    %2914 = vmatprep.subr.mxu0 0.0
    %2915 = vmatpush2.msra.mxu0 0.0
    %2916 = vmatprep.subr.mxu0 0.0
    %2917 = vmatpush2.msra.mxu0 0.0
    %2918 = vmatprep.subr.mxu0 0.0
    %2919 = vmatpush2.msra.mxu0 0.0
    %2920 = vmatprep.subr.mxu0 0.0
    %2921 = vmatpush2.msra.mxu0 0.0
    %2922 = vmatprep.subr.mxu0 0.0
    %2923 = vmatpush2.msra.mxu0 0.0
    %2924 = vmatprep.subr.mxu0 0.0
    %2925 = vmatpush2.msra.mxu0 0.0
    %2926 = vmatprep.subr.mxu0 0.0
    %2927 = vmatpush2.msra.mxu0 0.0
    %2928 = vmatprep.mubr.f32.mxu0 0.0
    %2929 = vmatmul.mubr.f32.gmra.mxu0 %v2862
    %v2930 = vpop.f32.mrf.mxu0
    %v2931 = vadd.f32 %v2857, %v2930
    %v2932 = vpop.f32.mrf.mxu0
    %2933 = vdwg.mxu0
    %v2934 = vld [vmem:[#allocation18] sm:$0x1]
    %v2936 = vlaneseq
    %v2937 = vshrl.u32 %v2936, 7
    %v2938 = vsub.s32 0, %v2937
    %v2939 = vrot.slane %v2934, %v2938
    %v2941 = vadd.f32 %v2931, %v2939
    %vm2942 = vcmp.gt.f32.partialorder %v2941, 0.0
    %v2943 = vmul.f32 %v2941, 1.442695
    %v2944 = vpow.pop %v2943
    %v2945 = vsub.f32 %v2944, 1.0
    %v2946 = vsel %vm2942, %v2941, %v2945
    %v2947 = vld [vmem:[%s18] sm:$0xff]
    %v2948 = vld [vmem:[%s18 + $0x8] sm:$0x3]
    %v2949 = vld [vmem:[#allocation3] sm:$0x1]
    %v2951 = vlaneseq
    %v2952 = vshrl.u32 %v2951, 7
    %v2953 = vsub.s32 0, %v2952
    %v2954 = vrot.slane %v2949, %v2953
    %vm2956 = vcmask 80896
    %v2958 = vsel %vm2956, %v2946, 0
    %vm2960 = vcmask 1041408
    %v2962 = vsel %vm2960, %v2948, 0
    %2964 = vmatprep.subr.mxu0 0.0
    %2965 = vmatpush1.msra.mxu0 0.0
    %2966 = vmatprep.subr.mxu0 0.0
    %2967 = vmatpush1.msra.mxu0 0.0
    %2968 = vmatprep.subr.mxu0 0.0
    %2969 = vmatpush1.msra.mxu0 0.0
    %2970 = vmatprep.subr.mxu0 0.0
    %2971 = vmatpush1.msra.mxu0 0.0
    %2972 = vmatprep.subr.mxu0 0.0
    %2973 = vmatpush1.msra.mxu0 0.0
    %2974 = vmatprep.subr.mxu0 0.0
    %2975 = vmatpush1.msra.mxu0 0.0
    %2976 = vmatprep.subr.mxu0 0.0
    %2977 = vmatpush1.msra.mxu0 0.0
    %2978 = vmatprep.subr.mxu0 0.0
    %2979 = vmatpush1.msra.mxu0 0.0
    %2980 = vmatprep.subr.mxu0 0.0
    %2981 = vmatpush1.msra.mxu0 0.0
    %2982 = vmatprep.subr.mxu0 0.0
    %2983 = vmatpush1.msra.mxu0 0.0
    %2984 = vmatprep.subr.mxu0 0.0
    %2985 = vmatpush1.msra.mxu0 0.0
    %2986 = vmatprep.subr.mxu0 0.0
    %2987 = vmatpush1.msra.mxu0 0.0
    %2988 = vmatprep.subr.mxu0 0.0
    %2989 = vmatpush1.msra.mxu0 0.0
    %2990 = vmatprep.subr.mxu0 0.0
    %2991 = vmatpush1.msra.mxu0 0.0
    %2992 = vmatprep.subr.mxu0 0.0
    %2993 = vmatpush1.msra.mxu0 %v2962
    %2994 = vmatprep.subr.mxu0 0.0
    %2995 = vmatpush1.msra.mxu0 %v2947
    %2996 = vmatprep.subr.mxu0 0.0
    %2997 = vmatpush2.msra.mxu0 0.0
    %2998 = vmatprep.subr.mxu0 0.0
    %2999 = vmatpush2.msra.mxu0 0.0
    %3000 = vmatprep.subr.mxu0 0.0
    %3001 = vmatpush2.msra.mxu0 0.0
    %3002 = vmatprep.subr.mxu0 0.0
    %3003 = vmatpush2.msra.mxu0 0.0
    %3004 = vmatprep.subr.mxu0 0.0
    %3005 = vmatpush2.msra.mxu0 0.0
    %3006 = vmatprep.subr.mxu0 0.0
    %3007 = vmatpush2.msra.mxu0 0.0
    %3008 = vmatprep.subr.mxu0 0.0
    %3009 = vmatpush2.msra.mxu0 0.0
    %3010 = vmatprep.subr.mxu0 0.0
    %3011 = vmatpush2.msra.mxu0 0.0
    %3012 = vmatprep.subr.mxu0 0.0
    %3013 = vmatpush2.msra.mxu0 0.0
    %3014 = vmatprep.subr.mxu0 0.0
    %3015 = vmatpush2.msra.mxu0 0.0
    %3016 = vmatprep.subr.mxu0 0.0
    %3017 = vmatpush2.msra.mxu0 0.0
    %3018 = vmatprep.subr.mxu0 0.0
    %3019 = vmatpush2.msra.mxu0 0.0
    %3020 = vmatprep.subr.mxu0 0.0
    %3021 = vmatpush2.msra.mxu0 0.0
    %3022 = vmatprep.subr.mxu0 0.0
    %3023 = vmatpush2.msra.mxu0 0.0
    %3024 = vmatprep.subr.mxu0 0.0
    %3025 = vmatpush2.msra.mxu0 0.0
    %3026 = vmatprep.subr.mxu0 0.0
    %3027 = vmatpush2.msra.mxu0 0.0
    %3028 = vmatprep.mubr.f32.mxu0 0.0
    %3029 = vmatmul.mubr.f32.gmra.mxu0 %v2958
    %v3030 = vpop.f32.mrf.mxu0
    %v3031 = vadd.f32 %v2954, %v3030
    %v3032 = vpop.f32.mrf.mxu0
    %3033 = vdwg.mxu0
    %vm3034 = vcmask 1024
    %3035 = vst.msk [vmem:[%s20] sm:$0x3] %vm3034, %v3031
    // Predicated region
    $region122: #{gru_model_forward.1} parent=1 // pred_check
      _
    $region123: #{gru_model_forward.1} parent=1 // pred_check_branch
      %3037 = sbr.rel (0) target = $region125
    $region124: #{gru_model_forward.1} parent=1 // pred_region
      _
    $region125: #{gru_model_forward.1} parent=1 // pred_fallthru
      _
    // Predicated region
    $region126: #{gru_model_forward.1} parent=1 // pred_check
      _
    $region127: #{gru_model_forward.1} parent=1 // pred_check_branch
      %3039 = sbr.rel (0) target = $region129
    $region128: #{gru_model_forward.1} parent=1 // pred_region
      _
    $region129: #{gru_model_forward.1} parent=1 // pred_fallthru
      _
    %3040 = vsyncpa [#allocation5], 1
    %3041 = vsyncpa [#allocation7], 1
    %3042 = vsyncpa [#allocation10], 1
    %3043 = vsyncpa [#allocation13], 1
    %3044 = vsyncpa [#allocation16], 1
    %3045 = vsyncpa [#allocation19], 1

</llo_original>
